<compile_context>
chip_gen: v7x
topology: tpu7x:2x2x1
jax: 0.10.0
libtpu: 0.0.40
codegen_flags: <defaults>
</compile_context>

<pallas_src>
import functools

import jax
import jax.numpy as jnp
from jax.experimental import pallas as pl
from jax.experimental.pallas import tpu as pltpu

LANES = 128  # pad all channel dims to the vreg lane width -> lane-dense matmuls & stores


def _fused_convnet_kernel(xb_ref, w1_ref, b1_ref, w2_ref, b2_ref, w3_ref, b3_ref,
                          o_ref, act1_ref, act2_ref, *, geom):
    C, OH1, OW1, OH2, OW2, OH3, OW3 = geom

    # ---- Layer 1: conv 8x8 / stride 4, via stride-4 blocked input ------------------
    # xb_ref[0, i, j, (h4*4 + w4)*C + c] == x_nhwc[b, 4*i + h4, 4*j + w4, c]
    # kernel offset (kh, kw) = (4*dh + h4, 4*dw + w4): accumulate 4 block matmuls.
    for t in range(4):
        dh, dw = t // 2, t % 2
        patch = xb_ref[0, dh:dh + OH1, dw:dw + OW1, :]            # [OH1, OW1, 16*C]
        lhs = patch.reshape(OH1 * OW1, 16 * C)                    # rows = (oh1, ow1)
        contrib = jnp.dot(lhs, w1_ref[t], preferred_element_type=jnp.float32)
        if t == 0:
            act1_ref[...] = contrib
        else:
            act1_ref[...] += contrib
    act1_ref[...] = jnp.maximum(act1_ref[...] + b1_ref[...], 0.0)  # [OH1*OW1, 128]

    # ---- Layer 2: conv 4x4 / stride 2 (im2col built in-kernel from VMEM) -----------
    rows2 = []
    for oh in range(OH2):
        for ow in range(OW2):
            pieces = []
            for kh in range(4):
                for kw in range(4):
                    r = (2 * oh + kh) * OW1 + (2 * ow + kw)
                    pieces.append(act1_ref[r:r + 1, :])            # [1, 128]
            rows2.append(jnp.concatenate(pieces, axis=1))          # [1, 16*128]
    lhs2 = jnp.concatenate(rows2, axis=0)                          # [OH2*OW2, 2048]
    acc2 = jnp.dot(lhs2, w2_ref[...], preferred_element_type=jnp.float32)
    act2_ref[...] = jnp.maximum(acc2 + b2_ref[...], 0.0)           # [OH2*OW2, 128]

    # ---- Layer 3: conv 3x3 / stride 1 (im2col built in-kernel from VMEM) -----------
    rows3 = []
    for oh in range(OH3):
        for ow in range(OW3):
            pieces = []
            for kh in range(3):
                for kw in range(3):
                    r = (oh + kh) * OW2 + (ow + kw)
                    pieces.append(act2_ref[r:r + 1, :])            # [1, 128]
            lhs3 = jnp.concatenate(pieces, axis=1)                 # [1, 9*128]
            rows3.append(jnp.dot(lhs3, w3_ref[...],
                                 preferred_element_type=jnp.float32))
    out = jnp.concatenate(rows3, axis=0)                           # [OH3*OW3, 128]
    o_ref[...] = jnp.maximum(out + b3_ref[...], 0.0)[None]         # [1, OH3*OW3, 128]


def convnet_forward(x, params):
    """Reproduces ConvNet.forward for NCHW input x: 3x (conv + ReLU) then Flatten."""
    (w1, b1), (w2, b2), (w3, b3) = params
    B, C, H, W = x.shape
    Cout1, Cout2, Cout3 = w1.shape[0], w2.shape[0], w3.shape[0]    # 32, 64, 64
    assert w1.shape[1:] == (C, 8, 8) and w2.shape[1:] == (Cout1, 4, 4)
    assert w3.shape[1:] == (Cout2, 3, 3)

    OH1, OW1 = (H - 8) // 4 + 1, (W - 8) // 4 + 1
    OH2, OW2 = (OH1 - 4) // 2 + 1, (OW1 - 4) // 2 + 1
    OH3, OW3 = (OH2 - 3) // 1 + 1, (OW2 - 3) // 1 + 1
    P3 = OH3 * OW3

    # -- input: single trace-time re-layout into stride-4 blocks (same #elements as x) --
    Hp, Wp = ((H + 3) // 4) * 4, ((W + 3) // 4) * 4
    x_nhwc = jnp.transpose(x, (0, 2, 3, 1))
    if (Hp, Wp) != (H, W):  # padded region is never read by the valid conv windows
        x_nhwc = jnp.pad(x_nhwc, ((0, 0), (0, Hp - H), (0, Wp - W), (0, 0)))
    HB, WB = Hp // 4, Wp // 4
    xb = (x_nhwc.reshape(B, HB, 4, WB, 4, C)
                .transpose(0, 1, 3, 2, 4, 5)
                .reshape(B, HB, WB, 16 * C))

    # -- weights/biases: rearranged + zero-padded to lane-dense [K, 128] layouts, once --
    w1_blk = (jnp.transpose(w1, (2, 3, 1, 0))                      # (kh, kw, c, n)
                 .reshape(2, 4, 2, 4, C, Cout1)                    # (dh, h4, dw, w4, c, n)
                 .transpose(0, 2, 1, 3, 4, 5)                      # (dh, dw, h4, w4, c, n)
                 .reshape(4, 16 * C, Cout1))
    w1_blk = jnp.pad(w1_blk, ((0, 0), (0, 0), (0, LANES - Cout1)))
    b1_p = jnp.pad(b1, (0, LANES - Cout1)).reshape(1, LANES)

    w2_mat = jnp.transpose(w2, (2, 3, 1, 0))                       # (kh, kw, c, n)
    w2_mat = jnp.pad(w2_mat, ((0, 0), (0, 0), (0, LANES - Cout1), (0, LANES - Cout2)))
    w2_mat = w2_mat.reshape(16 * LANES, LANES)
    b2_p = jnp.pad(b2, (0, LANES - Cout2)).reshape(1, LANES)

    w3_mat = jnp.transpose(w3, (2, 3, 1, 0))                       # (kh, kw, c, n)
    w3_mat = jnp.pad(w3_mat, ((0, 0), (0, 0), (0, LANES - Cout2), (0, LANES - Cout3)))
    w3_mat = w3_mat.reshape(9 * LANES, LANES)
    b3_p = jnp.pad(b3, (0, LANES - Cout3)).reshape(1, LANES)

    geom = (C, OH1, OW1, OH2, OW2, OH3, OW3)
    kernel = functools.partial(_fused_convnet_kernel, geom=geom)

    out_pad = pl.pallas_call(
        kernel,
        out_shape=jax.ShapeDtypeStruct((B, P3, LANES), jnp.float32),
        grid_spec=pltpu.PrefetchScalarGridSpec(
            num_scalar_prefetch=0,
            grid=(B,),
            in_specs=[
                pl.BlockSpec((1, HB, WB, 16 * C), lambda b: (b, 0, 0, 0)),   # xb
                pl.BlockSpec((4, 16 * C, LANES), lambda b: (0, 0, 0)),       # w1 (blocked)
                pl.BlockSpec((1, LANES), lambda b: (0, 0)),                  # b1
                pl.BlockSpec((16 * LANES, LANES), lambda b: (0, 0)),         # w2
                pl.BlockSpec((1, LANES), lambda b: (0, 0)),                  # b2
                pl.BlockSpec((9 * LANES, LANES), lambda b: (0, 0)),          # w3
                pl.BlockSpec((1, LANES), lambda b: (0, 0)),                  # b3
            ],
            out_specs=pl.BlockSpec((1, P3, LANES), lambda b: (b, 0, 0)),
            scratch_shapes=[
                pltpu.VMEM((OH1 * OW1, LANES), jnp.float32),   # act1 (layer-1 output)
                pltpu.VMEM((OH2 * OW2, LANES), jnp.float32),   # act2 (layer-2 output)
            ],
        ),
        compiler_params=pltpu.CompilerParams(
            dimension_semantics=("parallel",),   # v7x: split batch across the 2 TensorCores
        ),
    )(xb, w1_blk, b1_p, w2_mat, b2_p, w3_mat, b3_p)

    # torch Flatten over NCHW (B, Cout3, OH3, OW3) -> (B, Cout3*OH3*OW3)
    feats = out_pad[:, :, :Cout3]                       # drop lane padding
    feats = jnp.transpose(feats, (0, 2, 1)).reshape(B, Cout3 * P3)
    return feats


def init_params(key, c_in):
    """Deterministic init mimicking PyTorch Conv2d default: U(-1/sqrt(fan_in), 1/sqrt(fan_in))."""
    shapes = [
        ((32, c_in, 8, 8), (32,)),
        ((64, 32, 4, 4), (64,)),
        ((64, 64, 3, 3), (64,)),
    ]
    params = []
    for w_shape, b_shape in shapes:
        key, kw, kb = jax.random.split(key, 3)
        fan_in = w_shape[1] * w_shape[2] * w_shape[3]
        bound = 1.0 / (fan_in ** 0.5)
        w = jax.random.uniform(kw, w_shape, jnp.float32, -bound, bound)
        b = jax.random.uniform(kb, b_shape, jnp.float32, -bound, bound)
        params.append((w, b))
    return params


def _conv_relu_ref(x, w, b, stride):
    out = jax.lax.conv_general_dilated(
        x, w, (stride, stride), "VALID",
        dimension_numbers=("NCHW", "OIHW", "NCHW"))
    return jax.nn.relu(out + b[None, :, None, None])


def convnet_ref(x, params):
    (w1, b1), (w2, b2), (w3, b3) = params
    x = _conv_relu_ref(x, w1, b1, 4)
    x = _conv_relu_ref(x, w2, b2, 2)
    x = _conv_relu_ref(x, w3, b3, 1)
    return x.reshape(x.shape[0], -1)


if __name__ == "__main__":
    key = jax.random.PRNGKey(0)
    k_x, k_p = jax.random.split(key)

    # state_dim = (c=4, h=36, w=36): spatial 36 -> 8 -> 3 -> 1, out_features = 64*1*1 = 64
    B, C, H, W = 2, 4, 36, 36
    x = jax.random.normal(k_x, (B, C, H, W), jnp.float32)
    params = init_params(k_p, C)

    out = jax.jit(convnet_forward)(x, params)
    out = jax.block_until_ready(out)

    ref = convnet_ref(x, params)
    assert out.shape == (B, 64), out.shape
    assert jnp.allclose(out, ref, rtol=1e-4, atol=1e-4), float(jnp.max(jnp.abs(out - ref)))

    print("KERNEL_OK")
</pallas_src>

<mosaic_0001>
module attributes {stable_mosaic.version = 11 : i64} {
  func.func @_fused_convnet_kernel(%arg0: i32, %arg1: memref<1x9x9x64xf32, #tpu.memory_space<vmem>>, %arg2: memref<4x64x128xf32, #tpu.memory_space<vmem>>, %arg3: memref<1x128xf32, #tpu.memory_space<vmem>>, %arg4: memref<2048x128xf32, #tpu.memory_space<vmem>>, %arg5: memref<1x128xf32, #tpu.memory_space<vmem>>, %arg6: memref<1152x128xf32, #tpu.memory_space<vmem>>, %arg7: memref<1x128xf32, #tpu.memory_space<vmem>>, %arg8: memref<1x1x128xf32, #tpu.memory_space<vmem>>, %arg9: memref<64x128xf32, #tpu.memory_space<vmem>>, %arg10: memref<9x128xf32, #tpu.memory_space<vmem>>) attributes {dimension_semantics = [#tpu.dimension_semantics<parallel>], iteration_bounds = array<i64: 2>, scalar_prefetch = 0 : i64, scratch_operands = 2 : i64, tpu.core_type = #tpu.core_type<tc>, window_params = [{transform_indices = @transform_0, window_bounds = array<i64: 1, 9, 9, 64>}, {pipeline_mode = #tpu.pipeline_mode<synchronous>, transform_indices = @transform_1, window_bounds = array<i64: 4, 64, 128>}, {pipeline_mode = #tpu.pipeline_mode<synchronous>, transform_indices = @transform_2, window_bounds = array<i64: 1, 128>}, {pipeline_mode = #tpu.pipeline_mode<synchronous>, transform_indices = @transform_3, window_bounds = array<i64: 2048, 128>}, {pipeline_mode = #tpu.pipeline_mode<synchronous>, transform_indices = @transform_4, window_bounds = array<i64: 1, 128>}, {pipeline_mode = #tpu.pipeline_mode<synchronous>, transform_indices = @transform_5, window_bounds = array<i64: 1152, 128>}, {pipeline_mode = #tpu.pipeline_mode<synchronous>, transform_indices = @transform_6, window_bounds = array<i64: 1, 128>}, {transform_indices = @transform_7, window_bounds = array<i64: 1, 1, 128>}]} {
    %c0 = arith.constant 0 : index
    %c0_0 = arith.constant 0 : index
    %c0_1 = arith.constant 0 : index
    %c0_2 = arith.constant 0 : index
    %0 = vector.load %arg1[%c0, %c0_0, %c0_1, %c0_2] : memref<1x9x9x64xf32, #tpu.memory_space<vmem>>, vector<1x8x8x64xf32>
    %1 = vector.shape_cast %0 : vector<1x8x8x64xf32> to vector<8x8x64xf32>
    %2 = vector.shape_cast %1 : vector<8x8x64xf32> to vector<64x64xf32>
    %c0_3 = arith.constant 0 : index
    %c0_4 = arith.constant 0 : index
    %c0_5 = arith.constant 0 : index
    %3 = vector.load %arg2[%c0_3, %c0_4, %c0_5] : memref<4x64x128xf32, #tpu.memory_space<vmem>>, vector<1x64x128xf32>
    %4 = vector.shape_cast %3 : vector<1x64x128xf32> to vector<64x128xf32>
    %cst = arith.constant dense<0.000000e+00> : vector<64x128xf32>
    %5 = tpu.matmul %2, %4, %cst {dimension_numbers = #tpu.dot_dimension_numbers<[1], [0], [0], [1], [0, 0, 1, 1], [], []>} : vector<64x64xf32>, vector<64x128xf32>, vector<64x128xf32> -> vector<64x128xf32>
    %c0_6 = arith.constant 0 : index
    %c0_7 = arith.constant 0 : index
    %6 = vector.load %arg9[%c0_6, %c0_7] : memref<64x128xf32, #tpu.memory_space<vmem>>, vector<64x128xf32>
    tpu.vector_store %arg9[%c0_6, %c0_7], %5 {strides = array<i32>} : memref<64x128xf32, #tpu.memory_space<vmem>>, vector<64x128xf32>,
    %c0_8 = arith.constant 0 : index
    %c0_9 = arith.constant 0 : index
    %c1 = arith.constant 1 : index
    %c0_10 = arith.constant 0 : index
    %7 = vector.load %arg1[%c0_8, %c0_9, %c1, %c0_10] : memref<1x9x9x64xf32, #tpu.memory_space<vmem>>, vector<1x8x8x64xf32>
    %8 = vector.shape_cast %7 : vector<1x8x8x64xf32> to vector<8x8x64xf32>
    %9 = vector.shape_cast %8 : vector<8x8x64xf32> to vector<64x64xf32>
    %c1_11 = arith.constant 1 : index
    %c0_12 = arith.constant 0 : index
    %c0_13 = arith.constant 0 : index
    %10 = vector.load %arg2[%c1_11, %c0_12, %c0_13] : memref<4x64x128xf32, #tpu.memory_space<vmem>>, vector<1x64x128xf32>
    %11 = vector.shape_cast %10 : vector<1x64x128xf32> to vector<64x128xf32>
    %cst_14 = arith.constant dense<0.000000e+00> : vector<64x128xf32>
    %12 = tpu.matmul %9, %11, %cst_14 {dimension_numbers = #tpu.dot_dimension_numbers<[1], [0], [0], [1], [0, 0, 1, 1], [], []>} : vector<64x64xf32>, vector<64x128xf32>, vector<64x128xf32> -> vector<64x128xf32>
    %c0_15 = arith.constant 0 : index
    %c0_16 = arith.constant 0 : index
    %13 = vector.load %arg9[%c0_15, %c0_16] : memref<64x128xf32, #tpu.memory_space<vmem>>, vector<64x128xf32>
    %14 = arith.addf %13, %12 : vector<64x128xf32>
    %c0_17 = arith.constant 0 : index
    %c0_18 = arith.constant 0 : index
    %15 = vector.load %arg9[%c0_17, %c0_18] : memref<64x128xf32, #tpu.memory_space<vmem>>, vector<64x128xf32>
    tpu.vector_store %arg9[%c0_17, %c0_18], %14 {strides = array<i32>} : memref<64x128xf32, #tpu.memory_space<vmem>>, vector<64x128xf32>,
    %c0_19 = arith.constant 0 : index
    %c1_20 = arith.constant 1 : index
    %c0_21 = arith.constant 0 : index
    %c0_22 = arith.constant 0 : index
    %16 = vector.load %arg1[%c0_19, %c1_20, %c0_21, %c0_22] : memref<1x9x9x64xf32, #tpu.memory_space<vmem>>, vector<1x8x8x64xf32>
    %17 = vector.shape_cast %16 : vector<1x8x8x64xf32> to vector<8x8x64xf32>
    %18 = vector.shape_cast %17 : vector<8x8x64xf32> to vector<64x64xf32>
    %c2 = arith.constant 2 : index
    %c0_23 = arith.constant 0 : index
    %c0_24 = arith.constant 0 : index
    %19 = vector.load %arg2[%c2, %c0_23, %c0_24] : memref<4x64x128xf32, #tpu.memory_space<vmem>>, vector<1x64x128xf32>
    %20 = vector.shape_cast %19 : vector<1x64x128xf32> to vector<64x128xf32>
    %cst_25 = arith.constant dense<0.000000e+00> : vector<64x128xf32>
    %21 = tpu.matmul %18, %20, %cst_25 {dimension_numbers = #tpu.dot_dimension_numbers<[1], [0], [0], [1], [0, 0, 1, 1], [], []>} : vector<64x64xf32>, vector<64x128xf32>, vector<64x128xf32> -> vector<64x128xf32>
    %c0_26 = arith.constant 0 : index
    %c0_27 = arith.constant 0 : index
    %22 = vector.load %arg9[%c0_26, %c0_27] : memref<64x128xf32, #tpu.memory_space<vmem>>, vector<64x128xf32>
    %23 = arith.addf %22, %21 : vector<64x128xf32>
    %c0_28 = arith.constant 0 : index
    %c0_29 = arith.constant 0 : index
    %24 = vector.load %arg9[%c0_28, %c0_29] : memref<64x128xf32, #tpu.memory_space<vmem>>, vector<64x128xf32>
    tpu.vector_store %arg9[%c0_28, %c0_29], %23 {strides = array<i32>} : memref<64x128xf32, #tpu.memory_space<vmem>>, vector<64x128xf32>,
    %c0_30 = arith.constant 0 : index
    %c1_31 = arith.constant 1 : index
    %c1_32 = arith.constant 1 : index
    %c0_33 = arith.constant 0 : index
    %25 = vector.load %arg1[%c0_30, %c1_31, %c1_32, %c0_33] : memref<1x9x9x64xf32, #tpu.memory_space<vmem>>, vector<1x8x8x64xf32>
    %26 = vector.shape_cast %25 : vector<1x8x8x64xf32> to vector<8x8x64xf32>
    %27 = vector.shape_cast %26 : vector<8x8x64xf32> to vector<64x64xf32>
    %c3 = arith.constant 3 : index
    %c0_34 = arith.constant 0 : index
    %c0_35 = arith.constant 0 : index
    %28 = vector.load %arg2[%c3, %c0_34, %c0_35] : memref<4x64x128xf32, #tpu.memory_space<vmem>>, vector<1x64x128xf32>
    %29 = vector.shape_cast %28 : vector<1x64x128xf32> to vector<64x128xf32>
    %cst_36 = arith.constant dense<0.000000e+00> : vector<64x128xf32>
    %30 = tpu.matmul %27, %29, %cst_36 {dimension_numbers = #tpu.dot_dimension_numbers<[1], [0], [0], [1], [0, 0, 1, 1], [], []>} : vector<64x64xf32>, vector<64x128xf32>, vector<64x128xf32> -> vector<64x128xf32>
    %c0_37 = arith.constant 0 : index
    %c0_38 = arith.constant 0 : index
    %31 = vector.load %arg9[%c0_37, %c0_38] : memref<64x128xf32, #tpu.memory_space<vmem>>, vector<64x128xf32>
    %32 = arith.addf %31, %30 : vector<64x128xf32>
    %c0_39 = arith.constant 0 : index
    %c0_40 = arith.constant 0 : index
    %33 = vector.load %arg9[%c0_39, %c0_40] : memref<64x128xf32, #tpu.memory_space<vmem>>, vector<64x128xf32>
    tpu.vector_store %arg9[%c0_39, %c0_40], %32 {strides = array<i32>} : memref<64x128xf32, #tpu.memory_space<vmem>>, vector<64x128xf32>,
    %c0_41 = arith.constant 0 : index
    %c0_42 = arith.constant 0 : index
    %34 = vector.load %arg9[%c0_41, %c0_42] : memref<64x128xf32, #tpu.memory_space<vmem>>, vector<64x128xf32>
    %c0_43 = arith.constant 0 : index
    %c0_44 = arith.constant 0 : index
    %35 = vector.load %arg3[%c0_43, %c0_44] : memref<1x128xf32, #tpu.memory_space<vmem>>, vector<1x128xf32>
    %36 = vector.broadcast %35 : vector<1x128xf32> to vector<64x128xf32>
    %37 = arith.addf %34, %36 : vector<64x128xf32>
    %cst_45 = arith.constant 0.000000e+00 : f32
    %38 = vector.broadcast %cst_45 : f32 to vector<64x128xf32>
    %39 = arith.maximumf %37, %38 : vector<64x128xf32>
    %c0_46 = arith.constant 0 : index
    %c0_47 = arith.constant 0 : index
    %40 = vector.load %arg9[%c0_46, %c0_47] : memref<64x128xf32, #tpu.memory_space<vmem>>, vector<64x128xf32>
    tpu.vector_store %arg9[%c0_46, %c0_47], %39 {strides = array<i32>} : memref<64x128xf32, #tpu.memory_space<vmem>>, vector<64x128xf32>,
    %c0_48 = arith.constant 0 : index
    %c0_49 = arith.constant 0 : index
    %41 = vector.load %arg9[%c0_48, %c0_49] : memref<64x128xf32, #tpu.memory_space<vmem>>, vector<1x128xf32>
    %c1_50 = arith.constant 1 : index
    %c0_51 = arith.constant 0 : index
    %42 = vector.load %arg9[%c1_50, %c0_51] : memref<64x128xf32, #tpu.memory_space<vmem>>, vector<1x128xf32>
    %c2_52 = arith.constant 2 : index
    %c0_53 = arith.constant 0 : index
    %43 = vector.load %arg9[%c2_52, %c0_53] : memref<64x128xf32, #tpu.memory_space<vmem>>, vector<1x128xf32>
    %c3_54 = arith.constant 3 : index
    %c0_55 = arith.constant 0 : index
    %44 = vector.load %arg9[%c3_54, %c0_55] : memref<64x128xf32, #tpu.memory_space<vmem>>, vector<1x128xf32>
    %c8 = arith.constant 8 : index
    %c0_56 = arith.constant 0 : index
    %45 = vector.load %arg9[%c8, %c0_56] : memref<64x128xf32, #tpu.memory_space<vmem>>, vector<1x128xf32>
    %c9 = arith.constant 9 : index
    %c0_57 = arith.constant 0 : index
    %46 = vector.load %arg9[%c9, %c0_57] : memref<64x128xf32, #tpu.memory_space<vmem>>, vector<1x128xf32>
    %c10 = arith.constant 10 : index
    %c0_58 = arith.constant 0 : index
    %47 = vector.load %arg9[%c10, %c0_58] : memref<64x128xf32, #tpu.memory_space<vmem>>, vector<1x128xf32>
    %c11 = arith.constant 11 : index
    %c0_59 = arith.constant 0 : index
    %48 = vector.load %arg9[%c11, %c0_59] : memref<64x128xf32, #tpu.memory_space<vmem>>, vector<1x128xf32>
    %c16 = arith.constant 16 : index
    %c0_60 = arith.constant 0 : index
    %49 = vector.load %arg9[%c16, %c0_60] : memref<64x128xf32, #tpu.memory_space<vmem>>, vector<1x128xf32>
    %c17 = arith.constant 17 : index
    %c0_61 = arith.constant 0 : index
    %50 = vector.load %arg9[%c17, %c0_61] : memref<64x128xf32, #tpu.memory_space<vmem>>, vector<1x128xf32>
    %c18 = arith.constant 18 : index
    %c0_62 = arith.constant 0 : index
    %51 = vector.load %arg9[%c18, %c0_62] : memref<64x128xf32, #tpu.memory_space<vmem>>, vector<1x128xf32>
    %c19 = arith.constant 19 : index
    %c0_63 = arith.constant 0 : index
    %52 = vector.load %arg9[%c19, %c0_63] : memref<64x128xf32, #tpu.memory_space<vmem>>, vector<1x128xf32>
    %c24 = arith.constant 24 : index
    %c0_64 = arith.constant 0 : index
    %53 = vector.load %arg9[%c24, %c0_64] : memref<64x128xf32, #tpu.memory_space<vmem>>, vector<1x128xf32>
    %c25 = arith.constant 25 : index
    %c0_65 = arith.constant 0 : index
    %54 = vector.load %arg9[%c25, %c0_65] : memref<64x128xf32, #tpu.memory_space<vmem>>, vector<1x128xf32>
    %c26 = arith.constant 26 : index
    %c0_66 = arith.constant 0 : index
    %55 = vector.load %arg9[%c26, %c0_66] : memref<64x128xf32, #tpu.memory_space<vmem>>, vector<1x128xf32>
    %c27 = arith.constant 27 : index
    %c0_67 = arith.constant 0 : index
    %56 = vector.load %arg9[%c27, %c0_67] : memref<64x128xf32, #tpu.memory_space<vmem>>, vector<1x128xf32>
    %57 = tpu.concatenate %41, %42, %43, %44, %45, %46, %47, %48, %49, %50, %51, %52, %53, %54, %55, %56 in 1 : vector<1x128xf32>, vector<1x128xf32>, vector<1x128xf32>, vector<1x128xf32>, vector<1x128xf32>, vector<1x128xf32>, vector<1x128xf32>, vector<1x128xf32>, vector<1x128xf32>, vector<1x128xf32>, vector<1x128xf32>, vector<1x128xf32>, vector<1x128xf32>, vector<1x128xf32>, vector<1x128xf32>, vector<1x128xf32> -> vector<1x2048xf32>
    %c2_68 = arith.constant 2 : index
    %c0_69 = arith.constant 0 : index
    %58 = vector.load %arg9[%c2_68, %c0_69] : memref<64x128xf32, #tpu.memory_space<vmem>>, vector<1x128xf32>
    %c3_70 = arith.constant 3 : index
    %c0_71 = arith.constant 0 : index
    %59 = vector.load %arg9[%c3_70, %c0_71] : memref<64x128xf32, #tpu.memory_space<vmem>>, vector<1x128xf32>
    %c4 = arith.constant 4 : index
    %c0_72 = arith.constant 0 : index
    %60 = vector.load %arg9[%c4, %c0_72] : memref<64x128xf32, #tpu.memory_space<vmem>>, vector<1x128xf32>
    %c5 = arith.constant 5 : index
    %c0_73 = arith.constant 0 : index
    %61 = vector.load %arg9[%c5, %c0_73] : memref<64x128xf32, #tpu.memory_space<vmem>>, vector<1x128xf32>
    %c10_74 = arith.constant 10 : index
    %c0_75 = arith.constant 0 : index
    %62 = vector.load %arg9[%c10_74, %c0_75] : memref<64x128xf32, #tpu.memory_space<vmem>>, vector<1x128xf32>
    %c11_76 = arith.constant 11 : index
    %c0_77 = arith.constant 0 : index
    %63 = vector.load %arg9[%c11_76, %c0_77] : memref<64x128xf32, #tpu.memory_space<vmem>>, vector<1x128xf32>
    %c12 = arith.constant 12 : index
    %c0_78 = arith.constant 0 : index
    %64 = vector.load %arg9[%c12, %c0_78] : memref<64x128xf32, #tpu.memory_space<vmem>>, vector<1x128xf32>
    %c13 = arith.constant 13 : index
    %c0_79 = arith.constant 0 : index
    %65 = vector.load %arg9[%c13, %c0_79] : memref<64x128xf32, #tpu.memory_space<vmem>>, vector<1x128xf32>
    %c18_80 = arith.constant 18 : index
    %c0_81 = arith.constant 0 : index
    %66 = vector.load %arg9[%c18_80, %c0_81] : memref<64x128xf32, #tpu.memory_space<vmem>>, vector<1x128xf32>
    %c19_82 = arith.constant 19 : index
    %c0_83 = arith.constant 0 : index
    %67 = vector.load %arg9[%c19_82, %c0_83] : memref<64x128xf32, #tpu.memory_space<vmem>>, vector<1x128xf32>
    %c20 = arith.constant 20 : index
    %c0_84 = arith.constant 0 : index
    %68 = vector.load %arg9[%c20, %c0_84] : memref<64x128xf32, #tpu.memory_space<vmem>>, vector<1x128xf32>
    %c21 = arith.constant 21 : index
    %c0_85 = arith.constant 0 : index
    %69 = vector.load %arg9[%c21, %c0_85] : memref<64x128xf32, #tpu.memory_space<vmem>>, vector<1x128xf32>
    %c26_86 = arith.constant 26 : index
    %c0_87 = arith.constant 0 : index
    %70 = vector.load %arg9[%c26_86, %c0_87] : memref<64x128xf32, #tpu.memory_space<vmem>>, vector<1x128xf32>
    %c27_88 = arith.constant 27 : index
    %c0_89 = arith.constant 0 : index
    %71 = vector.load %arg9[%c27_88, %c0_89] : memref<64x128xf32, #tpu.memory_space<vmem>>, vector<1x128xf32>
    %c28 = arith.constant 28 : index
    %c0_90 = arith.constant 0 : index
    %72 = vector.load %arg9[%c28, %c0_90] : memref<64x128xf32, #tpu.memory_space<vmem>>, vector<1x128xf32>
    %c29 = arith.constant 29 : index
    %c0_91 = arith.constant 0 : index
    %73 = vector.load %arg9[%c29, %c0_91] : memref<64x128xf32, #tpu.memory_space<vmem>>, vector<1x128xf32>
    %74 = tpu.concatenate %58, %59, %60, %61, %62, %63, %64, %65, %66, %67, %68, %69, %70, %71, %72, %73 in 1 : vector<1x128xf32>, vector<1x128xf32>, vector<1x128xf32>, vector<1x128xf32>, vector<1x128xf32>, vector<1x128xf32>, vector<1x128xf32>, vector<1x128xf32>, vector<1x128xf32>, vector<1x128xf32>, vector<1x128xf32>, vector<1x128xf32>, vector<1x128xf32>, vector<1x128xf32>, vector<1x128xf32>, vector<1x128xf32> -> vector<1x2048xf32>
    %c4_92 = arith.constant 4 : index
    %c0_93 = arith.constant 0 : index
    %75 = vector.load %arg9[%c4_92, %c0_93] : memref<64x128xf32, #tpu.memory_space<vmem>>, vector<1x128xf32>
    %c5_94 = arith.constant 5 : index
    %c0_95 = arith.constant 0 : index
    %76 = vector.load %arg9[%c5_94, %c0_95] : memref<64x128xf32, #tpu.memory_space<vmem>>, vector<1x128xf32>
    %c6 = arith.constant 6 : index
    %c0_96 = arith.constant 0 : index
    %77 = vector.load %arg9[%c6, %c0_96] : memref<64x128xf32, #tpu.memory_space<vmem>>, vector<1x128xf32>
    %c7 = arith.constant 7 : index
    %c0_97 = arith.constant 0 : index
    %78 = vector.load %arg9[%c7, %c0_97] : memref<64x128xf32, #tpu.memory_space<vmem>>, vector<1x128xf32>
    %c12_98 = arith.constant 12 : index
    %c0_99 = arith.constant 0 : index
    %79 = vector.load %arg9[%c12_98, %c0_99] : memref<64x128xf32, #tpu.memory_space<vmem>>, vector<1x128xf32>
    %c13_100 = arith.constant 13 : index
    %c0_101 = arith.constant 0 : index
    %80 = vector.load %arg9[%c13_100, %c0_101] : memref<64x128xf32, #tpu.memory_space<vmem>>, vector<1x128xf32>
    %c14 = arith.constant 14 : index
    %c0_102 = arith.constant 0 : index
    %81 = vector.load %arg9[%c14, %c0_102] : memref<64x128xf32, #tpu.memory_space<vmem>>, vector<1x128xf32>
    %c15 = arith.constant 15 : index
    %c0_103 = arith.constant 0 : index
    %82 = vector.load %arg9[%c15, %c0_103] : memref<64x128xf32, #tpu.memory_space<vmem>>, vector<1x128xf32>
    %c20_104 = arith.constant 20 : index
    %c0_105 = arith.constant 0 : index
    %83 = vector.load %arg9[%c20_104, %c0_105] : memref<64x128xf32, #tpu.memory_space<vmem>>, vector<1x128xf32>
    %c21_106 = arith.constant 21 : index
    %c0_107 = arith.constant 0 : index
    %84 = vector.load %arg9[%c21_106, %c0_107] : memref<64x128xf32, #tpu.memory_space<vmem>>, vector<1x128xf32>
    %c22 = arith.constant 22 : index
    %c0_108 = arith.constant 0 : index
    %85 = vector.load %arg9[%c22, %c0_108] : memref<64x128xf32, #tpu.memory_space<vmem>>, vector<1x128xf32>
    %c23 = arith.constant 23 : index
    %c0_109 = arith.constant 0 : index
    %86 = vector.load %arg9[%c23, %c0_109] : memref<64x128xf32, #tpu.memory_space<vmem>>, vector<1x128xf32>
    %c28_110 = arith.constant 28 : index
    %c0_111 = arith.constant 0 : index
    %87 = vector.load %arg9[%c28_110, %c0_111] : memref<64x128xf32, #tpu.memory_space<vmem>>, vector<1x128xf32>
    %c29_112 = arith.constant 29 : index
    %c0_113 = arith.constant 0 : index
    %88 = vector.load %arg9[%c29_112, %c0_113] : memref<64x128xf32, #tpu.memory_space<vmem>>, vector<1x128xf32>
    %c30 = arith.constant 30 : index
    %c0_114 = arith.constant 0 : index
    %89 = vector.load %arg9[%c30, %c0_114] : memref<64x128xf32, #tpu.memory_space<vmem>>, vector<1x128xf32>
    %c31 = arith.constant 31 : index
    %c0_115 = arith.constant 0 : index
    %90 = vector.load %arg9[%c31, %c0_115] : memref<64x128xf32, #tpu.memory_space<vmem>>, vector<1x128xf32>
    %91 = tpu.concatenate %75, %76, %77, %78, %79, %80, %81, %82, %83, %84, %85, %86, %87, %88, %89, %90 in 1 : vector<1x128xf32>, vector<1x128xf32>, vector<1x128xf32>, vector<1x128xf32>, vector<1x128xf32>, vector<1x128xf32>, vector<1x128xf32>, vector<1x128xf32>, vector<1x128xf32>, vector<1x128xf32>, vector<1x128xf32>, vector<1x128xf32>, vector<1x128xf32>, vector<1x128xf32>, vector<1x128xf32>, vector<1x128xf32> -> vector<1x2048xf32>
    %c16_116 = arith.constant 16 : index
    %c0_117 = arith.constant 0 : index
    %92 = vector.load %arg9[%c16_116, %c0_117] : memref<64x128xf32, #tpu.memory_space<vmem>>, vector<1x128xf32>
    %c17_118 = arith.constant 17 : index
    %c0_119 = arith.constant 0 : index
    %93 = vector.load %arg9[%c17_118, %c0_119] : memref<64x128xf32, #tpu.memory_space<vmem>>, vector<1x128xf32>
    %c18_120 = arith.constant 18 : index
    %c0_121 = arith.constant 0 : index
    %94 = vector.load %arg9[%c18_120, %c0_121] : memref<64x128xf32, #tpu.memory_space<vmem>>, vector<1x128xf32>
    %c19_122 = arith.constant 19 : index
    %c0_123 = arith.constant 0 : index
    %95 = vector.load %arg9[%c19_122, %c0_123] : memref<64x128xf32, #tpu.memory_space<vmem>>, vector<1x128xf32>
    %c24_124 = arith.constant 24 : index
    %c0_125 = arith.constant 0 : index
    %96 = vector.load %arg9[%c24_124, %c0_125] : memref<64x128xf32, #tpu.memory_space<vmem>>, vector<1x128xf32>
    %c25_126 = arith.constant 25 : index
    %c0_127 = arith.constant 0 : index
    %97 = vector.load %arg9[%c25_126, %c0_127] : memref<64x128xf32, #tpu.memory_space<vmem>>, vector<1x128xf32>
    %c26_128 = arith.constant 26 : index
    %c0_129 = arith.constant 0 : index
    %98 = vector.load %arg9[%c26_128, %c0_129] : memref<64x128xf32, #tpu.memory_space<vmem>>, vector<1x128xf32>
    %c27_130 = arith.constant 27 : index
    %c0_131 = arith.constant 0 : index
    %99 = vector.load %arg9[%c27_130, %c0_131] : memref<64x128xf32, #tpu.memory_space<vmem>>, vector<1x128xf32>
    %c32 = arith.constant 32 : index
    %c0_132 = arith.constant 0 : index
    %100 = vector.load %arg9[%c32, %c0_132] : memref<64x128xf32, #tpu.memory_space<vmem>>, vector<1x128xf32>
    %c33 = arith.constant 33 : index
    %c0_133 = arith.constant 0 : index
    %101 = vector.load %arg9[%c33, %c0_133] : memref<64x128xf32, #tpu.memory_space<vmem>>, vector<1x128xf32>
    %c34 = arith.constant 34 : index
    %c0_134 = arith.constant 0 : index
    %102 = vector.load %arg9[%c34, %c0_134] : memref<64x128xf32, #tpu.memory_space<vmem>>, vector<1x128xf32>
    %c35 = arith.constant 35 : index
    %c0_135 = arith.constant 0 : index
    %103 = vector.load %arg9[%c35, %c0_135] : memref<64x128xf32, #tpu.memory_space<vmem>>, vector<1x128xf32>
    %c40 = arith.constant 40 : index
    %c0_136 = arith.constant 0 : index
    %104 = vector.load %arg9[%c40, %c0_136] : memref<64x128xf32, #tpu.memory_space<vmem>>, vector<1x128xf32>
    %c41 = arith.constant 41 : index
    %c0_137 = arith.constant 0 : index
    %105 = vector.load %arg9[%c41, %c0_137] : memref<64x128xf32, #tpu.memory_space<vmem>>, vector<1x128xf32>
    %c42 = arith.constant 42 : index
    %c0_138 = arith.constant 0 : index
    %106 = vector.load %arg9[%c42, %c0_138] : memref<64x128xf32, #tpu.memory_space<vmem>>, vector<1x128xf32>
    %c43 = arith.constant 43 : index
    %c0_139 = arith.constant 0 : index
    %107 = vector.load %arg9[%c43, %c0_139] : memref<64x128xf32, #tpu.memory_space<vmem>>, vector<1x128xf32>
    %108 = tpu.concatenate %92, %93, %94, %95, %96, %97, %98, %99, %100, %101, %102, %103, %104, %105, %106, %107 in 1 : vector<1x128xf32>, vector<1x128xf32>, vector<1x128xf32>, vector<1x128xf32>, vector<1x128xf32>, vector<1x128xf32>, vector<1x128xf32>, vector<1x128xf32>, vector<1x128xf32>, vector<1x128xf32>, vector<1x128xf32>, vector<1x128xf32>, vector<1x128xf32>, vector<1x128xf32>, vector<1x128xf32>, vector<1x128xf32> -> vector<1x2048xf32>
    %c18_140 = arith.constant 18 : index
    %c0_141 = arith.constant 0 : index
    %109 = vector.load %arg9[%c18_140, %c0_141] : memref<64x128xf32, #tpu.memory_space<vmem>>, vector<1x128xf32>
    %c19_142 = arith.constant 19 : index
    %c0_143 = arith.constant 0 : index
    %110 = vector.load %arg9[%c19_142, %c0_143] : memref<64x128xf32, #tpu.memory_space<vmem>>, vector<1x128xf32>
    %c20_144 = arith.constant 20 : index
    %c0_145 = arith.constant 0 : index
    %111 = vector.load %arg9[%c20_144, %c0_145] : memref<64x128xf32, #tpu.memory_space<vmem>>, vector<1x128xf32>
    %c21_146 = arith.constant 21 : index
    %c0_147 = arith.constant 0 : index
    %112 = vector.load %arg9[%c21_146, %c0_147] : memref<64x128xf32, #tpu.memory_space<vmem>>, vector<1x128xf32>
    %c26_148 = arith.constant 26 : index
    %c0_149 = arith.constant 0 : index
    %113 = vector.load %arg9[%c26_148, %c0_149] : memref<64x128xf32, #tpu.memory_space<vmem>>, vector<1x128xf32>
    %c27_150 = arith.constant 27 : index
    %c0_151 = arith.constant 0 : index
    %114 = vector.load %arg9[%c27_150, %c0_151] : memref<64x128xf32, #tpu.memory_space<vmem>>, vector<1x128xf32>
    %c28_152 = arith.constant 28 : index
    %c0_153 = arith.constant 0 : index
    %115 = vector.load %arg9[%c28_152, %c0_153] : memref<64x128xf32, #tpu.memory_space<vmem>>, vector<1x128xf32>
    %c29_154 = arith.constant 29 : index
    %c0_155 = arith.constant 0 : index
    %116 = vector.load %arg9[%c29_154, %c0_155] : memref<64x128xf32, #tpu.memory_space<vmem>>, vector<1x128xf32>
    %c34_156 = arith.constant 34 : index
    %c0_157 = arith.constant 0 : index
    %117 = vector.load %arg9[%c34_156, %c0_157] : memref<64x128xf32, #tpu.memory_space<vmem>>, vector<1x128xf32>
    %c35_158 = arith.constant 35 : index
    %c0_159 = arith.constant 0 : index
    %118 = vector.load %arg9[%c35_158, %c0_159] : memref<64x128xf32, #tpu.memory_space<vmem>>, vector<1x128xf32>
    %c36 = arith.constant 36 : index
    %c0_160 = arith.constant 0 : index
    %119 = vector.load %arg9[%c36, %c0_160] : memref<64x128xf32, #tpu.memory_space<vmem>>, vector<1x128xf32>
    %c37 = arith.constant 37 : index
    %c0_161 = arith.constant 0 : index
    %120 = vector.load %arg9[%c37, %c0_161] : memref<64x128xf32, #tpu.memory_space<vmem>>, vector<1x128xf32>
    %c42_162 = arith.constant 42 : index
    %c0_163 = arith.constant 0 : index
    %121 = vector.load %arg9[%c42_162, %c0_163] : memref<64x128xf32, #tpu.memory_space<vmem>>, vector<1x128xf32>
    %c43_164 = arith.constant 43 : index
    %c0_165 = arith.constant 0 : index
    %122 = vector.load %arg9[%c43_164, %c0_165] : memref<64x128xf32, #tpu.memory_space<vmem>>, vector<1x128xf32>
    %c44 = arith.constant 44 : index
    %c0_166 = arith.constant 0 : index
    %123 = vector.load %arg9[%c44, %c0_166] : memref<64x128xf32, #tpu.memory_space<vmem>>, vector<1x128xf32>
    %c45 = arith.constant 45 : index
    %c0_167 = arith.constant 0 : index
    %124 = vector.load %arg9[%c45, %c0_167] : memref<64x128xf32, #tpu.memory_space<vmem>>, vector<1x128xf32>
    %125 = tpu.concatenate %109, %110, %111, %112, %113, %114, %115, %116, %117, %118, %119, %120, %121, %122, %123, %124 in 1 : vector<1x128xf32>, vector<1x128xf32>, vector<1x128xf32>, vector<1x128xf32>, vector<1x128xf32>, vector<1x128xf32>, vector<1x128xf32>, vector<1x128xf32>, vector<1x128xf32>, vector<1x128xf32>, vector<1x128xf32>, vector<1x128xf32>, vector<1x128xf32>, vector<1x128xf32>, vector<1x128xf32>, vector<1x128xf32> -> vector<1x2048xf32>
    %c20_168 = arith.constant 20 : index
    %c0_169 = arith.constant 0 : index
    %126 = vector.load %arg9[%c20_168, %c0_169] : memref<64x128xf32, #tpu.memory_space<vmem>>, vector<1x128xf32>
    %c21_170 = arith.constant 21 : index
    %c0_171 = arith.constant 0 : index
    %127 = vector.load %arg9[%c21_170, %c0_171] : memref<64x128xf32, #tpu.memory_space<vmem>>, vector<1x128xf32>
    %c22_172 = arith.constant 22 : index
    %c0_173 = arith.constant 0 : index
    %128 = vector.load %arg9[%c22_172, %c0_173] : memref<64x128xf32, #tpu.memory_space<vmem>>, vector<1x128xf32>
    %c23_174 = arith.constant 23 : index
    %c0_175 = arith.constant 0 : index
    %129 = vector.load %arg9[%c23_174, %c0_175] : memref<64x128xf32, #tpu.memory_space<vmem>>, vector<1x128xf32>
    %c28_176 = arith.constant 28 : index
    %c0_177 = arith.constant 0 : index
    %130 = vector.load %arg9[%c28_176, %c0_177] : memref<64x128xf32, #tpu.memory_space<vmem>>, vector<1x128xf32>
    %c29_178 = arith.constant 29 : index
    %c0_179 = arith.constant 0 : index
    %131 = vector.load %arg9[%c29_178, %c0_179] : memref<64x128xf32, #tpu.memory_space<vmem>>, vector<1x128xf32>
    %c30_180 = arith.constant 30 : index
    %c0_181 = arith.constant 0 : index
    %132 = vector.load %arg9[%c30_180, %c0_181] : memref<64x128xf32, #tpu.memory_space<vmem>>, vector<1x128xf32>
    %c31_182 = arith.constant 31 : index
    %c0_183 = arith.constant 0 : index
    %133 = vector.load %arg9[%c31_182, %c0_183] : memref<64x128xf32, #tpu.memory_space<vmem>>, vector<1x128xf32>
    %c36_184 = arith.constant 36 : index
    %c0_185 = arith.constant 0 : index
    %134 = vector.load %arg9[%c36_184, %c0_185] : memref<64x128xf32, #tpu.memory_space<vmem>>, vector<1x128xf32>
    %c37_186 = arith.constant 37 : index
    %c0_187 = arith.constant 0 : index
    %135 = vector.load %arg9[%c37_186, %c0_187] : memref<64x128xf32, #tpu.memory_space<vmem>>, vector<1x128xf32>
    %c38 = arith.constant 38 : index
    %c0_188 = arith.constant 0 : index
    %136 = vector.load %arg9[%c38, %c0_188] : memref<64x128xf32, #tpu.memory_space<vmem>>, vector<1x128xf32>
    %c39 = arith.constant 39 : index
    %c0_189 = arith.constant 0 : index
    %137 = vector.load %arg9[%c39, %c0_189] : memref<64x128xf32, #tpu.memory_space<vmem>>, vector<1x128xf32>
    %c44_190 = arith.constant 44 : index
    %c0_191 = arith.constant 0 : index
    %138 = vector.load %arg9[%c44_190, %c0_191] : memref<64x128xf32, #tpu.memory_space<vmem>>, vector<1x128xf32>
    %c45_192 = arith.constant 45 : index
    %c0_193 = arith.constant 0 : index
    %139 = vector.load %arg9[%c45_192, %c0_193] : memref<64x128xf32, #tpu.memory_space<vmem>>, vector<1x128xf32>
    %c46 = arith.constant 46 : index
    %c0_194 = arith.constant 0 : index
    %140 = vector.load %arg9[%c46, %c0_194] : memref<64x128xf32, #tpu.memory_space<vmem>>, vector<1x128xf32>
    %c47 = arith.constant 47 : index
    %c0_195 = arith.constant 0 : index
    %141 = vector.load %arg9[%c47, %c0_195] : memref<64x128xf32, #tpu.memory_space<vmem>>, vector<1x128xf32>
    %142 = tpu.concatenate %126, %127, %128, %129, %130, %131, %132, %133, %134, %135, %136, %137, %138, %139, %140, %141 in 1 : vector<1x128xf32>, vector<1x128xf32>, vector<1x128xf32>, vector<1x128xf32>, vector<1x128xf32>, vector<1x128xf32>, vector<1x128xf32>, vector<1x128xf32>, vector<1x128xf32>, vector<1x128xf32>, vector<1x128xf32>, vector<1x128xf32>, vector<1x128xf32>, vector<1x128xf32>, vector<1x128xf32>, vector<1x128xf32> -> vector<1x2048xf32>
    %c32_196 = arith.constant 32 : index
    %c0_197 = arith.constant 0 : index
    %143 = vector.load %arg9[%c32_196, %c0_197] : memref<64x128xf32, #tpu.memory_space<vmem>>, vector<1x128xf32>
    %c33_198 = arith.constant 33 : index
    %c0_199 = arith.constant 0 : index
    %144 = vector.load %arg9[%c33_198, %c0_199] : memref<64x128xf32, #tpu.memory_space<vmem>>, vector<1x128xf32>
    %c34_200 = arith.constant 34 : index
    %c0_201 = arith.constant 0 : index
    %145 = vector.load %arg9[%c34_200, %c0_201] : memref<64x128xf32, #tpu.memory_space<vmem>>, vector<1x128xf32>
    %c35_202 = arith.constant 35 : index
    %c0_203 = arith.constant 0 : index
    %146 = vector.load %arg9[%c35_202, %c0_203] : memref<64x128xf32, #tpu.memory_space<vmem>>, vector<1x128xf32>
    %c40_204 = arith.constant 40 : index
    %c0_205 = arith.constant 0 : index
    %147 = vector.load %arg9[%c40_204, %c0_205] : memref<64x128xf32, #tpu.memory_space<vmem>>, vector<1x128xf32>
    %c41_206 = arith.constant 41 : index
    %c0_207 = arith.constant 0 : index
    %148 = vector.load %arg9[%c41_206, %c0_207] : memref<64x128xf32, #tpu.memory_space<vmem>>, vector<1x128xf32>
    %c42_208 = arith.constant 42 : index
    %c0_209 = arith.constant 0 : index
    %149 = vector.load %arg9[%c42_208, %c0_209] : memref<64x128xf32, #tpu.memory_space<vmem>>, vector<1x128xf32>
    %c43_210 = arith.constant 43 : index
    %c0_211 = arith.constant 0 : index
    %150 = vector.load %arg9[%c43_210, %c0_211] : memref<64x128xf32, #tpu.memory_space<vmem>>, vector<1x128xf32>
    %c48 = arith.constant 48 : index
    %c0_212 = arith.constant 0 : index
    %151 = vector.load %arg9[%c48, %c0_212] : memref<64x128xf32, #tpu.memory_space<vmem>>, vector<1x128xf32>
    %c49 = arith.constant 49 : index
    %c0_213 = arith.constant 0 : index
    %152 = vector.load %arg9[%c49, %c0_213] : memref<64x128xf32, #tpu.memory_space<vmem>>, vector<1x128xf32>
    %c50 = arith.constant 50 : index
    %c0_214 = arith.constant 0 : index
    %153 = vector.load %arg9[%c50, %c0_214] : memref<64x128xf32, #tpu.memory_space<vmem>>, vector<1x128xf32>
    %c51 = arith.constant 51 : index
    %c0_215 = arith.constant 0 : index
    %154 = vector.load %arg9[%c51, %c0_215] : memref<64x128xf32, #tpu.memory_space<vmem>>, vector<1x128xf32>
    %c56 = arith.constant 56 : index
    %c0_216 = arith.constant 0 : index
    %155 = vector.load %arg9[%c56, %c0_216] : memref<64x128xf32, #tpu.memory_space<vmem>>, vector<1x128xf32>
    %c57 = arith.constant 57 : index
    %c0_217 = arith.constant 0 : index
    %156 = vector.load %arg9[%c57, %c0_217] : memref<64x128xf32, #tpu.memory_space<vmem>>, vector<1x128xf32>
    %c58 = arith.constant 58 : index
    %c0_218 = arith.constant 0 : index
    %157 = vector.load %arg9[%c58, %c0_218] : memref<64x128xf32, #tpu.memory_space<vmem>>, vector<1x128xf32>
    %c59 = arith.constant 59 : index
    %c0_219 = arith.constant 0 : index
    %158 = vector.load %arg9[%c59, %c0_219] : memref<64x128xf32, #tpu.memory_space<vmem>>, vector<1x128xf32>
    %159 = tpu.concatenate %143, %144, %145, %146, %147, %148, %149, %150, %151, %152, %153, %154, %155, %156, %157, %158 in 1 : vector<1x128xf32>, vector<1x128xf32>, vector<1x128xf32>, vector<1x128xf32>, vector<1x128xf32>, vector<1x128xf32>, vector<1x128xf32>, vector<1x128xf32>, vector<1x128xf32>, vector<1x128xf32>, vector<1x128xf32>, vector<1x128xf32>, vector<1x128xf32>, vector<1x128xf32>, vector<1x128xf32>, vector<1x128xf32> -> vector<1x2048xf32>
    %c34_220 = arith.constant 34 : index
    %c0_221 = arith.constant 0 : index
    %160 = vector.load %arg9[%c34_220, %c0_221] : memref<64x128xf32, #tpu.memory_space<vmem>>, vector<1x128xf32>
    %c35_222 = arith.constant 35 : index
    %c0_223 = arith.constant 0 : index
    %161 = vector.load %arg9[%c35_222, %c0_223] : memref<64x128xf32, #tpu.memory_space<vmem>>, vector<1x128xf32>
    %c36_224 = arith.constant 36 : index
    %c0_225 = arith.constant 0 : index
    %162 = vector.load %arg9[%c36_224, %c0_225] : memref<64x128xf32, #tpu.memory_space<vmem>>, vector<1x128xf32>
    %c37_226 = arith.constant 37 : index
    %c0_227 = arith.constant 0 : index
    %163 = vector.load %arg9[%c37_226, %c0_227] : memref<64x128xf32, #tpu.memory_space<vmem>>, vector<1x128xf32>
    %c42_228 = arith.constant 42 : index
    %c0_229 = arith.constant 0 : index
    %164 = vector.load %arg9[%c42_228, %c0_229] : memref<64x128xf32, #tpu.memory_space<vmem>>, vector<1x128xf32>
    %c43_230 = arith.constant 43 : index
    %c0_231 = arith.constant 0 : index
    %165 = vector.load %arg9[%c43_230, %c0_231] : memref<64x128xf32, #tpu.memory_space<vmem>>, vector<1x128xf32>
    %c44_232 = arith.constant 44 : index
    %c0_233 = arith.constant 0 : index
    %166 = vector.load %arg9[%c44_232, %c0_233] : memref<64x128xf32, #tpu.memory_space<vmem>>, vector<1x128xf32>
    %c45_234 = arith.constant 45 : index
    %c0_235 = arith.constant 0 : index
    %167 = vector.load %arg9[%c45_234, %c0_235] : memref<64x128xf32, #tpu.memory_space<vmem>>, vector<1x128xf32>
    %c50_236 = arith.constant 50 : index
    %c0_237 = arith.constant 0 : index
    %168 = vector.load %arg9[%c50_236, %c0_237] : memref<64x128xf32, #tpu.memory_space<vmem>>, vector<1x128xf32>
    %c51_238 = arith.constant 51 : index
    %c0_239 = arith.constant 0 : index
    %169 = vector.load %arg9[%c51_238, %c0_239] : memref<64x128xf32, #tpu.memory_space<vmem>>, vector<1x128xf32>
    %c52 = arith.constant 52 : index
    %c0_240 = arith.constant 0 : index
    %170 = vector.load %arg9[%c52, %c0_240] : memref<64x128xf32, #tpu.memory_space<vmem>>, vector<1x128xf32>
    %c53 = arith.constant 53 : index
    %c0_241 = arith.constant 0 : index
    %171 = vector.load %arg9[%c53, %c0_241] : memref<64x128xf32, #tpu.memory_space<vmem>>, vector<1x128xf32>
    %c58_242 = arith.constant 58 : index
    %c0_243 = arith.constant 0 : index
    %172 = vector.load %arg9[%c58_242, %c0_243] : memref<64x128xf32, #tpu.memory_space<vmem>>, vector<1x128xf32>
    %c59_244 = arith.constant 59 : index
    %c0_245 = arith.constant 0 : index
    %173 = vector.load %arg9[%c59_244, %c0_245] : memref<64x128xf32, #tpu.memory_space<vmem>>, vector<1x128xf32>
    %c60 = arith.constant 60 : index
    %c0_246 = arith.constant 0 : index
    %174 = vector.load %arg9[%c60, %c0_246] : memref<64x128xf32, #tpu.memory_space<vmem>>, vector<1x128xf32>
    %c61 = arith.constant 61 : index
    %c0_247 = arith.constant 0 : index
    %175 = vector.load %arg9[%c61, %c0_247] : memref<64x128xf32, #tpu.memory_space<vmem>>, vector<1x128xf32>
    %176 = tpu.concatenate %160, %161, %162, %163, %164, %165, %166, %167, %168, %169, %170, %171, %172, %173, %174, %175 in 1 : vector<1x128xf32>, vector<1x128xf32>, vector<1x128xf32>, vector<1x128xf32>, vector<1x128xf32>, vector<1x128xf32>, vector<1x128xf32>, vector<1x128xf32>, vector<1x128xf32>, vector<1x128xf32>, vector<1x128xf32>, vector<1x128xf32>, vector<1x128xf32>, vector<1x128xf32>, vector<1x128xf32>, vector<1x128xf32> -> vector<1x2048xf32>
    %c36_248 = arith.constant 36 : index
    %c0_249 = arith.constant 0 : index
    %177 = vector.load %arg9[%c36_248, %c0_249] : memref<64x128xf32, #tpu.memory_space<vmem>>, vector<1x128xf32>
    %c37_250 = arith.constant 37 : index
    %c0_251 = arith.constant 0 : index
    %178 = vector.load %arg9[%c37_250, %c0_251] : memref<64x128xf32, #tpu.memory_space<vmem>>, vector<1x128xf32>
    %c38_252 = arith.constant 38 : index
    %c0_253 = arith.constant 0 : index
    %179 = vector.load %arg9[%c38_252, %c0_253] : memref<64x128xf32, #tpu.memory_space<vmem>>, vector<1x128xf32>
    %c39_254 = arith.constant 39 : index
    %c0_255 = arith.constant 0 : index
    %180 = vector.load %arg9[%c39_254, %c0_255] : memref<64x128xf32, #tpu.memory_space<vmem>>, vector<1x128xf32>
    %c44_256 = arith.constant 44 : index
    %c0_257 = arith.constant 0 : index
    %181 = vector.load %arg9[%c44_256, %c0_257] : memref<64x128xf32, #tpu.memory_space<vmem>>, vector<1x128xf32>
    %c45_258 = arith.constant 45 : index
    %c0_259 = arith.constant 0 : index
    %182 = vector.load %arg9[%c45_258, %c0_259] : memref<64x128xf32, #tpu.memory_space<vmem>>, vector<1x128xf32>
    %c46_260 = arith.constant 46 : index
    %c0_261 = arith.constant 0 : index
    %183 = vector.load %arg9[%c46_260, %c0_261] : memref<64x128xf32, #tpu.memory_space<vmem>>, vector<1x128xf32>
    %c47_262 = arith.constant 47 : index
    %c0_263 = arith.constant 0 : index
    %184 = vector.load %arg9[%c47_262, %c0_263] : memref<64x128xf32, #tpu.memory_space<vmem>>, vector<1x128xf32>
    %c52_264 = arith.constant 52 : index
    %c0_265 = arith.constant 0 : index
    %185 = vector.load %arg9[%c52_264, %c0_265] : memref<64x128xf32, #tpu.memory_space<vmem>>, vector<1x128xf32>
    %c53_266 = arith.constant 53 : index
    %c0_267 = arith.constant 0 : index
    %186 = vector.load %arg9[%c53_266, %c0_267] : memref<64x128xf32, #tpu.memory_space<vmem>>, vector<1x128xf32>
    %c54 = arith.constant 54 : index
    %c0_268 = arith.constant 0 : index
    %187 = vector.load %arg9[%c54, %c0_268] : memref<64x128xf32, #tpu.memory_space<vmem>>, vector<1x128xf32>
    %c55 = arith.constant 55 : index
    %c0_269 = arith.constant 0 : index
    %188 = vector.load %arg9[%c55, %c0_269] : memref<64x128xf32, #tpu.memory_space<vmem>>, vector<1x128xf32>
    %c60_270 = arith.constant 60 : index
    %c0_271 = arith.constant 0 : index
    %189 = vector.load %arg9[%c60_270, %c0_271] : memref<64x128xf32, #tpu.memory_space<vmem>>, vector<1x128xf32>
    %c61_272 = arith.constant 61 : index
    %c0_273 = arith.constant 0 : index
    %190 = vector.load %arg9[%c61_272, %c0_273] : memref<64x128xf32, #tpu.memory_space<vmem>>, vector<1x128xf32>
    %c62 = arith.constant 62 : index
    %c0_274 = arith.constant 0 : index
    %191 = vector.load %arg9[%c62, %c0_274] : memref<64x128xf32, #tpu.memory_space<vmem>>, vector<1x128xf32>
    %c63 = arith.constant 63 : index
    %c0_275 = arith.constant 0 : index
    %192 = vector.load %arg9[%c63, %c0_275] : memref<64x128xf32, #tpu.memory_space<vmem>>, vector<1x128xf32>
    %193 = tpu.concatenate %177, %178, %179, %180, %181, %182, %183, %184, %185, %186, %187, %188, %189, %190, %191, %192 in 1 : vector<1x128xf32>, vector<1x128xf32>, vector<1x128xf32>, vector<1x128xf32>, vector<1x128xf32>, vector<1x128xf32>, vector<1x128xf32>, vector<1x128xf32>, vector<1x128xf32>, vector<1x128xf32>, vector<1x128xf32>, vector<1x128xf32>, vector<1x128xf32>, vector<1x128xf32>, vector<1x128xf32>, vector<1x128xf32> -> vector<1x2048xf32>
    %194 = tpu.concatenate %57, %74, %91, %108, %125, %142, %159, %176, %193 in 0 : vector<1x2048xf32>, vector<1x2048xf32>, vector<1x2048xf32>, vector<1x2048xf32>, vector<1x2048xf32>, vector<1x2048xf32>, vector<1x2048xf32>, vector<1x2048xf32>, vector<1x2048xf32> -> vector<9x2048xf32>
    %c0_276 = arith.constant 0 : index
    %c0_277 = arith.constant 0 : index
    %195 = vector.load %arg4[%c0_276, %c0_277] : memref<2048x128xf32, #tpu.memory_space<vmem>>, vector<2048x128xf32>
    %cst_278 = arith.constant dense<0.000000e+00> : vector<9x128xf32>
    %196 = tpu.matmul %194, %195, %cst_278 {dimension_numbers = #tpu.dot_dimension_numbers<[1], [0], [0], [1], [0, 0, 1, 1], [], []>} : vector<9x2048xf32>, vector<2048x128xf32>, vector<9x128xf32> -> vector<9x128xf32>
    %c0_279 = arith.constant 0 : index
    %c0_280 = arith.constant 0 : index
    %197 = vector.load %arg5[%c0_279, %c0_280] : memref<1x128xf32, #tpu.memory_space<vmem>>, vector<1x128xf32>
    %198 = vector.broadcast %197 : vector<1x128xf32> to vector<9x128xf32>
    %199 = arith.addf %196, %198 : vector<9x128xf32>
    %cst_281 = arith.constant 0.000000e+00 : f32
    %200 = vector.broadcast %cst_281 : f32 to vector<9x128xf32>
    %201 = arith.maximumf %199, %200 : vector<9x128xf32>
    %c0_282 = arith.constant 0 : index
    %c0_283 = arith.constant 0 : index
    %202 = vector.load %arg10[%c0_282, %c0_283] : memref<9x128xf32, #tpu.memory_space<vmem>>, vector<9x128xf32>
    tpu.vector_store %arg10[%c0_282, %c0_283], %201 {strides = array<i32>} : memref<9x128xf32, #tpu.memory_space<vmem>>, vector<9x128xf32>,
    %c0_284 = arith.constant 0 : index
    %c0_285 = arith.constant 0 : index
    %203 = vector.load %arg10[%c0_284, %c0_285] : memref<9x128xf32, #tpu.memory_space<vmem>>, vector<1x128xf32>
    %c1_286 = arith.constant 1 : index
    %c0_287 = arith.constant 0 : index
    %204 = vector.load %arg10[%c1_286, %c0_287] : memref<9x128xf32, #tpu.memory_space<vmem>>, vector<1x128xf32>
    %c2_288 = arith.constant 2 : index
    %c0_289 = arith.constant 0 : index
    %205 = vector.load %arg10[%c2_288, %c0_289] : memref<9x128xf32, #tpu.memory_space<vmem>>, vector<1x128xf32>
    %c3_290 = arith.constant 3 : index
    %c0_291 = arith.constant 0 : index
    %206 = vector.load %arg10[%c3_290, %c0_291] : memref<9x128xf32, #tpu.memory_space<vmem>>, vector<1x128xf32>
    %c4_292 = arith.constant 4 : index
    %c0_293 = arith.constant 0 : index
    %207 = vector.load %arg10[%c4_292, %c0_293] : memref<9x128xf32, #tpu.memory_space<vmem>>, vector<1x128xf32>
    %c5_294 = arith.constant 5 : index
    %c0_295 = arith.constant 0 : index
    %208 = vector.load %arg10[%c5_294, %c0_295] : memref<9x128xf32, #tpu.memory_space<vmem>>, vector<1x128xf32>
    %c6_296 = arith.constant 6 : index
    %c0_297 = arith.constant 0 : index
    %209 = vector.load %arg10[%c6_296, %c0_297] : memref<9x128xf32, #tpu.memory_space<vmem>>, vector<1x128xf32>
    %c7_298 = arith.constant 7 : index
    %c0_299 = arith.constant 0 : index
    %210 = vector.load %arg10[%c7_298, %c0_299] : memref<9x128xf32, #tpu.memory_space<vmem>>, vector<1x128xf32>
    %c8_300 = arith.constant 8 : index
    %c0_301 = arith.constant 0 : index
    %211 = vector.load %arg10[%c8_300, %c0_301] : memref<9x128xf32, #tpu.memory_space<vmem>>, vector<1x128xf32>
    %212 = tpu.concatenate %203, %204, %205, %206, %207, %208, %209, %210, %211 in 1 : vector<1x128xf32>, vector<1x128xf32>, vector<1x128xf32>, vector<1x128xf32>, vector<1x128xf32>, vector<1x128xf32>, vector<1x128xf32>, vector<1x128xf32>, vector<1x128xf32> -> vector<1x1152xf32>
    %c0_302 = arith.constant 0 : index
    %c0_303 = arith.constant 0 : index
    %213 = vector.load %arg6[%c0_302, %c0_303] : memref<1152x128xf32, #tpu.memory_space<vmem>>, vector<1152x128xf32>
    %cst_304 = arith.constant dense<0.000000e+00> : vector<1x128xf32>
    %214 = tpu.matmul %212, %213, %cst_304 {dimension_numbers = #tpu.dot_dimension_numbers<[1], [0], [0], [1], [0, 0, 1, 1], [], []>} : vector<1x1152xf32>, vector<1152x128xf32>, vector<1x128xf32> -> vector<1x128xf32>
    %c0_305 = arith.constant 0 : index
    %c0_306 = arith.constant 0 : index
    %215 = vector.load %arg7[%c0_305, %c0_306] : memref<1x128xf32, #tpu.memory_space<vmem>>, vector<1x128xf32>
    %216 = arith.addf %214, %215 : vector<1x128xf32>
    %cst_307 = arith.constant 0.000000e+00 : f32
    %217 = vector.broadcast %cst_307 : f32 to vector<1x128xf32>
    %218 = arith.maximumf %216, %217 : vector<1x128xf32>
    %219 = vector.shape_cast %218 : vector<1x128xf32> to vector<1x1x128xf32>
    %c0_308 = arith.constant 0 : index
    %c0_309 = arith.constant 0 : index
    %c0_310 = arith.constant 0 : index
    %220 = vector.load %arg8[%c0_308, %c0_309, %c0_310] : memref<1x1x128xf32, #tpu.memory_space<vmem>>, vector<1x1x128xf32>
    tpu.vector_store %arg8[%c0_308, %c0_309, %c0_310], %219 {strides = array<i32>} : memref<1x1x128xf32, #tpu.memory_space<vmem>>, vector<1x1x128xf32>,
    return
  }
  func.func @transform_0(%arg0: i32) -> (i32, i32, i32, i32) {
    %c0_i32 = arith.constant 0 : i32
    %c0_i32_0 = arith.constant 0 : i32
    %c0_i32_1 = arith.constant 0 : i32
    %c0_i32_2 = arith.constant 0 : i32
    return %arg0, %c0_i32, %c0_i32_0, %c0_i32_1 : i32, i32, i32, i32
  }
  func.func @transform_1(%arg0: i32) -> (i32, i32, i32) {
    %c0_i32 = arith.constant 0 : i32
    %c0_i32_0 = arith.constant 0 : i32
    %c0_i32_1 = arith.constant 0 : i32
    %c0_i32_2 = arith.constant 0 : i32
    return %c0_i32, %c0_i32_0, %c0_i32_1 : i32, i32, i32
  }
  func.func @transform_2(%arg0: i32) -> (i32, i32) {
    %c0_i32 = arith.constant 0 : i32
    %c0_i32_0 = arith.constant 0 : i32
    %c0_i32_1 = arith.constant 0 : i32
    return %c0_i32, %c0_i32_0 : i32, i32
  }
  func.func @transform_3(%arg0: i32) -> (i32, i32) {
    %c0_i32 = arith.constant 0 : i32
    %c0_i32_0 = arith.constant 0 : i32
    %c0_i32_1 = arith.constant 0 : i32
    return %c0_i32, %c0_i32_0 : i32, i32
  }
  func.func @transform_4(%arg0: i32) -> (i32, i32) {
    %c0_i32 = arith.constant 0 : i32
    %c0_i32_0 = arith.constant 0 : i32
    %c0_i32_1 = arith.constant 0 : i32
    return %c0_i32, %c0_i32_0 : i32, i32
  }
  func.func @transform_5(%arg0: i32) -> (i32, i32) {
    %c0_i32 = arith.constant 0 : i32
    %c0_i32_0 = arith.constant 0 : i32
    %c0_i32_1 = arith.constant 0 : i32
    return %c0_i32, %c0_i32_0 : i32, i32
  }
  func.func @transform_6(%arg0: i32) -> (i32, i32) {
    %c0_i32 = arith.constant 0 : i32
    %c0_i32_0 = arith.constant 0 : i32
    %c0_i32_1 = arith.constant 0 : i32
    return %c0_i32, %c0_i32_0 : i32, i32
  }
  func.func @transform_7(%arg0: i32) -> (i32, i32, i32) {
    %c0_i32 = arith.constant 0 : i32
    %c0_i32_0 = arith.constant 0 : i32
    %c0_i32_1 = arith.constant 0 : i32
    return %arg0, %c0_i32, %c0_i32_0 : i32, i32, i32
  }
}

</mosaic_0001>

<llo_original>
// kernel: convnet_forward.1
$region0: #{convnet_forward.1}
  #allocation0 [shape = 'u32[]', space=smem, size = 0x4, offset = 0x4, fixed_abs, tag = 'smem constant byte address 0x4 - core index']
  #allocation1 [shape = 'u32[144,128]{1,0:T(1,128)}', space=vmem, size = 0x12000, scoped, tag = 'internal scratch']
  #allocation2 [shape = 'f32[64,128]{1,0:T(8,128)}', space=vmem, size = 0x8000, scoped, tag = 'scratch operand']
  #allocation3 [shape = 'f32[9,128]{1,0:T(8,128)}', space=vmem, size = 0x2000, scoped, tag = 'scratch operand']
  %s0 = inlined_call_operand.vmem [shape: f32[2,9,9,64], index: 0, kind: input, shape index: {}]
  %s1 = inlined_call_operand.vmem [shape: f32[4,64,128], index: 1, kind: input, shape index: {}]
  %s2 = inlined_call_operand.vmem [shape: f32[1,128], index: 2, kind: input, shape index: {}]
  %s3 = inlined_call_operand.vmem [shape: f32[2048,128], index: 3, kind: input, shape index: {}]
  %s4 = inlined_call_operand.vmem [shape: f32[1,128], index: 4, kind: input, shape index: {}]
  %s5 = inlined_call_operand.vmem [shape: f32[1152,128], index: 5, kind: input, shape index: {}]
  %s6 = inlined_call_operand.vmem [shape: f32[1,128], index: 6, kind: input, shape index: {}]
  %s7 = inlined_call_operand.hbm [shape: f32[2,1,128], index: 7, kind: output, shape index: {}]
  %s8 = sld [smem:[#allocation0]]
  $region61: #{convnet_forward.1} parent=0
    _
  %s10 = ssub.s32 1, %s8
  %s11 = scalar_select 0, %s10, %s8
  $region1: #{convnet_forward.1} parent=0
    #allocation4 [shape = 'u8[1024]{0}', space=vmem, size = 0x400, scoped, tag = 'output window, operand 0']
    #allocation5 [shape = 's32[2]{0}', space=sflag, size = 0x8, scoped, tag = 'scoped memory for convnet_forward.1']
    %12 = vsyncpa [#allocation5], 0
    %s13 = scalar_lea.sflag [#allocation5], 1
    %14 = vsyncpa %s13, 0
    loop: start=0, step=1, limit=4
    $region2: #{convnet_forward.1} parent=1 // loop_pre_header
      _
    $region3: #{convnet_forward.1} parent=1 // loop_header
      %s16 = sphi 0, %s20
      %p17 = scmp.ge.s32.totalorder %s16, 4
      %s26 = sphi 0, %s28
      %s29 = sphi 0, %s26
      %s30 = sphi 0, %s29
      %s46 = sphi 0, %s30
      %s50 = sphi 0, %s50
      %s52 = sphi 0, %s50
      %s53 = sphi 0, %s52
      %s67 = sphi 0, %s53
      %s71 = sphi 0, %s71
      %s73 = sphi 0, %s71
      %s74 = sphi 0, %s73
      %s88 = sphi 0, %s74
      %s92 = sphi 0, %s92
      %s94 = sphi 0, %s92
      %s95 = sphi 0, %s94
      %s109 = sphi 0, %s95
      %s113 = sphi 0, %s113
      %s115 = sphi 0, %s113
      %s116 = sphi 0, %s115
      %s130 = sphi 0, %s116
      %s134 = sphi 0, %s134
      %s136 = sphi 0, %s134
      %s137 = sphi 0, %s136
      %s151 = sphi 0, %s137
      %s155 = sphi 0, %s155
      %s157 = sphi 0, %s155
      %s158 = sphi 0, %s157
      %s172 = sphi 0, %s158
      %s178 = sphi 0, %s180
      %s181 = sphi 0, %s178
      %s182 = sphi 0, %s181
      %s198 = sphi 0, %s182
    $region4: #{convnet_forward.1} parent=1 // loop_header_branch
      %19 = sbr.rel (%p17) target = $region8
    $region5: #{convnet_forward.1} parent=1 // loop_body
      %s21 = ssub.s32 %s16, 1
      %s22 = ssub.s32 %s16, 2
      %s23 = sadd.s32 %s16, 1
      %s24 = ssub.s32 %s16, %s23
      %p25 = scmp.eq.s32.totalorder %s24, 0
      %s27 = sadd.s32 %s26, 1
      %s28 = scalar_select %p25, %s26, %s27
      %p31 = pneg %p25
      %p32 = scmp.eq.s32.totalorder %s16, 1
      %p33 = por %p31, %p32
      %p34 = scmp.ne.s32.totalorder %s26, %s29
      %p35 = scmp.eq.s32.totalorder %s16, 0
      %p36 = por %p34, %p35
      %p37 = scmp.ne.s32.totalorder %s26, %s29
      %p38 = scmp.eq.s32.totalorder %s21, 1
      %p39 = por %p37, %p38
      %p40 = scmp.ne.s32.totalorder %s29, %s30
      %p41 = scmp.eq.s32.totalorder %s21, 0
      %p42 = por %p40, %p41
      %p43 = scmp.ne.s32.totalorder %s29, %s30
      %p44 = scmp.eq.s32.totalorder %s22, 1
      %p45 = por %p43, %p44
      %p47 = scmp.ne.s32.totalorder %s30, %s46
      %p48 = scmp.eq.s32.totalorder %s22, 0
      %p49 = por %p47, %p48
      %s51 = sadd.s32 %s50, 1
      %p54 = scmp.eq.s32.totalorder %s16, 1
      %p55 = scmp.ne.s32.totalorder %s50, %s52
      %p56 = scmp.eq.s32.totalorder %s16, 0
      %p57 = por %p55, %p56
      %p58 = scmp.ne.s32.totalorder %s50, %s52
      %p59 = scmp.eq.s32.totalorder %s21, 1
      %p60 = por %p58, %p59
      %p61 = scmp.ne.s32.totalorder %s52, %s53
      %p62 = scmp.eq.s32.totalorder %s21, 0
      %p63 = por %p61, %p62
      %p64 = scmp.ne.s32.totalorder %s52, %s53
      %p65 = scmp.eq.s32.totalorder %s22, 1
      %p66 = por %p64, %p65
      %p68 = scmp.ne.s32.totalorder %s53, %s67
      %p69 = scmp.eq.s32.totalorder %s22, 0
      %p70 = por %p68, %p69
      %s72 = sadd.s32 %s71, 1
      %p75 = scmp.eq.s32.totalorder %s16, 1
      %p76 = scmp.ne.s32.totalorder %s71, %s73
      %p77 = scmp.eq.s32.totalorder %s16, 0
      %p78 = por %p76, %p77
      %p79 = scmp.ne.s32.totalorder %s71, %s73
      %p80 = scmp.eq.s32.totalorder %s21, 1
      %p81 = por %p79, %p80
      %p82 = scmp.ne.s32.totalorder %s73, %s74
      %p83 = scmp.eq.s32.totalorder %s21, 0
      %p84 = por %p82, %p83
      %p85 = scmp.ne.s32.totalorder %s73, %s74
      %p86 = scmp.eq.s32.totalorder %s22, 1
      %p87 = por %p85, %p86
      %p89 = scmp.ne.s32.totalorder %s74, %s88
      %p90 = scmp.eq.s32.totalorder %s22, 0
      %p91 = por %p89, %p90
      %s93 = sadd.s32 %s92, 1
      %p96 = scmp.eq.s32.totalorder %s16, 1
      %p97 = scmp.ne.s32.totalorder %s92, %s94
      %p98 = scmp.eq.s32.totalorder %s16, 0
      %p99 = por %p97, %p98
      %p100 = scmp.ne.s32.totalorder %s92, %s94
      %p101 = scmp.eq.s32.totalorder %s21, 1
      %p102 = por %p100, %p101
      %p103 = scmp.ne.s32.totalorder %s94, %s95
      %p104 = scmp.eq.s32.totalorder %s21, 0
      %p105 = por %p103, %p104
      %p106 = scmp.ne.s32.totalorder %s94, %s95
      %p107 = scmp.eq.s32.totalorder %s22, 1
      %p108 = por %p106, %p107
      %p110 = scmp.ne.s32.totalorder %s95, %s109
      %p111 = scmp.eq.s32.totalorder %s22, 0
      %p112 = por %p110, %p111
      %s114 = sadd.s32 %s113, 1
      %p117 = scmp.eq.s32.totalorder %s16, 1
      %p118 = scmp.ne.s32.totalorder %s113, %s115
      %p119 = scmp.eq.s32.totalorder %s16, 0
      %p120 = por %p118, %p119
      %p121 = scmp.ne.s32.totalorder %s113, %s115
      %p122 = scmp.eq.s32.totalorder %s21, 1
      %p123 = por %p121, %p122
      %p124 = scmp.ne.s32.totalorder %s115, %s116
      %p125 = scmp.eq.s32.totalorder %s21, 0
      %p126 = por %p124, %p125
      %p127 = scmp.ne.s32.totalorder %s115, %s116
      %p128 = scmp.eq.s32.totalorder %s22, 1
      %p129 = por %p127, %p128
      %p131 = scmp.ne.s32.totalorder %s116, %s130
      %p132 = scmp.eq.s32.totalorder %s22, 0
      %p133 = por %p131, %p132
      %s135 = sadd.s32 %s134, 1
      %p138 = scmp.eq.s32.totalorder %s16, 1
      %p139 = scmp.ne.s32.totalorder %s134, %s136
      %p140 = scmp.eq.s32.totalorder %s16, 0
      %p141 = por %p139, %p140
      %p142 = scmp.ne.s32.totalorder %s134, %s136
      %p143 = scmp.eq.s32.totalorder %s21, 1
      %p144 = por %p142, %p143
      %p145 = scmp.ne.s32.totalorder %s136, %s137
      %p146 = scmp.eq.s32.totalorder %s21, 0
      %p147 = por %p145, %p146
      %p148 = scmp.ne.s32.totalorder %s136, %s137
      %p149 = scmp.eq.s32.totalorder %s22, 1
      %p150 = por %p148, %p149
      %p152 = scmp.ne.s32.totalorder %s137, %s151
      %p153 = scmp.eq.s32.totalorder %s22, 0
      %p154 = por %p152, %p153
      %s156 = sadd.s32 %s155, 1
      %p159 = scmp.eq.s32.totalorder %s16, 1
      %p160 = scmp.ne.s32.totalorder %s155, %s157
      %p161 = scmp.eq.s32.totalorder %s16, 0
      %p162 = por %p160, %p161
      %p163 = scmp.ne.s32.totalorder %s155, %s157
      %p164 = scmp.eq.s32.totalorder %s21, 1
      %p165 = por %p163, %p164
      %p166 = scmp.ne.s32.totalorder %s157, %s158
      %p167 = scmp.eq.s32.totalorder %s21, 0
      %p168 = por %p166, %p167
      %p169 = scmp.ne.s32.totalorder %s157, %s158
      %p170 = scmp.eq.s32.totalorder %s22, 1
      %p171 = por %p169, %p170
      %p173 = scmp.ne.s32.totalorder %s158, %s172
      %p174 = scmp.eq.s32.totalorder %s22, 0
      %p175 = por %p173, %p174
      %s176 = ssub.s32 %s16, %s23
      %p177 = scmp.eq.s32.totalorder %s176, 0
      %s179 = sadd.s32 %s178, 1
      %s180 = scalar_select %p177, %s178, %s179
      %p183 = pneg %p177
      %p184 = scmp.eq.s32.totalorder %s16, 1
      %p185 = por %p183, %p184
      %p186 = scmp.ne.s32.totalorder %s178, %s181
      %p187 = scmp.eq.s32.totalorder %s16, 0
      %p188 = por %p186, %p187
      %p189 = scmp.ne.s32.totalorder %s178, %s181
      %p190 = scmp.eq.s32.totalorder %s21, 1
      %p191 = por %p189, %p190
      %p192 = scmp.ne.s32.totalorder %s181, %s182
      %p193 = scmp.eq.s32.totalorder %s21, 0
      %p194 = por %p192, %p193
      %p195 = scmp.ne.s32.totalorder %s181, %s182
      %p196 = scmp.eq.s32.totalorder %s22, 1
      %p197 = por %p195, %p196
      %p199 = scmp.ne.s32.totalorder %s182, %s198
      %p200 = scmp.eq.s32.totalorder %s22, 0
      %p201 = por %p199, %p200
      %p202 = scmp.le.s32.totalorder 1, %s16
      %p203 = scmp.lt.s32.totalorder %s16, 3
      %p204 = pnand %p202, %p203
      %p205 = pneg %p204
      // Predicated region
      $region9: #{convnet_forward.1} parent=5 // pred_check
        _
      $region10: #{convnet_forward.1} parent=5 // pred_check_branch
        %207 = sbr.rel (%p204) target = $region12
      $region11: #{convnet_forward.1} parent=5 // pred_region
        %s208 = ssub.s32 %s16, 1
        // Predicated region
        $region13: #{convnet_forward.1} parent=11 // pred_check
          %p209 = pneg %p63
        $region14: #{convnet_forward.1} parent=11 // pred_check_branch
          %211 = sbr.rel (%p209) target = $region16
        $region15: #{convnet_forward.1} parent=11 // pred_region
          _
        $region16: #{convnet_forward.1} parent=11 // pred_fallthru
          _
        // Predicated region
        $region17: #{convnet_forward.1} parent=11 // pred_check
          %p212 = pneg %p84
        $region18: #{convnet_forward.1} parent=11 // pred_check_branch
          %214 = sbr.rel (%p212) target = $region20
        $region19: #{convnet_forward.1} parent=11 // pred_region
          _
        $region20: #{convnet_forward.1} parent=11 // pred_fallthru
          _
        // Predicated region
        $region21: #{convnet_forward.1} parent=11 // pred_check
          %p215 = pneg %p105
        $region22: #{convnet_forward.1} parent=11 // pred_check_branch
          %217 = sbr.rel (%p215) target = $region24
        $region23: #{convnet_forward.1} parent=11 // pred_region
          _
        $region24: #{convnet_forward.1} parent=11 // pred_fallthru
          _
        // Predicated region
        $region25: #{convnet_forward.1} parent=11 // pred_check
          %p218 = pneg %p126
        $region26: #{convnet_forward.1} parent=11 // pred_check_branch
          %220 = sbr.rel (%p218) target = $region28
        $region27: #{convnet_forward.1} parent=11 // pred_region
          _
        $region28: #{convnet_forward.1} parent=11 // pred_fallthru
          _
        // Predicated region
        $region29: #{convnet_forward.1} parent=11 // pred_check
          %p221 = pneg %p147
        $region30: #{convnet_forward.1} parent=11 // pred_check_branch
          %223 = sbr.rel (%p221) target = $region32
        $region31: #{convnet_forward.1} parent=11 // pred_region
          _
        $region32: #{convnet_forward.1} parent=11 // pred_fallthru
          _
        // Predicated region
        $region33: #{convnet_forward.1} parent=11 // pred_check
          %p224 = pneg %p168
        $region34: #{convnet_forward.1} parent=11 // pred_check_branch
          %226 = sbr.rel (%p224) target = $region36
        $region35: #{convnet_forward.1} parent=11 // pred_region
          _
        $region36: #{convnet_forward.1} parent=11 // pred_fallthru
          _
      $region12: #{convnet_forward.1} parent=5 // pred_fallthru
        _
      %p227 = scmp.lt.s32.totalorder %s16, 2
      // Predicated region
      $region37: #{convnet_forward.1} parent=5 // pred_check
        %p228 = pneg %p227
      $region38: #{convnet_forward.1} parent=5 // pred_check_branch
        %230 = sbr.rel (%p228) target = $region40
      $region39: #{convnet_forward.1} parent=5 // pred_region
        // Predicated region
        $region41: #{convnet_forward.1} parent=39 // pred_check
          %p231 = pneg %p36
        $region42: #{convnet_forward.1} parent=39 // pred_check_branch
          %233 = sbr.rel (%p231) target = $region44
        $region43: #{convnet_forward.1} parent=39 // pred_region
          %p234 = scmp.lt.s32.totalorder %s16, 1
          %s235 = scalar_select %p234, %s16, 1
          %s236 = smul.addr %s235, 18
          %s237 = smul.addr %s236, 8
          %s238 = scalar_lea.vmem %s0, %s237
        $region44: #{convnet_forward.1} parent=39 // pred_fallthru
          _
      $region40: #{convnet_forward.1} parent=5 // pred_fallthru
        _
      %p239 = scmp.le.s32.totalorder 1, %s16
      %p240 = scmp.lt.s32.totalorder %s16, 3
      %p241 = pnand %p239, %p240
      %p242 = pneg %p241
      // Predicated region
      $region45: #{convnet_forward.1} parent=5 // pred_check
        _
      $region46: #{convnet_forward.1} parent=5 // pred_check_branch
        %244 = sbr.rel (%p241) target = $region48
      $region47: #{convnet_forward.1} parent=5 // pred_region
        %s245 = ssub.s32 %s16, 1
        %p246 = scmp.lt.s32.totalorder %s21, 1
        %s247 = scalar_select %p246, %s21, 1
        %s248 = smul.addr %s247, 18
        %s249 = smul.addr %s248, 8
        %s250 = scalar_lea.vmem %s0, %s249
        %p251 = pneg %p42
        %p252 = pneg %p39
        %p253 = pneg %p63
        %p254 = pneg %p60
        %p255 = pneg %p84
        %p256 = pneg %p81
        %p257 = pneg %p105
        %p258 = pneg %p102
        %p259 = pneg %p126
        %p260 = pneg %p123
        %p261 = pneg %p147
        %p262 = pneg %p144
        %p263 = pneg %p168
        %p264 = pneg %p165
        %p265 = pneg %p194
        %p266 = pneg %p191
        %s267 = sand.u32 %s181, 1
        %s268 = scalar_lea.sflag [#allocation5], %s267
        %s269 = sand.u32 %s181, 1
        %s270 = scalar_lea.vmem [#allocation4], %s269
        %p271 = scmp.lt.s32.totalorder %s21, 1
        %s272 = scalar_select %p271, %s21, 1
        %s273 = smul.addr %s272, 18
        %s274 = smul.addr %s273, 8
        %s275 = scalar_lea.vmem %s0, %s274
        %v276 = vld [vmem:[%s275] sm:$0xff]
        %v277 = vld [vmem:[%s275 + $0x10] sm:$0xff]
        %v278 = vld [vmem:[%s275 + $0x20] sm:$0xff]
        %v279 = vld [vmem:[%s275 + $0x30] sm:$0xff]
        %v280 = vld [vmem:[%s275 + $0x40] sm:$0xff]
        %v281 = vld [vmem:[%s275 + $0x50] sm:$0xff]
        %v282 = vld [vmem:[%s275 + $0x60] sm:$0xff]
        %v283 = vld [vmem:[%s275 + $0x70] sm:$0xff]
        %v284 = vld [vmem:[%s1] sm:$0xff]
        %v285 = vld [vmem:[%s1 + $0x8] sm:$0xff]
        %v286 = vld [vmem:[%s1 + $0x10] sm:$0xff]
        %v287 = vld [vmem:[%s1 + $0x18] sm:$0xff]
        %v288 = vld [vmem:[%s1 + $0x20] sm:$0xff]
        %v289 = vld [vmem:[%s1 + $0x28] sm:$0xff]
        %v290 = vld [vmem:[%s1 + $0x30] sm:$0xff]
        %v291 = vld [vmem:[%s1 + $0x38] sm:$0xff]
        %vm292 = vcmask 523264
        %v294 = vsel %vm292, %v276, 0
        %v297 = vsel %vm292, %v277, 0
        %v300 = vsel %vm292, %v278, 0
        %v303 = vsel %vm292, %v279, 0
        %v306 = vsel %vm292, %v280, 0
        %v309 = vsel %vm292, %v281, 0
        %v312 = vsel %vm292, %v282, 0
        %v315 = vsel %vm292, %v283, 0
        %317 = vmatprep.subr.mxu0 0.0
        %318 = vmatpush1.msra.mxu0 %v284
        %319 = vmatprep.subr.mxu0 0.0
        %320 = vmatpush1.msra.mxu0 %v285
        %321 = vmatprep.subr.mxu0 0.0
        %322 = vmatpush1.msra.mxu0 %v286
        %323 = vmatprep.subr.mxu0 0.0
        %324 = vmatpush1.msra.mxu0 %v287
        %325 = vmatprep.subr.mxu0 0.0
        %326 = vmatpush1.msra.mxu0 %v288
        %327 = vmatprep.subr.mxu0 0.0
        %328 = vmatpush1.msra.mxu0 %v289
        %329 = vmatprep.subr.mxu0 0.0
        %330 = vmatpush1.msra.mxu0 %v290
        %331 = vmatprep.subr.mxu0 0.0
        %332 = vmatpush1.msra.mxu0 %v291
        %333 = vmatprep.subr.mxu0 0.0
        %334 = vmatpush1.msra.mxu0 0.0
        %335 = vmatprep.subr.mxu0 0.0
        %336 = vmatpush1.msra.mxu0 0.0
        %337 = vmatprep.subr.mxu0 0.0
        %338 = vmatpush1.msra.mxu0 0.0
        %339 = vmatprep.subr.mxu0 0.0
        %340 = vmatpush1.msra.mxu0 0.0
        %341 = vmatprep.subr.mxu0 0.0
        %342 = vmatpush1.msra.mxu0 0.0
        %343 = vmatprep.subr.mxu0 0.0
        %344 = vmatpush1.msra.mxu0 0.0
        %345 = vmatprep.subr.mxu0 0.0
        %346 = vmatpush1.msra.mxu0 0.0
        %347 = vmatprep.subr.mxu0 0.0
        %348 = vmatpush1.msra.mxu0 0.0
        %349 = vmatprep.subr.mxu0 0.0
        %350 = vmatpush1.msra.mxu0 0.0
        %351 = vmatprep.subr.mxu0 0.0
        %352 = vmatpush1.msra.mxu0 0.0
        %353 = vmatprep.subr.mxu0 0.0
        %354 = vmatpush1.msra.mxu0 0.0
        %355 = vmatprep.subr.mxu0 0.0
        %356 = vmatpush1.msra.mxu0 0.0
        %357 = vmatprep.subr.mxu0 0.0
        %358 = vmatpush1.msra.mxu0 0.0
        %359 = vmatprep.subr.mxu0 0.0
        %360 = vmatpush1.msra.mxu0 0.0
        %361 = vmatprep.subr.mxu0 0.0
        %362 = vmatpush1.msra.mxu0 0.0
        %363 = vmatprep.subr.mxu0 0.0
        %364 = vmatpush1.msra.mxu0 0.0
        %365 = vmatprep.subr.mxu0 0.0
        %366 = vmatpush1.msra.mxu0 0.0
        %367 = vmatprep.subr.mxu0 0.0
        %368 = vmatpush1.msra.mxu0 0.0
        %369 = vmatprep.subr.mxu0 0.0
        %370 = vmatpush1.msra.mxu0 0.0
        %371 = vmatprep.subr.mxu0 0.0
        %372 = vmatpush1.msra.mxu0 0.0
        %373 = vmatprep.subr.mxu0 0.0
        %374 = vmatpush1.msra.mxu0 0.0
        %375 = vmatprep.subr.mxu0 0.0
        %376 = vmatpush1.msra.mxu0 0.0
        %377 = vmatprep.subr.mxu0 0.0
        %378 = vmatpush1.msra.mxu0 0.0
        %379 = vmatprep.subr.mxu0 0.0
        %380 = vmatpush1.msra.mxu0 0.0
        %381 = vmatprep.mubr.f32.mxu0 0.0
        %382 = vmatmul.mubr.f32.gmra.mrb[0].mxu0 %v294
        %v383 = vpop.f32.mrb[0].mxu0
        %v384 = vadd.f32 0.0, %v383
        %v385 = vpop.f32.mrb[0].mxu0
        %386 = vmatprep.mubr.f32.mxu0 0.0
        %387 = vmatmul.mubr.f32.gmra.mrb[0].mxu0 %v297
        %v388 = vpop.f32.mrb[0].mxu0
        %v389 = vadd.f32 0.0, %v388
        %v390 = vpop.f32.mrb[0].mxu0
        %391 = vmatprep.mubr.f32.mxu0 0.0
        %392 = vmatmul.mubr.f32.gmra.mrb[0].mxu0 %v300
        %v393 = vpop.f32.mrb[0].mxu0
        %v394 = vadd.f32 0.0, %v393
        %v395 = vpop.f32.mrb[0].mxu0
        %396 = vmatprep.mubr.f32.mxu0 0.0
        %397 = vmatmul.mubr.f32.gmra.mrb[0].mxu0 %v303
        %v398 = vpop.f32.mrb[0].mxu0
        %v399 = vadd.f32 0.0, %v398
        %v400 = vpop.f32.mrb[0].mxu0
        %401 = vmatprep.mubr.f32.mxu0 0.0
        %402 = vmatmul.mubr.f32.gmra.mrb[0].mxu0 %v306
        %v403 = vpop.f32.mrb[0].mxu0
        %v404 = vadd.f32 0.0, %v403
        %v405 = vpop.f32.mrb[0].mxu0
        %406 = vmatprep.mubr.f32.mxu0 0.0
        %407 = vmatmul.mubr.f32.gmra.mrb[0].mxu0 %v309
        %v408 = vpop.f32.mrb[0].mxu0
        %v409 = vadd.f32 0.0, %v408
        %v410 = vpop.f32.mrb[0].mxu0
        %411 = vmatprep.mubr.f32.mxu0 0.0
        %412 = vmatmul.mubr.f32.gmra.mrb[0].mxu0 %v312
        %v413 = vpop.f32.mrb[0].mxu0
        %v414 = vadd.f32 0.0, %v413
        %v415 = vpop.f32.mrb[0].mxu0
        %416 = vmatprep.mubr.f32.mxu0 0.0
        %417 = vmatmul.mubr.f32.gmra.mrb[0].mxu0 %v315
        %v418 = vpop.f32.mrb[0].mxu0
        %v419 = vadd.f32 0.0, %v418
        %v420 = vpop.f32.mrb[0].mxu0
        %421 = vdwg.mxu0
        %422 = vst [vmem:[#allocation2] sm:$0xff] %v384
        %423 = vst [vmem:[#allocation2 + $0x8] sm:$0xff] %v389
        %424 = vst [vmem:[#allocation2 + $0x10] sm:$0xff] %v394
        %425 = vst [vmem:[#allocation2 + $0x18] sm:$0xff] %v399
        %426 = vst [vmem:[#allocation2 + $0x20] sm:$0xff] %v404
        %427 = vst [vmem:[#allocation2 + $0x28] sm:$0xff] %v409
        %428 = vst [vmem:[#allocation2 + $0x30] sm:$0xff] %v414
        %429 = vst [vmem:[#allocation2 + $0x38] sm:$0xff] %v419
        %v430 = vld [vmem:[%s275 + $0x1] sm:$0xff]
        %v431 = vld [vmem:[%s275 + $0x11] sm:$0xff]
        %v432 = vld [vmem:[%s275 + $0x21] sm:$0xff]
        %v433 = vld [vmem:[%s275 + $0x31] sm:$0xff]
        %v434 = vld [vmem:[%s275 + $0x41] sm:$0xff]
        %v435 = vld [vmem:[%s275 + $0x51] sm:$0xff]
        %v436 = vld [vmem:[%s275 + $0x61] sm:$0xff]
        %v437 = vld [vmem:[%s275 + $0x71] sm:$0xff]
        %s438 = scalar_lea.vmem %s1, 64
        %v439 = vld [vmem:[%s438] sm:$0xff]
        %v440 = vld [vmem:[%s438 + $0x8] sm:$0xff]
        %v441 = vld [vmem:[%s438 + $0x10] sm:$0xff]
        %v442 = vld [vmem:[%s438 + $0x18] sm:$0xff]
        %v443 = vld [vmem:[%s438 + $0x20] sm:$0xff]
        %v444 = vld [vmem:[%s438 + $0x28] sm:$0xff]
        %v445 = vld [vmem:[%s438 + $0x30] sm:$0xff]
        %v446 = vld [vmem:[%s438 + $0x38] sm:$0xff]
        %v448 = vsel %vm292, %v430, 0
        %v451 = vsel %vm292, %v431, 0
        %v454 = vsel %vm292, %v432, 0
        %v457 = vsel %vm292, %v433, 0
        %v460 = vsel %vm292, %v434, 0
        %v463 = vsel %vm292, %v435, 0
        %v466 = vsel %vm292, %v436, 0
        %v469 = vsel %vm292, %v437, 0
        %471 = vmatprep.subr.mxu0 0.0
        %472 = vmatpush1.msra.mxu0 %v439
        %473 = vmatprep.subr.mxu0 0.0
        %474 = vmatpush1.msra.mxu0 %v440
        %475 = vmatprep.subr.mxu0 0.0
        %476 = vmatpush1.msra.mxu0 %v441
        %477 = vmatprep.subr.mxu0 0.0
        %478 = vmatpush1.msra.mxu0 %v442
        %479 = vmatprep.subr.mxu0 0.0
        %480 = vmatpush1.msra.mxu0 %v443
        %481 = vmatprep.subr.mxu0 0.0
        %482 = vmatpush1.msra.mxu0 %v444
        %483 = vmatprep.subr.mxu0 0.0
        %484 = vmatpush1.msra.mxu0 %v445
        %485 = vmatprep.subr.mxu0 0.0
        %486 = vmatpush1.msra.mxu0 %v446
        %487 = vmatprep.subr.mxu0 0.0
        %488 = vmatpush1.msra.mxu0 0.0
        %489 = vmatprep.subr.mxu0 0.0
        %490 = vmatpush1.msra.mxu0 0.0
        %491 = vmatprep.subr.mxu0 0.0
        %492 = vmatpush1.msra.mxu0 0.0
        %493 = vmatprep.subr.mxu0 0.0
        %494 = vmatpush1.msra.mxu0 0.0
        %495 = vmatprep.subr.mxu0 0.0
        %496 = vmatpush1.msra.mxu0 0.0
        %497 = vmatprep.subr.mxu0 0.0
        %498 = vmatpush1.msra.mxu0 0.0
        %499 = vmatprep.subr.mxu0 0.0
        %500 = vmatpush1.msra.mxu0 0.0
        %501 = vmatprep.subr.mxu0 0.0
        %502 = vmatpush1.msra.mxu0 0.0
        %503 = vmatprep.subr.mxu0 0.0
        %504 = vmatpush1.msra.mxu0 0.0
        %505 = vmatprep.subr.mxu0 0.0
        %506 = vmatpush1.msra.mxu0 0.0
        %507 = vmatprep.subr.mxu0 0.0
        %508 = vmatpush1.msra.mxu0 0.0
        %509 = vmatprep.subr.mxu0 0.0
        %510 = vmatpush1.msra.mxu0 0.0
        %511 = vmatprep.subr.mxu0 0.0
        %512 = vmatpush1.msra.mxu0 0.0
        %513 = vmatprep.subr.mxu0 0.0
        %514 = vmatpush1.msra.mxu0 0.0
        %515 = vmatprep.subr.mxu0 0.0
        %516 = vmatpush1.msra.mxu0 0.0
        %517 = vmatprep.subr.mxu0 0.0
        %518 = vmatpush1.msra.mxu0 0.0
        %519 = vmatprep.subr.mxu0 0.0
        %520 = vmatpush1.msra.mxu0 0.0
        %521 = vmatprep.subr.mxu0 0.0
        %522 = vmatpush1.msra.mxu0 0.0
        %523 = vmatprep.subr.mxu0 0.0
        %524 = vmatpush1.msra.mxu0 0.0
        %525 = vmatprep.subr.mxu0 0.0
        %526 = vmatpush1.msra.mxu0 0.0
        %527 = vmatprep.subr.mxu0 0.0
        %528 = vmatpush1.msra.mxu0 0.0
        %529 = vmatprep.subr.mxu0 0.0
        %530 = vmatpush1.msra.mxu0 0.0
        %531 = vmatprep.subr.mxu0 0.0
        %532 = vmatpush1.msra.mxu0 0.0
        %533 = vmatprep.subr.mxu0 0.0
        %534 = vmatpush1.msra.mxu0 0.0
        %535 = vmatprep.mubr.f32.mxu0 0.0
        %536 = vmatmul.mubr.f32.gmra.mrb[0].mxu0 %v448
        %v537 = vpop.f32.mrb[0].mxu0
        %v538 = vadd.f32 0.0, %v537
        %v539 = vpop.f32.mrb[0].mxu0
        %540 = vmatprep.mubr.f32.mxu0 0.0
        %541 = vmatmul.mubr.f32.gmra.mrb[0].mxu0 %v451
        %v542 = vpop.f32.mrb[0].mxu0
        %v543 = vadd.f32 0.0, %v542
        %v544 = vpop.f32.mrb[0].mxu0
        %545 = vmatprep.mubr.f32.mxu0 0.0
        %546 = vmatmul.mubr.f32.gmra.mrb[0].mxu0 %v454
        %v547 = vpop.f32.mrb[0].mxu0
        %v548 = vadd.f32 0.0, %v547
        %v549 = vpop.f32.mrb[0].mxu0
        %550 = vmatprep.mubr.f32.mxu0 0.0
        %551 = vmatmul.mubr.f32.gmra.mrb[0].mxu0 %v457
        %v552 = vpop.f32.mrb[0].mxu0
        %v553 = vadd.f32 0.0, %v552
        %v554 = vpop.f32.mrb[0].mxu0
        %555 = vmatprep.mubr.f32.mxu0 0.0
        %556 = vmatmul.mubr.f32.gmra.mrb[0].mxu0 %v460
        %v557 = vpop.f32.mrb[0].mxu0
        %v558 = vadd.f32 0.0, %v557
        %v559 = vpop.f32.mrb[0].mxu0
        %560 = vmatprep.mubr.f32.mxu0 0.0
        %561 = vmatmul.mubr.f32.gmra.mrb[0].mxu0 %v463
        %v562 = vpop.f32.mrb[0].mxu0
        %v563 = vadd.f32 0.0, %v562
        %v564 = vpop.f32.mrb[0].mxu0
        %565 = vmatprep.mubr.f32.mxu0 0.0
        %566 = vmatmul.mubr.f32.gmra.mrb[0].mxu0 %v466
        %v567 = vpop.f32.mrb[0].mxu0
        %v568 = vadd.f32 0.0, %v567
        %v569 = vpop.f32.mrb[0].mxu0
        %570 = vmatprep.mubr.f32.mxu0 0.0
        %571 = vmatmul.mubr.f32.gmra.mrb[0].mxu0 %v469
        %v572 = vpop.f32.mrb[0].mxu0
        %v573 = vadd.f32 0.0, %v572
        %v574 = vpop.f32.mrb[0].mxu0
        %575 = vdwg.mxu0
        %v576 = vld [vmem:[#allocation2] sm:$0xff]
        %v577 = vld [vmem:[#allocation2 + $0x8] sm:$0xff]
        %v578 = vld [vmem:[#allocation2 + $0x10] sm:$0xff]
        %v579 = vld [vmem:[#allocation2 + $0x18] sm:$0xff]
        %v580 = vld [vmem:[#allocation2 + $0x20] sm:$0xff]
        %v581 = vld [vmem:[#allocation2 + $0x28] sm:$0xff]
        %v582 = vld [vmem:[#allocation2 + $0x30] sm:$0xff]
        %v583 = vld [vmem:[#allocation2 + $0x38] sm:$0xff]
        %v584 = vadd.f32 %v576, %v538
        %v585 = vadd.f32 %v577, %v543
        %v586 = vadd.f32 %v578, %v548
        %v587 = vadd.f32 %v579, %v553
        %v588 = vadd.f32 %v580, %v558
        %v589 = vadd.f32 %v581, %v563
        %v590 = vadd.f32 %v582, %v568
        %v591 = vadd.f32 %v583, %v573
        %592 = vst [vmem:[#allocation2] sm:$0xff] %v584
        %593 = vst [vmem:[#allocation2 + $0x8] sm:$0xff] %v585
        %594 = vst [vmem:[#allocation2 + $0x10] sm:$0xff] %v586
        %595 = vst [vmem:[#allocation2 + $0x18] sm:$0xff] %v587
        %596 = vst [vmem:[#allocation2 + $0x20] sm:$0xff] %v588
        %597 = vst [vmem:[#allocation2 + $0x28] sm:$0xff] %v589
        %598 = vst [vmem:[#allocation2 + $0x30] sm:$0xff] %v590
        %599 = vst [vmem:[#allocation2 + $0x38] sm:$0xff] %v591
        %s600 = scalar_lea.vmem %s275, 16
        %v601 = vld [vmem:[%s600] sm:$0xff]
        %v602 = vld [vmem:[%s600 + $0x10] sm:$0xff]
        %v603 = vld [vmem:[%s600 + $0x20] sm:$0xff]
        %v604 = vld [vmem:[%s600 + $0x30] sm:$0xff]
        %v605 = vld [vmem:[%s600 + $0x40] sm:$0xff]
        %v606 = vld [vmem:[%s600 + $0x50] sm:$0xff]
        %v607 = vld [vmem:[%s600 + $0x60] sm:$0xff]
        %v608 = vld [vmem:[%s600 + $0x70] sm:$0xff]
        %s609 = scalar_lea.vmem %s1, 128
        %v610 = vld [vmem:[%s609] sm:$0xff]
        %v611 = vld [vmem:[%s609 + $0x8] sm:$0xff]
        %v612 = vld [vmem:[%s609 + $0x10] sm:$0xff]
        %v613 = vld [vmem:[%s609 + $0x18] sm:$0xff]
        %v614 = vld [vmem:[%s609 + $0x20] sm:$0xff]
        %v615 = vld [vmem:[%s609 + $0x28] sm:$0xff]
        %v616 = vld [vmem:[%s609 + $0x30] sm:$0xff]
        %v617 = vld [vmem:[%s609 + $0x38] sm:$0xff]
        %v619 = vsel %vm292, %v601, 0
        %v622 = vsel %vm292, %v602, 0
        %v625 = vsel %vm292, %v603, 0
        %v628 = vsel %vm292, %v604, 0
        %v631 = vsel %vm292, %v605, 0
        %v634 = vsel %vm292, %v606, 0
        %v637 = vsel %vm292, %v607, 0
        %v640 = vsel %vm292, %v608, 0
        %642 = vmatprep.subr.mxu0 0.0
        %643 = vmatpush1.msra.mxu0 %v610
        %644 = vmatprep.subr.mxu0 0.0
        %645 = vmatpush1.msra.mxu0 %v611
        %646 = vmatprep.subr.mxu0 0.0
        %647 = vmatpush1.msra.mxu0 %v612
        %648 = vmatprep.subr.mxu0 0.0
        %649 = vmatpush1.msra.mxu0 %v613
        %650 = vmatprep.subr.mxu0 0.0
        %651 = vmatpush1.msra.mxu0 %v614
        %652 = vmatprep.subr.mxu0 0.0
        %653 = vmatpush1.msra.mxu0 %v615
        %654 = vmatprep.subr.mxu0 0.0
        %655 = vmatpush1.msra.mxu0 %v616
        %656 = vmatprep.subr.mxu0 0.0
        %657 = vmatpush1.msra.mxu0 %v617
        %658 = vmatprep.subr.mxu0 0.0
        %659 = vmatpush1.msra.mxu0 0.0
        %660 = vmatprep.subr.mxu0 0.0
        %661 = vmatpush1.msra.mxu0 0.0
        %662 = vmatprep.subr.mxu0 0.0
        %663 = vmatpush1.msra.mxu0 0.0
        %664 = vmatprep.subr.mxu0 0.0
        %665 = vmatpush1.msra.mxu0 0.0
        %666 = vmatprep.subr.mxu0 0.0
        %667 = vmatpush1.msra.mxu0 0.0
        %668 = vmatprep.subr.mxu0 0.0
        %669 = vmatpush1.msra.mxu0 0.0
        %670 = vmatprep.subr.mxu0 0.0
        %671 = vmatpush1.msra.mxu0 0.0
        %672 = vmatprep.subr.mxu0 0.0
        %673 = vmatpush1.msra.mxu0 0.0
        %674 = vmatprep.subr.mxu0 0.0
        %675 = vmatpush1.msra.mxu0 0.0
        %676 = vmatprep.subr.mxu0 0.0
        %677 = vmatpush1.msra.mxu0 0.0
        %678 = vmatprep.subr.mxu0 0.0
        %679 = vmatpush1.msra.mxu0 0.0
        %680 = vmatprep.subr.mxu0 0.0
        %681 = vmatpush1.msra.mxu0 0.0
        %682 = vmatprep.subr.mxu0 0.0
        %683 = vmatpush1.msra.mxu0 0.0
        %684 = vmatprep.subr.mxu0 0.0
        %685 = vmatpush1.msra.mxu0 0.0
        %686 = vmatprep.subr.mxu0 0.0
        %687 = vmatpush1.msra.mxu0 0.0
        %688 = vmatprep.subr.mxu0 0.0
        %689 = vmatpush1.msra.mxu0 0.0
        %690 = vmatprep.subr.mxu0 0.0
        %691 = vmatpush1.msra.mxu0 0.0
        %692 = vmatprep.subr.mxu0 0.0
        %693 = vmatpush1.msra.mxu0 0.0
        %694 = vmatprep.subr.mxu0 0.0
        %695 = vmatpush1.msra.mxu0 0.0
        %696 = vmatprep.subr.mxu0 0.0
        %697 = vmatpush1.msra.mxu0 0.0
        %698 = vmatprep.subr.mxu0 0.0
        %699 = vmatpush1.msra.mxu0 0.0
        %700 = vmatprep.subr.mxu0 0.0
        %701 = vmatpush1.msra.mxu0 0.0
        %702 = vmatprep.subr.mxu0 0.0
        %703 = vmatpush1.msra.mxu0 0.0
        %704 = vmatprep.subr.mxu0 0.0
        %705 = vmatpush1.msra.mxu0 0.0
        %706 = vmatprep.mubr.f32.mxu0 0.0
        %707 = vmatmul.mubr.f32.gmra.mrb[0].mxu0 %v619
        %v708 = vpop.f32.mrb[0].mxu0
        %v709 = vadd.f32 0.0, %v708
        %v710 = vpop.f32.mrb[0].mxu0
        %711 = vmatprep.mubr.f32.mxu0 0.0
        %712 = vmatmul.mubr.f32.gmra.mrb[0].mxu0 %v622
        %v713 = vpop.f32.mrb[0].mxu0
        %v714 = vadd.f32 0.0, %v713
        %v715 = vpop.f32.mrb[0].mxu0
        %716 = vmatprep.mubr.f32.mxu0 0.0
        %717 = vmatmul.mubr.f32.gmra.mrb[0].mxu0 %v625
        %v718 = vpop.f32.mrb[0].mxu0
        %v719 = vadd.f32 0.0, %v718
        %v720 = vpop.f32.mrb[0].mxu0
        %721 = vmatprep.mubr.f32.mxu0 0.0
        %722 = vmatmul.mubr.f32.gmra.mrb[0].mxu0 %v628
        %v723 = vpop.f32.mrb[0].mxu0
        %v724 = vadd.f32 0.0, %v723
        %v725 = vpop.f32.mrb[0].mxu0
        %726 = vmatprep.mubr.f32.mxu0 0.0
        %727 = vmatmul.mubr.f32.gmra.mrb[0].mxu0 %v631
        %v728 = vpop.f32.mrb[0].mxu0
        %v729 = vadd.f32 0.0, %v728
        %v730 = vpop.f32.mrb[0].mxu0
        %731 = vmatprep.mubr.f32.mxu0 0.0
        %732 = vmatmul.mubr.f32.gmra.mrb[0].mxu0 %v634
        %v733 = vpop.f32.mrb[0].mxu0
        %v734 = vadd.f32 0.0, %v733
        %v735 = vpop.f32.mrb[0].mxu0
        %736 = vmatprep.mubr.f32.mxu0 0.0
        %737 = vmatmul.mubr.f32.gmra.mrb[0].mxu0 %v637
        %v738 = vpop.f32.mrb[0].mxu0
        %v739 = vadd.f32 0.0, %v738
        %v740 = vpop.f32.mrb[0].mxu0
        %741 = vmatprep.mubr.f32.mxu0 0.0
        %742 = vmatmul.mubr.f32.gmra.mrb[0].mxu0 %v640
        %v743 = vpop.f32.mrb[0].mxu0
        %v744 = vadd.f32 0.0, %v743
        %v745 = vpop.f32.mrb[0].mxu0
        %746 = vdwg.mxu0
        %v747 = vld [vmem:[#allocation2] sm:$0xff]
        %v748 = vld [vmem:[#allocation2 + $0x8] sm:$0xff]
        %v749 = vld [vmem:[#allocation2 + $0x10] sm:$0xff]
        %v750 = vld [vmem:[#allocation2 + $0x18] sm:$0xff]
        %v751 = vld [vmem:[#allocation2 + $0x20] sm:$0xff]
        %v752 = vld [vmem:[#allocation2 + $0x28] sm:$0xff]
        %v753 = vld [vmem:[#allocation2 + $0x30] sm:$0xff]
        %v754 = vld [vmem:[#allocation2 + $0x38] sm:$0xff]
        %v755 = vadd.f32 %v747, %v709
        %v756 = vadd.f32 %v748, %v714
        %v757 = vadd.f32 %v749, %v719
        %v758 = vadd.f32 %v750, %v724
        %v759 = vadd.f32 %v751, %v729
        %v760 = vadd.f32 %v752, %v734
        %v761 = vadd.f32 %v753, %v739
        %v762 = vadd.f32 %v754, %v744
        %763 = vst [vmem:[#allocation2] sm:$0xff] %v755
        %764 = vst [vmem:[#allocation2 + $0x8] sm:$0xff] %v756
        %765 = vst [vmem:[#allocation2 + $0x10] sm:$0xff] %v757
        %766 = vst [vmem:[#allocation2 + $0x18] sm:$0xff] %v758
        %767 = vst [vmem:[#allocation2 + $0x20] sm:$0xff] %v759
        %768 = vst [vmem:[#allocation2 + $0x28] sm:$0xff] %v760
        %769 = vst [vmem:[#allocation2 + $0x30] sm:$0xff] %v761
        %770 = vst [vmem:[#allocation2 + $0x38] sm:$0xff] %v762
        %v771 = vld [vmem:[%s600 + $0x1] sm:$0xff]
        %v772 = vld [vmem:[%s600 + $0x11] sm:$0xff]
        %v773 = vld [vmem:[%s600 + $0x21] sm:$0xff]
        %v774 = vld [vmem:[%s600 + $0x31] sm:$0xff]
        %v775 = vld [vmem:[%s600 + $0x41] sm:$0xff]
        %v776 = vld [vmem:[%s600 + $0x51] sm:$0xff]
        %v777 = vld [vmem:[%s600 + $0x61] sm:$0xff]
        %v778 = vld [vmem:[%s600 + $0x71] sm:$0xff]
        %s779 = scalar_lea.vmem %s1, 192
        %v780 = vld [vmem:[%s779] sm:$0xff]
        %v781 = vld [vmem:[%s779 + $0x8] sm:$0xff]
        %v782 = vld [vmem:[%s779 + $0x10] sm:$0xff]
        %v783 = vld [vmem:[%s779 + $0x18] sm:$0xff]
        %v784 = vld [vmem:[%s779 + $0x20] sm:$0xff]
        %v785 = vld [vmem:[%s779 + $0x28] sm:$0xff]
        %v786 = vld [vmem:[%s779 + $0x30] sm:$0xff]
        %v787 = vld [vmem:[%s779 + $0x38] sm:$0xff]
        %v789 = vsel %vm292, %v771, 0
        %v792 = vsel %vm292, %v772, 0
        %v795 = vsel %vm292, %v773, 0
        %v798 = vsel %vm292, %v774, 0
        %v801 = vsel %vm292, %v775, 0
        %v804 = vsel %vm292, %v776, 0
        %v807 = vsel %vm292, %v777, 0
        %v810 = vsel %vm292, %v778, 0
        %812 = vmatprep.subr.mxu0 0.0
        %813 = vmatpush1.msra.mxu0 %v780
        %814 = vmatprep.subr.mxu0 0.0
        %815 = vmatpush1.msra.mxu0 %v781
        %816 = vmatprep.subr.mxu0 0.0
        %817 = vmatpush1.msra.mxu0 %v782
        %818 = vmatprep.subr.mxu0 0.0
        %819 = vmatpush1.msra.mxu0 %v783
        %820 = vmatprep.subr.mxu0 0.0
        %821 = vmatpush1.msra.mxu0 %v784
        %822 = vmatprep.subr.mxu0 0.0
        %823 = vmatpush1.msra.mxu0 %v785
        %824 = vmatprep.subr.mxu0 0.0
        %825 = vmatpush1.msra.mxu0 %v786
        %826 = vmatprep.subr.mxu0 0.0
        %827 = vmatpush1.msra.mxu0 %v787
        %828 = vmatprep.subr.mxu0 0.0
        %829 = vmatpush1.msra.mxu0 0.0
        %830 = vmatprep.subr.mxu0 0.0
        %831 = vmatpush1.msra.mxu0 0.0
        %832 = vmatprep.subr.mxu0 0.0
        %833 = vmatpush1.msra.mxu0 0.0
        %834 = vmatprep.subr.mxu0 0.0
        %835 = vmatpush1.msra.mxu0 0.0
        %836 = vmatprep.subr.mxu0 0.0
        %837 = vmatpush1.msra.mxu0 0.0
        %838 = vmatprep.subr.mxu0 0.0
        %839 = vmatpush1.msra.mxu0 0.0
        %840 = vmatprep.subr.mxu0 0.0
        %841 = vmatpush1.msra.mxu0 0.0
        %842 = vmatprep.subr.mxu0 0.0
        %843 = vmatpush1.msra.mxu0 0.0
        %844 = vmatprep.subr.mxu0 0.0
        %845 = vmatpush1.msra.mxu0 0.0
        %846 = vmatprep.subr.mxu0 0.0
        %847 = vmatpush1.msra.mxu0 0.0
        %848 = vmatprep.subr.mxu0 0.0
        %849 = vmatpush1.msra.mxu0 0.0
        %850 = vmatprep.subr.mxu0 0.0
        %851 = vmatpush1.msra.mxu0 0.0
        %852 = vmatprep.subr.mxu0 0.0
        %853 = vmatpush1.msra.mxu0 0.0
        %854 = vmatprep.subr.mxu0 0.0
        %855 = vmatpush1.msra.mxu0 0.0
        %856 = vmatprep.subr.mxu0 0.0
        %857 = vmatpush1.msra.mxu0 0.0
        %858 = vmatprep.subr.mxu0 0.0
        %859 = vmatpush1.msra.mxu0 0.0
        %860 = vmatprep.subr.mxu0 0.0
        %861 = vmatpush1.msra.mxu0 0.0
        %862 = vmatprep.subr.mxu0 0.0
        %863 = vmatpush1.msra.mxu0 0.0
        %864 = vmatprep.subr.mxu0 0.0
        %865 = vmatpush1.msra.mxu0 0.0
        %866 = vmatprep.subr.mxu0 0.0
        %867 = vmatpush1.msra.mxu0 0.0
        %868 = vmatprep.subr.mxu0 0.0
        %869 = vmatpush1.msra.mxu0 0.0
        %870 = vmatprep.subr.mxu0 0.0
        %871 = vmatpush1.msra.mxu0 0.0
        %872 = vmatprep.subr.mxu0 0.0
        %873 = vmatpush1.msra.mxu0 0.0
        %874 = vmatprep.subr.mxu0 0.0
        %875 = vmatpush1.msra.mxu0 0.0
        %876 = vmatprep.mubr.f32.mxu0 0.0
        %877 = vmatmul.mubr.f32.gmra.mrb[0].mxu0 %v789
        %v878 = vpop.f32.mrb[0].mxu0
        %v879 = vadd.f32 0.0, %v878
        %v880 = vpop.f32.mrb[0].mxu0
        %881 = vmatprep.mubr.f32.mxu0 0.0
        %882 = vmatmul.mubr.f32.gmra.mrb[0].mxu0 %v792
        %v883 = vpop.f32.mrb[0].mxu0
        %v884 = vadd.f32 0.0, %v883
        %v885 = vpop.f32.mrb[0].mxu0
        %886 = vmatprep.mubr.f32.mxu0 0.0
        %887 = vmatmul.mubr.f32.gmra.mrb[0].mxu0 %v795
        %v888 = vpop.f32.mrb[0].mxu0
        %v889 = vadd.f32 0.0, %v888
        %v890 = vpop.f32.mrb[0].mxu0
        %891 = vmatprep.mubr.f32.mxu0 0.0
        %892 = vmatmul.mubr.f32.gmra.mrb[0].mxu0 %v798
        %v893 = vpop.f32.mrb[0].mxu0
        %v894 = vadd.f32 0.0, %v893
        %v895 = vpop.f32.mrb[0].mxu0
        %896 = vmatprep.mubr.f32.mxu0 0.0
        %897 = vmatmul.mubr.f32.gmra.mrb[0].mxu0 %v801
        %v898 = vpop.f32.mrb[0].mxu0
        %v899 = vadd.f32 0.0, %v898
        %v900 = vpop.f32.mrb[0].mxu0
        %901 = vmatprep.mubr.f32.mxu0 0.0
        %902 = vmatmul.mubr.f32.gmra.mrb[0].mxu0 %v804
        %v903 = vpop.f32.mrb[0].mxu0
        %v904 = vadd.f32 0.0, %v903
        %v905 = vpop.f32.mrb[0].mxu0
        %906 = vmatprep.mubr.f32.mxu0 0.0
        %907 = vmatmul.mubr.f32.gmra.mrb[0].mxu0 %v807
        %v908 = vpop.f32.mrb[0].mxu0
        %v909 = vadd.f32 0.0, %v908
        %v910 = vpop.f32.mrb[0].mxu0
        %911 = vmatprep.mubr.f32.mxu0 0.0
        %912 = vmatmul.mubr.f32.gmra.mrb[0].mxu0 %v810
        %v913 = vpop.f32.mrb[0].mxu0
        %v914 = vadd.f32 0.0, %v913
        %v915 = vpop.f32.mrb[0].mxu0
        %916 = vdwg.mxu0
        %v917 = vld [vmem:[#allocation2] sm:$0xff]
        %v918 = vld [vmem:[#allocation2 + $0x8] sm:$0xff]
        %v919 = vld [vmem:[#allocation2 + $0x10] sm:$0xff]
        %v920 = vld [vmem:[#allocation2 + $0x18] sm:$0xff]
        %v921 = vld [vmem:[#allocation2 + $0x20] sm:$0xff]
        %v922 = vld [vmem:[#allocation2 + $0x28] sm:$0xff]
        %v923 = vld [vmem:[#allocation2 + $0x30] sm:$0xff]
        %v924 = vld [vmem:[#allocation2 + $0x38] sm:$0xff]
        %v925 = vadd.f32 %v917, %v879
        %v926 = vadd.f32 %v918, %v884
        %v927 = vadd.f32 %v919, %v889
        %v928 = vadd.f32 %v920, %v894
        %v929 = vadd.f32 %v921, %v899
        %v930 = vadd.f32 %v922, %v904
        %v931 = vadd.f32 %v923, %v909
        %v932 = vadd.f32 %v924, %v914
        %933 = vst [vmem:[#allocation2] sm:$0xff] %v925
        %934 = vst [vmem:[#allocation2 + $0x8] sm:$0xff] %v926
        %935 = vst [vmem:[#allocation2 + $0x10] sm:$0xff] %v927
        %936 = vst [vmem:[#allocation2 + $0x18] sm:$0xff] %v928
        %937 = vst [vmem:[#allocation2 + $0x20] sm:$0xff] %v929
        %938 = vst [vmem:[#allocation2 + $0x28] sm:$0xff] %v930
        %939 = vst [vmem:[#allocation2 + $0x30] sm:$0xff] %v931
        %940 = vst [vmem:[#allocation2 + $0x38] sm:$0xff] %v932
        %v941 = vld [vmem:[#allocation2] sm:$0xff]
        %v942 = vld [vmem:[#allocation2 + $0x8] sm:$0xff]
        %v943 = vld [vmem:[#allocation2 + $0x10] sm:$0xff]
        %v944 = vld [vmem:[#allocation2 + $0x18] sm:$0xff]
        %v945 = vld [vmem:[#allocation2 + $0x20] sm:$0xff]
        %v946 = vld [vmem:[#allocation2 + $0x28] sm:$0xff]
        %v947 = vld [vmem:[#allocation2 + $0x30] sm:$0xff]
        %v948 = vld [vmem:[#allocation2 + $0x38] sm:$0xff]
        %v949 = vld [vmem:[%s2] sm:$0x1]
        %v951 = vlaneseq
        %v952 = vshrl.u32 %v951, 7
        %v953 = vsub.s32 0, %v952
        %v954 = vrot.slane %v949, %v953
        %v956 = vadd.f32 %v941, %v954
        %v957 = vadd.f32 %v942, %v954
        %v958 = vadd.f32 %v943, %v954
        %v959 = vadd.f32 %v944, %v954
        %v960 = vadd.f32 %v945, %v954
        %v961 = vadd.f32 %v946, %v954
        %v962 = vadd.f32 %v947, %v954
        %v963 = vadd.f32 %v948, %v954
        %v964 = vmax.f32 %v956, 0.0
        %v965 = vmax.f32 %v957, 0.0
        %v966 = vmax.f32 %v958, 0.0
        %v967 = vmax.f32 %v959, 0.0
        %v968 = vmax.f32 %v960, 0.0
        %v969 = vmax.f32 %v961, 0.0
        %v970 = vmax.f32 %v962, 0.0
        %v971 = vmax.f32 %v963, 0.0
        %972 = vst [vmem:[#allocation2] sm:$0xff] %v964
        %973 = vst [vmem:[#allocation2 + $0x8] sm:$0xff] %v965
        %974 = vst [vmem:[#allocation2 + $0x10] sm:$0xff] %v966
        %975 = vst [vmem:[#allocation2 + $0x18] sm:$0xff] %v967
        %976 = vst [vmem:[#allocation2 + $0x20] sm:$0xff] %v968
        %977 = vst [vmem:[#allocation2 + $0x28] sm:$0xff] %v969
        %978 = vst [vmem:[#allocation2 + $0x30] sm:$0xff] %v970
        %979 = vst [vmem:[#allocation2 + $0x38] sm:$0xff] %v971
        %v980 = vld [vmem:[#allocation2] sm:$0x1]
        %v981 = vld [vmem:[#allocation2 + $0x1] sm:$0x1]
        %v982 = vld [vmem:[#allocation2 + $0x2] sm:$0x1]
        %v983 = vld [vmem:[#allocation2 + $0x3] sm:$0x1]
        %v984 = vld [vmem:[#allocation2 + $0x8] sm:$0x1]
        %v985 = vld [vmem:[#allocation2 + $0x9] sm:$0x1]
        %v986 = vld [vmem:[#allocation2 + $0xa] sm:$0x1]
        %v987 = vld [vmem:[#allocation2 + $0xb] sm:$0x1]
        %v988 = vld [vmem:[#allocation2 + $0x10] sm:$0x1]
        %v989 = vld [vmem:[#allocation2 + $0x11] sm:$0x1]
        %v990 = vld [vmem:[#allocation2 + $0x12] sm:$0x1]
        %v991 = vld [vmem:[#allocation2 + $0x13] sm:$0x1]
        %v992 = vld [vmem:[#allocation2 + $0x18] sm:$0x1]
        %v993 = vld [vmem:[#allocation2 + $0x19] sm:$0x1]
        %v994 = vld [vmem:[#allocation2 + $0x1a] sm:$0x1]
        %v995 = vld [vmem:[#allocation2 + $0x1b] sm:$0x1]
        %v996 = vld [vmem:[#allocation2 + $0x4] sm:$0x1]
        %v997 = vld [vmem:[#allocation2 + $0x5] sm:$0x1]
        %v998 = vld [vmem:[#allocation2 + $0xc] sm:$0x1]
        %v999 = vld [vmem:[#allocation2 + $0xd] sm:$0x1]
        %v1000 = vld [vmem:[#allocation2 + $0x14] sm:$0x1]
        %v1001 = vld [vmem:[#allocation2 + $0x15] sm:$0x1]
        %v1002 = vld [vmem:[#allocation2 + $0x1c] sm:$0x1]
        %v1003 = vld [vmem:[#allocation2 + $0x1d] sm:$0x1]
        %v1004 = vld [vmem:[#allocation2 + $0x6] sm:$0x1]
        %v1005 = vld [vmem:[#allocation2 + $0x7] sm:$0x1]
        %v1006 = vld [vmem:[#allocation2 + $0xe] sm:$0x1]
        %v1007 = vld [vmem:[#allocation2 + $0xf] sm:$0x1]
        %v1008 = vld [vmem:[#allocation2 + $0x16] sm:$0x1]
        %v1009 = vld [vmem:[#allocation2 + $0x17] sm:$0x1]
        %v1010 = vld [vmem:[#allocation2 + $0x1e] sm:$0x1]
        %v1011 = vld [vmem:[#allocation2 + $0x1f] sm:$0x1]
        %v1012 = vld [vmem:[#allocation2 + $0x20] sm:$0x1]
        %v1013 = vld [vmem:[#allocation2 + $0x21] sm:$0x1]
        %v1014 = vld [vmem:[#allocation2 + $0x22] sm:$0x1]
        %v1015 = vld [vmem:[#allocation2 + $0x23] sm:$0x1]
        %v1016 = vld [vmem:[#allocation2 + $0x28] sm:$0x1]
        %v1017 = vld [vmem:[#allocation2 + $0x29] sm:$0x1]
        %v1018 = vld [vmem:[#allocation2 + $0x2a] sm:$0x1]
        %v1019 = vld [vmem:[#allocation2 + $0x2b] sm:$0x1]
        %v1020 = vld [vmem:[#allocation2 + $0x24] sm:$0x1]
        %v1021 = vld [vmem:[#allocation2 + $0x25] sm:$0x1]
        %v1022 = vld [vmem:[#allocation2 + $0x2c] sm:$0x1]
        %v1023 = vld [vmem:[#allocation2 + $0x2d] sm:$0x1]
        %v1024 = vld [vmem:[#allocation2 + $0x26] sm:$0x1]
        %v1025 = vld [vmem:[#allocation2 + $0x27] sm:$0x1]
        %v1026 = vld [vmem:[#allocation2 + $0x2e] sm:$0x1]
        %v1027 = vld [vmem:[#allocation2 + $0x2f] sm:$0x1]
        %v1028 = vld [vmem:[#allocation2 + $0x30] sm:$0x1]
        %v1029 = vld [vmem:[#allocation2 + $0x31] sm:$0x1]
        %v1030 = vld [vmem:[#allocation2 + $0x32] sm:$0x1]
        %v1031 = vld [vmem:[#allocation2 + $0x33] sm:$0x1]
        %v1032 = vld [vmem:[#allocation2 + $0x38] sm:$0x1]
        %v1033 = vld [vmem:[#allocation2 + $0x39] sm:$0x1]
        %v1034 = vld [vmem:[#allocation2 + $0x3a] sm:$0x1]
        %v1035 = vld [vmem:[#allocation2 + $0x3b] sm:$0x1]
        %v1036 = vld [vmem:[#allocation2 + $0x34] sm:$0x1]
        %v1037 = vld [vmem:[#allocation2 + $0x35] sm:$0x1]
        %v1038 = vld [vmem:[#allocation2 + $0x3c] sm:$0x1]
        %v1039 = vld [vmem:[#allocation2 + $0x3d] sm:$0x1]
        %v1040 = vld [vmem:[#allocation2 + $0x36] sm:$0x1]
        %v1041 = vld [vmem:[#allocation2 + $0x37] sm:$0x1]
        %v1042 = vld [vmem:[#allocation2 + $0x3e] sm:$0x1]
        %v1043 = vld [vmem:[#allocation2 + $0x3f] sm:$0x1]
        %v1060 = vrot.slane %v982, 7
        %v1061 = vrot.slane %v983, 7
        %v1062 = vrot.slane %v996, 7
        %v1063 = vrot.slane %v997, 7
        %v1064 = vrot.slane %v986, 7
        %v1065 = vrot.slane %v987, 7
        %v1066 = vrot.slane %v998, 7
        %v1067 = vrot.slane %v999, 7
        %v1068 = vrot.slane %v990, 7
        %v1069 = vrot.slane %v991, 7
        %v1070 = vrot.slane %v1000, 7
        %v1071 = vrot.slane %v1001, 7
        %v1072 = vrot.slane %v994, 7
        %v1073 = vrot.slane %v995, 7
        %v1074 = vrot.slane %v1002, 7
        %v1075 = vrot.slane %v1003, 7
        %v1100 = vrot.slane %v996, 6
        %v1101 = vrot.slane %v997, 6
        %v1102 = vrot.slane %v1004, 6
        %v1103 = vrot.slane %v1005, 6
        %v1104 = vrot.slane %v998, 6
        %v1105 = vrot.slane %v999, 6
        %v1106 = vrot.slane %v1006, 6
        %v1107 = vrot.slane %v1007, 6
        %v1108 = vrot.slane %v1000, 6
        %v1109 = vrot.slane %v1001, 6
        %v1110 = vrot.slane %v1008, 6
        %v1111 = vrot.slane %v1009, 6
        %v1112 = vrot.slane %v1002, 6
        %v1113 = vrot.slane %v1003, 6
        %v1114 = vrot.slane %v1010, 6
        %v1115 = vrot.slane %v1011, 6
        %v1144 = vrot.slane %v988, 5
        %v1145 = vrot.slane %v989, 5
        %v1146 = vrot.slane %v990, 5
        %v1147 = vrot.slane %v991, 5
        %v1148 = vrot.slane %v992, 5
        %v1149 = vrot.slane %v993, 5
        %v1150 = vrot.slane %v994, 5
        %v1151 = vrot.slane %v995, 5
        %v1152 = vrot.slane %v1012, 5
        %v1153 = vrot.slane %v1013, 5
        %v1154 = vrot.slane %v1014, 5
        %v1155 = vrot.slane %v1015, 5
        %v1156 = vrot.slane %v1016, 5
        %v1157 = vrot.slane %v1017, 5
        %v1158 = vrot.slane %v1018, 5
        %v1159 = vrot.slane %v1019, 5
        %v1180 = vrot.slane %v990, 4
        %v1181 = vrot.slane %v991, 4
        %v1182 = vrot.slane %v1000, 4
        %v1183 = vrot.slane %v1001, 4
        %v1184 = vrot.slane %v994, 4
        %v1185 = vrot.slane %v995, 4
        %v1186 = vrot.slane %v1002, 4
        %v1187 = vrot.slane %v1003, 4
        %v1188 = vrot.slane %v1014, 4
        %v1189 = vrot.slane %v1015, 4
        %v1190 = vrot.slane %v1020, 4
        %v1191 = vrot.slane %v1021, 4
        %v1192 = vrot.slane %v1018, 4
        %v1193 = vrot.slane %v1019, 4
        %v1194 = vrot.slane %v1022, 4
        %v1195 = vrot.slane %v1023, 4
        %v1216 = vrot.slane %v1000, 3
        %v1217 = vrot.slane %v1001, 3
        %v1218 = vrot.slane %v1008, 3
        %v1219 = vrot.slane %v1009, 3
        %v1220 = vrot.slane %v1002, 3
        %v1221 = vrot.slane %v1003, 3
        %v1222 = vrot.slane %v1010, 3
        %v1223 = vrot.slane %v1011, 3
        %v1224 = vrot.slane %v1020, 3
        %v1225 = vrot.slane %v1021, 3
        %v1226 = vrot.slane %v1024, 3
        %v1227 = vrot.slane %v1025, 3
        %v1228 = vrot.slane %v1022, 3
        %v1229 = vrot.slane %v1023, 3
        %v1230 = vrot.slane %v1026, 3
        %v1231 = vrot.slane %v1027, 3
        %v1256 = vrot.slane %v1012, 2
        %v1257 = vrot.slane %v1013, 2
        %v1258 = vrot.slane %v1014, 2
        %v1259 = vrot.slane %v1015, 2
        %v1260 = vrot.slane %v1016, 2
        %v1261 = vrot.slane %v1017, 2
        %v1262 = vrot.slane %v1018, 2
        %v1263 = vrot.slane %v1019, 2
        %v1264 = vrot.slane %v1028, 2
        %v1265 = vrot.slane %v1029, 2
        %v1266 = vrot.slane %v1030, 2
        %v1267 = vrot.slane %v1031, 2
        %v1268 = vrot.slane %v1032, 2
        %v1269 = vrot.slane %v1033, 2
        %v1270 = vrot.slane %v1034, 2
        %v1271 = vrot.slane %v1035, 2
        %v1292 = vrot.slane %v1014, 1
        %v1293 = vrot.slane %v1015, 1
        %v1294 = vrot.slane %v1020, 1
        %v1295 = vrot.slane %v1021, 1
        %v1296 = vrot.slane %v1018, 1
        %v1297 = vrot.slane %v1019, 1
        %v1298 = vrot.slane %v1022, 1
        %v1299 = vrot.slane %v1023, 1
        %v1300 = vrot.slane %v1030, 1
        %v1301 = vrot.slane %v1031, 1
        %v1302 = vrot.slane %v1036, 1
        %v1303 = vrot.slane %v1037, 1
        %v1304 = vrot.slane %v1034, 1
        %v1305 = vrot.slane %v1035, 1
        %v1306 = vrot.slane %v1038, 1
        %v1307 = vrot.slane %v1039, 1
        %vm1324 = vcmask 1040384
        %v1325 = vsel %vm1324, %v980, %v1060
        %v1326 = vsel %vm1324, %v981, %v1061
        %v1327 = vsel %vm1324, %v982, %v1062
        %v1328 = vsel %vm1324, %v983, %v1063
        %v1329 = vsel %vm1324, %v984, %v1064
        %v1330 = vsel %vm1324, %v985, %v1065
        %v1331 = vsel %vm1324, %v986, %v1066
        %v1332 = vsel %vm1324, %v987, %v1067
        %v1333 = vsel %vm1324, %v988, %v1068
        %v1334 = vsel %vm1324, %v989, %v1069
        %v1335 = vsel %vm1324, %v990, %v1070
        %v1336 = vsel %vm1324, %v991, %v1071
        %v1337 = vsel %vm1324, %v992, %v1072
        %v1338 = vsel %vm1324, %v993, %v1073
        %v1339 = vsel %vm1324, %v994, %v1074
        %v1340 = vsel %vm1324, %v995, %v1075
        %vm1341 = vcmask 1041408
        %v1342 = vsel %vm1341, %v1325, %v1100
        %v1343 = vsel %vm1341, %v1326, %v1101
        %v1344 = vsel %vm1341, %v1327, %v1102
        %v1345 = vsel %vm1341, %v1328, %v1103
        %v1346 = vsel %vm1341, %v1329, %v1104
        %v1347 = vsel %vm1341, %v1330, %v1105
        %v1348 = vsel %vm1341, %v1331, %v1106
        %v1349 = vsel %vm1341, %v1332, %v1107
        %v1350 = vsel %vm1341, %v1333, %v1108
        %v1351 = vsel %vm1341, %v1334, %v1109
        %v1352 = vsel %vm1341, %v1335, %v1110
        %v1353 = vsel %vm1341, %v1336, %v1111
        %v1354 = vsel %vm1341, %v1337, %v1112
        %v1355 = vsel %vm1341, %v1338, %v1113
        %v1356 = vsel %vm1341, %v1339, %v1114
        %v1357 = vsel %vm1341, %v1340, %v1115
        %vm1358 = vcmask 1042432
        %v1359 = vsel %vm1358, %v1342, %v1144
        %v1360 = vsel %vm1358, %v1343, %v1145
        %v1361 = vsel %vm1358, %v1344, %v1146
        %v1362 = vsel %vm1358, %v1345, %v1147
        %v1363 = vsel %vm1358, %v1346, %v1148
        %v1364 = vsel %vm1358, %v1347, %v1149
        %v1365 = vsel %vm1358, %v1348, %v1150
        %v1366 = vsel %vm1358, %v1349, %v1151
        %v1367 = vsel %vm1358, %v1350, %v1152
        %v1368 = vsel %vm1358, %v1351, %v1153
        %v1369 = vsel %vm1358, %v1352, %v1154
        %v1370 = vsel %vm1358, %v1353, %v1155
        %v1371 = vsel %vm1358, %v1354, %v1156
        %v1372 = vsel %vm1358, %v1355, %v1157
        %v1373 = vsel %vm1358, %v1356, %v1158
        %v1374 = vsel %vm1358, %v1357, %v1159
        %vm1375 = vcmask 1043456
        %v1376 = vsel %vm1375, %v1359, %v1180
        %v1377 = vsel %vm1375, %v1360, %v1181
        %v1378 = vsel %vm1375, %v1361, %v1182
        %v1379 = vsel %vm1375, %v1362, %v1183
        %v1380 = vsel %vm1375, %v1363, %v1184
        %v1381 = vsel %vm1375, %v1364, %v1185
        %v1382 = vsel %vm1375, %v1365, %v1186
        %v1383 = vsel %vm1375, %v1366, %v1187
        %v1384 = vsel %vm1375, %v1367, %v1188
        %v1385 = vsel %vm1375, %v1368, %v1189
        %v1386 = vsel %vm1375, %v1369, %v1190
        %v1387 = vsel %vm1375, %v1370, %v1191
        %v1388 = vsel %vm1375, %v1371, %v1192
        %v1389 = vsel %vm1375, %v1372, %v1193
        %v1390 = vsel %vm1375, %v1373, %v1194
        %v1391 = vsel %vm1375, %v1374, %v1195
        %vm1392 = vcmask 1044480
        %v1393 = vsel %vm1392, %v1376, %v1216
        %v1394 = vsel %vm1392, %v1377, %v1217
        %v1395 = vsel %vm1392, %v1378, %v1218
        %v1396 = vsel %vm1392, %v1379, %v1219
        %v1397 = vsel %vm1392, %v1380, %v1220
        %v1398 = vsel %vm1392, %v1381, %v1221
        %v1399 = vsel %vm1392, %v1382, %v1222
        %v1400 = vsel %vm1392, %v1383, %v1223
        %v1401 = vsel %vm1392, %v1384, %v1224
        %v1402 = vsel %vm1392, %v1385, %v1225
        %v1403 = vsel %vm1392, %v1386, %v1226
        %v1404 = vsel %vm1392, %v1387, %v1227
        %v1405 = vsel %vm1392, %v1388, %v1228
        %v1406 = vsel %vm1392, %v1389, %v1229
        %v1407 = vsel %vm1392, %v1390, %v1230
        %v1408 = vsel %vm1392, %v1391, %v1231
        %vm1409 = vcmask 1045504
        %v1410 = vsel %vm1409, %v1393, %v1256
        %v1411 = vsel %vm1409, %v1394, %v1257
        %v1412 = vsel %vm1409, %v1395, %v1258
        %v1413 = vsel %vm1409, %v1396, %v1259
        %v1414 = vsel %vm1409, %v1397, %v1260
        %v1415 = vsel %vm1409, %v1398, %v1261
        %v1416 = vsel %vm1409, %v1399, %v1262
        %v1417 = vsel %vm1409, %v1400, %v1263
        %v1418 = vsel %vm1409, %v1401, %v1264
        %v1419 = vsel %vm1409, %v1402, %v1265
        %v1420 = vsel %vm1409, %v1403, %v1266
        %v1421 = vsel %vm1409, %v1404, %v1267
        %v1422 = vsel %vm1409, %v1405, %v1268
        %v1423 = vsel %vm1409, %v1406, %v1269
        %v1424 = vsel %vm1409, %v1407, %v1270
        %v1425 = vsel %vm1409, %v1408, %v1271
        %vm1426 = vcmask 1046528
        %v1427 = vsel %vm1426, %v1410, %v1292
        %v1428 = vsel %vm1426, %v1411, %v1293
        %v1429 = vsel %vm1426, %v1412, %v1294
        %v1430 = vsel %vm1426, %v1413, %v1295
        %v1431 = vsel %vm1426, %v1414, %v1296
        %v1432 = vsel %vm1426, %v1415, %v1297
        %v1433 = vsel %vm1426, %v1416, %v1298
        %v1434 = vsel %vm1426, %v1417, %v1299
        %v1435 = vsel %vm1426, %v1418, %v1300
        %v1436 = vsel %vm1426, %v1419, %v1301
        %v1437 = vsel %vm1426, %v1420, %v1302
        %v1438 = vsel %vm1426, %v1421, %v1303
        %v1439 = vsel %vm1426, %v1422, %v1304
        %v1440 = vsel %vm1426, %v1423, %v1305
        %v1441 = vsel %vm1426, %v1424, %v1306
        %v1442 = vsel %vm1426, %v1425, %v1307
        %v1443 = vld [vmem:[%s3] sm:$0xff]
        %v1444 = vld [vmem:[%s3 + $0x8] sm:$0xff]
        %v1445 = vld [vmem:[%s3 + $0x10] sm:$0xff]
        %v1446 = vld [vmem:[%s3 + $0x18] sm:$0xff]
        %v1447 = vld [vmem:[%s3 + $0x20] sm:$0xff]
        %v1448 = vld [vmem:[%s3 + $0x28] sm:$0xff]
        %v1449 = vld [vmem:[%s3 + $0x30] sm:$0xff]
        %v1450 = vld [vmem:[%s3 + $0x38] sm:$0xff]
        %v1451 = vld [vmem:[%s3 + $0x40] sm:$0xff]
        %v1452 = vld [vmem:[%s3 + $0x48] sm:$0xff]
        %v1453 = vld [vmem:[%s3 + $0x50] sm:$0xff]
        %v1454 = vld [vmem:[%s3 + $0x58] sm:$0xff]
        %v1455 = vld [vmem:[%s3 + $0x60] sm:$0xff]
        %v1456 = vld [vmem:[%s3 + $0x68] sm:$0xff]
        %v1457 = vld [vmem:[%s3 + $0x70] sm:$0xff]
        %v1458 = vld [vmem:[%s3 + $0x78] sm:$0xff]
        %v1459 = vld [vmem:[%s3 + $0x80] sm:$0xff]
        %v1460 = vld [vmem:[%s3 + $0x88] sm:$0xff]
        %v1461 = vld [vmem:[%s3 + $0x90] sm:$0xff]
        %v1462 = vld [vmem:[%s3 + $0x98] sm:$0xff]
        %v1463 = vld [vmem:[%s3 + $0xa0] sm:$0xff]
        %v1464 = vld [vmem:[%s3 + $0xa8] sm:$0xff]
        %v1465 = vld [vmem:[%s3 + $0xb0] sm:$0xff]
        %v1466 = vld [vmem:[%s3 + $0xb8] sm:$0xff]
        %v1467 = vld [vmem:[%s3 + $0xc0] sm:$0xff]
        %v1468 = vld [vmem:[%s3 + $0xc8] sm:$0xff]
        %v1469 = vld [vmem:[%s3 + $0xd0] sm:$0xff]
        %v1470 = vld [vmem:[%s3 + $0xd8] sm:$0xff]
        %v1471 = vld [vmem:[%s3 + $0xe0] sm:$0xff]
        %v1472 = vld [vmem:[%s3 + $0xe8] sm:$0xff]
        %v1473 = vld [vmem:[%s3 + $0xf0] sm:$0xff]
        %v1474 = vld [vmem:[%s3 + $0xf8] sm:$0xff]
        %v1475 = vld [vmem:[%s3 + $0x100] sm:$0xff]
        %v1476 = vld [vmem:[%s3 + $0x108] sm:$0xff]
        %v1477 = vld [vmem:[%s3 + $0x110] sm:$0xff]
        %v1478 = vld [vmem:[%s3 + $0x118] sm:$0xff]
        %v1479 = vld [vmem:[%s3 + $0x120] sm:$0xff]
        %v1480 = vld [vmem:[%s3 + $0x128] sm:$0xff]
        %v1481 = vld [vmem:[%s3 + $0x130] sm:$0xff]
        %v1482 = vld [vmem:[%s3 + $0x138] sm:$0xff]
        %v1483 = vld [vmem:[%s3 + $0x140] sm:$0xff]
        %v1484 = vld [vmem:[%s3 + $0x148] sm:$0xff]
        %v1485 = vld [vmem:[%s3 + $0x150] sm:$0xff]
        %v1486 = vld [vmem:[%s3 + $0x158] sm:$0xff]
        %v1487 = vld [vmem:[%s3 + $0x160] sm:$0xff]
        %v1488 = vld [vmem:[%s3 + $0x168] sm:$0xff]
        %v1489 = vld [vmem:[%s3 + $0x170] sm:$0xff]
        %v1490 = vld [vmem:[%s3 + $0x178] sm:$0xff]
        %v1491 = vld [vmem:[%s3 + $0x180] sm:$0xff]
        %v1492 = vld [vmem:[%s3 + $0x188] sm:$0xff]
        %v1493 = vld [vmem:[%s3 + $0x190] sm:$0xff]
        %v1494 = vld [vmem:[%s3 + $0x198] sm:$0xff]
        %v1495 = vld [vmem:[%s3 + $0x1a0] sm:$0xff]
        %v1496 = vld [vmem:[%s3 + $0x1a8] sm:$0xff]
        %v1497 = vld [vmem:[%s3 + $0x1b0] sm:$0xff]
        %v1498 = vld [vmem:[%s3 + $0x1b8] sm:$0xff]
        %v1499 = vld [vmem:[%s3 + $0x1c0] sm:$0xff]
        %v1500 = vld [vmem:[%s3 + $0x1c8] sm:$0xff]
        %v1501 = vld [vmem:[%s3 + $0x1d0] sm:$0xff]
        %v1502 = vld [vmem:[%s3 + $0x1d8] sm:$0xff]
        %v1503 = vld [vmem:[%s3 + $0x1e0] sm:$0xff]
        %v1504 = vld [vmem:[%s3 + $0x1e8] sm:$0xff]
        %v1505 = vld [vmem:[%s3 + $0x1f0] sm:$0xff]
        %v1506 = vld [vmem:[%s3 + $0x1f8] sm:$0xff]
        %v1507 = vld [vmem:[%s3 + $0x200] sm:$0xff]
        %v1508 = vld [vmem:[%s3 + $0x208] sm:$0xff]
        %v1509 = vld [vmem:[%s3 + $0x210] sm:$0xff]
        %v1510 = vld [vmem:[%s3 + $0x218] sm:$0xff]
        %v1511 = vld [vmem:[%s3 + $0x220] sm:$0xff]
        %v1512 = vld [vmem:[%s3 + $0x228] sm:$0xff]
        %v1513 = vld [vmem:[%s3 + $0x230] sm:$0xff]
        %v1514 = vld [vmem:[%s3 + $0x238] sm:$0xff]
        %v1515 = vld [vmem:[%s3 + $0x240] sm:$0xff]
        %v1516 = vld [vmem:[%s3 + $0x248] sm:$0xff]
        %v1517 = vld [vmem:[%s3 + $0x250] sm:$0xff]
        %v1518 = vld [vmem:[%s3 + $0x258] sm:$0xff]
        %v1519 = vld [vmem:[%s3 + $0x260] sm:$0xff]
        %v1520 = vld [vmem:[%s3 + $0x268] sm:$0xff]
        %v1521 = vld [vmem:[%s3 + $0x270] sm:$0xff]
        %v1522 = vld [vmem:[%s3 + $0x278] sm:$0xff]
        %v1523 = vld [vmem:[%s3 + $0x280] sm:$0xff]
        %v1524 = vld [vmem:[%s3 + $0x288] sm:$0xff]
        %v1525 = vld [vmem:[%s3 + $0x290] sm:$0xff]
        %v1526 = vld [vmem:[%s3 + $0x298] sm:$0xff]
        %v1527 = vld [vmem:[%s3 + $0x2a0] sm:$0xff]
        %v1528 = vld [vmem:[%s3 + $0x2a8] sm:$0xff]
        %v1529 = vld [vmem:[%s3 + $0x2b0] sm:$0xff]
        %v1530 = vld [vmem:[%s3 + $0x2b8] sm:$0xff]
        %v1531 = vld [vmem:[%s3 + $0x2c0] sm:$0xff]
        %v1532 = vld [vmem:[%s3 + $0x2c8] sm:$0xff]
        %v1533 = vld [vmem:[%s3 + $0x2d0] sm:$0xff]
        %v1534 = vld [vmem:[%s3 + $0x2d8] sm:$0xff]
        %v1535 = vld [vmem:[%s3 + $0x2e0] sm:$0xff]
        %v1536 = vld [vmem:[%s3 + $0x2e8] sm:$0xff]
        %v1537 = vld [vmem:[%s3 + $0x2f0] sm:$0xff]
        %v1538 = vld [vmem:[%s3 + $0x2f8] sm:$0xff]
        %v1539 = vld [vmem:[%s3 + $0x300] sm:$0xff]
        %v1540 = vld [vmem:[%s3 + $0x308] sm:$0xff]
        %v1541 = vld [vmem:[%s3 + $0x310] sm:$0xff]
        %v1542 = vld [vmem:[%s3 + $0x318] sm:$0xff]
        %v1543 = vld [vmem:[%s3 + $0x320] sm:$0xff]
        %v1544 = vld [vmem:[%s3 + $0x328] sm:$0xff]
        %v1545 = vld [vmem:[%s3 + $0x330] sm:$0xff]
        %v1546 = vld [vmem:[%s3 + $0x338] sm:$0xff]
        %v1547 = vld [vmem:[%s3 + $0x340] sm:$0xff]
        %v1548 = vld [vmem:[%s3 + $0x348] sm:$0xff]
        %v1549 = vld [vmem:[%s3 + $0x350] sm:$0xff]
        %v1550 = vld [vmem:[%s3 + $0x358] sm:$0xff]
        %v1551 = vld [vmem:[%s3 + $0x360] sm:$0xff]
        %v1552 = vld [vmem:[%s3 + $0x368] sm:$0xff]
        %v1553 = vld [vmem:[%s3 + $0x370] sm:$0xff]
        %v1554 = vld [vmem:[%s3 + $0x378] sm:$0xff]
        %v1555 = vld [vmem:[%s3 + $0x380] sm:$0xff]
        %v1556 = vld [vmem:[%s3 + $0x388] sm:$0xff]
        %v1557 = vld [vmem:[%s3 + $0x390] sm:$0xff]
        %v1558 = vld [vmem:[%s3 + $0x398] sm:$0xff]
        %v1559 = vld [vmem:[%s3 + $0x3a0] sm:$0xff]
        %v1560 = vld [vmem:[%s3 + $0x3a8] sm:$0xff]
        %v1561 = vld [vmem:[%s3 + $0x3b0] sm:$0xff]
        %v1562 = vld [vmem:[%s3 + $0x3b8] sm:$0xff]
        %v1563 = vld [vmem:[%s3 + $0x3c0] sm:$0xff]
        %v1564 = vld [vmem:[%s3 + $0x3c8] sm:$0xff]
        %v1565 = vld [vmem:[%s3 + $0x3d0] sm:$0xff]
        %v1566 = vld [vmem:[%s3 + $0x3d8] sm:$0xff]
        %v1567 = vld [vmem:[%s3 + $0x3e0] sm:$0xff]
        %v1568 = vld [vmem:[%s3 + $0x3e8] sm:$0xff]
        %v1569 = vld [vmem:[%s3 + $0x3f0] sm:$0xff]
        %v1570 = vld [vmem:[%s3 + $0x3f8] sm:$0xff]
        %v1571 = vld [vmem:[%s3 + $0x400] sm:$0xff]
        %v1572 = vld [vmem:[%s3 + $0x408] sm:$0xff]
        %v1573 = vld [vmem:[%s3 + $0x410] sm:$0xff]
        %v1574 = vld [vmem:[%s3 + $0x418] sm:$0xff]
        %v1575 = vld [vmem:[%s3 + $0x420] sm:$0xff]
        %v1576 = vld [vmem:[%s3 + $0x428] sm:$0xff]
        %v1577 = vld [vmem:[%s3 + $0x430] sm:$0xff]
        %v1578 = vld [vmem:[%s3 + $0x438] sm:$0xff]
        %v1579 = vld [vmem:[%s3 + $0x440] sm:$0xff]
        %v1580 = vld [vmem:[%s3 + $0x448] sm:$0xff]
        %v1581 = vld [vmem:[%s3 + $0x450] sm:$0xff]
        %v1582 = vld [vmem:[%s3 + $0x458] sm:$0xff]
        %v1583 = vld [vmem:[%s3 + $0x460] sm:$0xff]
        %v1584 = vld [vmem:[%s3 + $0x468] sm:$0xff]
        %v1585 = vld [vmem:[%s3 + $0x470] sm:$0xff]
        %v1586 = vld [vmem:[%s3 + $0x478] sm:$0xff]
        %v1587 = vld [vmem:[%s3 + $0x480] sm:$0xff]
        %v1588 = vld [vmem:[%s3 + $0x488] sm:$0xff]
        %v1589 = vld [vmem:[%s3 + $0x490] sm:$0xff]
        %v1590 = vld [vmem:[%s3 + $0x498] sm:$0xff]
        %v1591 = vld [vmem:[%s3 + $0x4a0] sm:$0xff]
        %v1592 = vld [vmem:[%s3 + $0x4a8] sm:$0xff]
        %v1593 = vld [vmem:[%s3 + $0x4b0] sm:$0xff]
        %v1594 = vld [vmem:[%s3 + $0x4b8] sm:$0xff]
        %v1595 = vld [vmem:[%s3 + $0x4c0] sm:$0xff]
        %v1596 = vld [vmem:[%s3 + $0x4c8] sm:$0xff]
        %v1597 = vld [vmem:[%s3 + $0x4d0] sm:$0xff]
        %v1598 = vld [vmem:[%s3 + $0x4d8] sm:$0xff]
        %v1599 = vld [vmem:[%s3 + $0x4e0] sm:$0xff]
        %v1600 = vld [vmem:[%s3 + $0x4e8] sm:$0xff]
        %v1601 = vld [vmem:[%s3 + $0x4f0] sm:$0xff]
        %v1602 = vld [vmem:[%s3 + $0x4f8] sm:$0xff]
        %v1603 = vld [vmem:[%s3 + $0x500] sm:$0xff]
        %v1604 = vld [vmem:[%s3 + $0x508] sm:$0xff]
        %v1605 = vld [vmem:[%s3 + $0x510] sm:$0xff]
        %v1606 = vld [vmem:[%s3 + $0x518] sm:$0xff]
        %v1607 = vld [vmem:[%s3 + $0x520] sm:$0xff]
        %v1608 = vld [vmem:[%s3 + $0x528] sm:$0xff]
        %v1609 = vld [vmem:[%s3 + $0x530] sm:$0xff]
        %v1610 = vld [vmem:[%s3 + $0x538] sm:$0xff]
        %v1611 = vld [vmem:[%s3 + $0x540] sm:$0xff]
        %v1612 = vld [vmem:[%s3 + $0x548] sm:$0xff]
        %v1613 = vld [vmem:[%s3 + $0x550] sm:$0xff]
        %v1614 = vld [vmem:[%s3 + $0x558] sm:$0xff]
        %v1615 = vld [vmem:[%s3 + $0x560] sm:$0xff]
        %v1616 = vld [vmem:[%s3 + $0x568] sm:$0xff]
        %v1617 = vld [vmem:[%s3 + $0x570] sm:$0xff]
        %v1618 = vld [vmem:[%s3 + $0x578] sm:$0xff]
        %v1619 = vld [vmem:[%s3 + $0x580] sm:$0xff]
        %v1620 = vld [vmem:[%s3 + $0x588] sm:$0xff]
        %v1621 = vld [vmem:[%s3 + $0x590] sm:$0xff]
        %v1622 = vld [vmem:[%s3 + $0x598] sm:$0xff]
        %v1623 = vld [vmem:[%s3 + $0x5a0] sm:$0xff]
        %v1624 = vld [vmem:[%s3 + $0x5a8] sm:$0xff]
        %v1625 = vld [vmem:[%s3 + $0x5b0] sm:$0xff]
        %v1626 = vld [vmem:[%s3 + $0x5b8] sm:$0xff]
        %v1627 = vld [vmem:[%s3 + $0x5c0] sm:$0xff]
        %v1628 = vld [vmem:[%s3 + $0x5c8] sm:$0xff]
        %v1629 = vld [vmem:[%s3 + $0x5d0] sm:$0xff]
        %v1630 = vld [vmem:[%s3 + $0x5d8] sm:$0xff]
        %v1631 = vld [vmem:[%s3 + $0x5e0] sm:$0xff]
        %v1632 = vld [vmem:[%s3 + $0x5e8] sm:$0xff]
        %v1633 = vld [vmem:[%s3 + $0x5f0] sm:$0xff]
        %v1634 = vld [vmem:[%s3 + $0x5f8] sm:$0xff]
        %v1635 = vld [vmem:[%s3 + $0x600] sm:$0xff]
        %v1636 = vld [vmem:[%s3 + $0x608] sm:$0xff]
        %v1637 = vld [vmem:[%s3 + $0x610] sm:$0xff]
        %v1638 = vld [vmem:[%s3 + $0x618] sm:$0xff]
        %v1639 = vld [vmem:[%s3 + $0x620] sm:$0xff]
        %v1640 = vld [vmem:[%s3 + $0x628] sm:$0xff]
        %v1641 = vld [vmem:[%s3 + $0x630] sm:$0xff]
        %v1642 = vld [vmem:[%s3 + $0x638] sm:$0xff]
        %v1643 = vld [vmem:[%s3 + $0x640] sm:$0xff]
        %v1644 = vld [vmem:[%s3 + $0x648] sm:$0xff]
        %v1645 = vld [vmem:[%s3 + $0x650] sm:$0xff]
        %v1646 = vld [vmem:[%s3 + $0x658] sm:$0xff]
        %v1647 = vld [vmem:[%s3 + $0x660] sm:$0xff]
        %v1648 = vld [vmem:[%s3 + $0x668] sm:$0xff]
        %v1649 = vld [vmem:[%s3 + $0x670] sm:$0xff]
        %v1650 = vld [vmem:[%s3 + $0x678] sm:$0xff]
        %v1651 = vld [vmem:[%s3 + $0x680] sm:$0xff]
        %v1652 = vld [vmem:[%s3 + $0x688] sm:$0xff]
        %v1653 = vld [vmem:[%s3 + $0x690] sm:$0xff]
        %v1654 = vld [vmem:[%s3 + $0x698] sm:$0xff]
        %v1655 = vld [vmem:[%s3 + $0x6a0] sm:$0xff]
        %v1656 = vld [vmem:[%s3 + $0x6a8] sm:$0xff]
        %v1657 = vld [vmem:[%s3 + $0x6b0] sm:$0xff]
        %v1658 = vld [vmem:[%s3 + $0x6b8] sm:$0xff]
        %v1659 = vld [vmem:[%s3 + $0x6c0] sm:$0xff]
        %v1660 = vld [vmem:[%s3 + $0x6c8] sm:$0xff]
        %v1661 = vld [vmem:[%s3 + $0x6d0] sm:$0xff]
        %v1662 = vld [vmem:[%s3 + $0x6d8] sm:$0xff]
        %v1663 = vld [vmem:[%s3 + $0x6e0] sm:$0xff]
        %v1664 = vld [vmem:[%s3 + $0x6e8] sm:$0xff]
        %v1665 = vld [vmem:[%s3 + $0x6f0] sm:$0xff]
        %v1666 = vld [vmem:[%s3 + $0x6f8] sm:$0xff]
        %v1667 = vld [vmem:[%s3 + $0x700] sm:$0xff]
        %v1668 = vld [vmem:[%s3 + $0x708] sm:$0xff]
        %v1669 = vld [vmem:[%s3 + $0x710] sm:$0xff]
        %v1670 = vld [vmem:[%s3 + $0x718] sm:$0xff]
        %v1671 = vld [vmem:[%s3 + $0x720] sm:$0xff]
        %v1672 = vld [vmem:[%s3 + $0x728] sm:$0xff]
        %v1673 = vld [vmem:[%s3 + $0x730] sm:$0xff]
        %v1674 = vld [vmem:[%s3 + $0x738] sm:$0xff]
        %v1675 = vld [vmem:[%s3 + $0x740] sm:$0xff]
        %v1676 = vld [vmem:[%s3 + $0x748] sm:$0xff]
        %v1677 = vld [vmem:[%s3 + $0x750] sm:$0xff]
        %v1678 = vld [vmem:[%s3 + $0x758] sm:$0xff]
        %v1679 = vld [vmem:[%s3 + $0x760] sm:$0xff]
        %v1680 = vld [vmem:[%s3 + $0x768] sm:$0xff]
        %v1681 = vld [vmem:[%s3 + $0x770] sm:$0xff]
        %v1682 = vld [vmem:[%s3 + $0x778] sm:$0xff]
        %v1683 = vld [vmem:[%s3 + $0x780] sm:$0xff]
        %v1684 = vld [vmem:[%s3 + $0x788] sm:$0xff]
        %v1685 = vld [vmem:[%s3 + $0x790] sm:$0xff]
        %v1686 = vld [vmem:[%s3 + $0x798] sm:$0xff]
        %v1687 = vld [vmem:[%s3 + $0x7a0] sm:$0xff]
        %v1688 = vld [vmem:[%s3 + $0x7a8] sm:$0xff]
        %v1689 = vld [vmem:[%s3 + $0x7b0] sm:$0xff]
        %v1690 = vld [vmem:[%s3 + $0x7b8] sm:$0xff]
        %v1691 = vld [vmem:[%s3 + $0x7c0] sm:$0xff]
        %v1692 = vld [vmem:[%s3 + $0x7c8] sm:$0xff]
        %v1693 = vld [vmem:[%s3 + $0x7d0] sm:$0xff]
        %v1694 = vld [vmem:[%s3 + $0x7d8] sm:$0xff]
        %v1695 = vld [vmem:[%s3 + $0x7e0] sm:$0xff]
        %v1696 = vld [vmem:[%s3 + $0x7e8] sm:$0xff]
        %v1697 = vld [vmem:[%s3 + $0x7f0] sm:$0xff]
        %v1698 = vld [vmem:[%s3 + $0x7f8] sm:$0xff]
        %v1699 = vld [vmem:[%s4] sm:$0x1]
        %v1701 = vlaneseq
        %v1702 = vshrl.u32 %v1701, 7
        %v1703 = vsub.s32 0, %v1702
        %v1704 = vrot.slane %v1699, %v1703
        %1706 = vmatprep.subr.mxu0 0.0
        %1707 = vmatpush1.msra.mxu0 %v1443
        %1708 = vmatprep.subr.mxu0 0.0
        %1709 = vmatpush1.msra.mxu0 %v1444
        %1710 = vmatprep.subr.mxu0 0.0
        %1711 = vmatpush1.msra.mxu0 %v1445
        %1712 = vmatprep.subr.mxu0 0.0
        %1713 = vmatpush1.msra.mxu0 %v1446
        %1714 = vmatprep.subr.mxu0 0.0
        %1715 = vmatpush1.msra.mxu0 %v1447
        %1716 = vmatprep.subr.mxu0 0.0
        %1717 = vmatpush1.msra.mxu0 %v1448
        %1718 = vmatprep.subr.mxu0 0.0
        %1719 = vmatpush1.msra.mxu0 %v1449
        %1720 = vmatprep.subr.mxu0 0.0
        %1721 = vmatpush1.msra.mxu0 %v1450
        %1722 = vmatprep.subr.mxu0 0.0
        %1723 = vmatpush1.msra.mxu0 %v1451
        %1724 = vmatprep.subr.mxu0 0.0
        %1725 = vmatpush1.msra.mxu0 %v1452
        %1726 = vmatprep.subr.mxu0 0.0
        %1727 = vmatpush1.msra.mxu0 %v1453
        %1728 = vmatprep.subr.mxu0 0.0
        %1729 = vmatpush1.msra.mxu0 %v1454
        %1730 = vmatprep.subr.mxu0 0.0
        %1731 = vmatpush1.msra.mxu0 %v1455
        %1732 = vmatprep.subr.mxu0 0.0
        %1733 = vmatpush1.msra.mxu0 %v1456
        %1734 = vmatprep.subr.mxu0 0.0
        %1735 = vmatpush1.msra.mxu0 %v1457
        %1736 = vmatprep.subr.mxu0 0.0
        %1737 = vmatpush1.msra.mxu0 %v1458
        %1738 = vmatprep.subr.mxu0 0.0
        %1739 = vmatpush1.msra.mxu0 %v1459
        %1740 = vmatprep.subr.mxu0 0.0
        %1741 = vmatpush1.msra.mxu0 %v1460
        %1742 = vmatprep.subr.mxu0 0.0
        %1743 = vmatpush1.msra.mxu0 %v1461
        %1744 = vmatprep.subr.mxu0 0.0
        %1745 = vmatpush1.msra.mxu0 %v1462
        %1746 = vmatprep.subr.mxu0 0.0
        %1747 = vmatpush1.msra.mxu0 %v1463
        %1748 = vmatprep.subr.mxu0 0.0
        %1749 = vmatpush1.msra.mxu0 %v1464
        %1750 = vmatprep.subr.mxu0 0.0
        %1751 = vmatpush1.msra.mxu0 %v1465
        %1752 = vmatprep.subr.mxu0 0.0
        %1753 = vmatpush1.msra.mxu0 %v1466
        %1754 = vmatprep.subr.mxu0 0.0
        %1755 = vmatpush1.msra.mxu0 %v1467
        %1756 = vmatprep.subr.mxu0 0.0
        %1757 = vmatpush1.msra.mxu0 %v1468
        %1758 = vmatprep.subr.mxu0 0.0
        %1759 = vmatpush1.msra.mxu0 %v1469
        %1760 = vmatprep.subr.mxu0 0.0
        %1761 = vmatpush1.msra.mxu0 %v1470
        %1762 = vmatprep.subr.mxu0 0.0
        %1763 = vmatpush1.msra.mxu0 %v1471
        %1764 = vmatprep.subr.mxu0 0.0
        %1765 = vmatpush1.msra.mxu0 %v1472
        %1766 = vmatprep.subr.mxu0 0.0
        %1767 = vmatpush1.msra.mxu0 %v1473
        %1768 = vmatprep.subr.mxu0 0.0
        %1769 = vmatpush1.msra.mxu0 %v1474
        %1770 = vmatprep.mubr.f32.mxu0 %v1428
        %1771 = vmatmul.mubr.f32.gmra.mrb[0].mxu0 %v1427
        %v1772 = vpop.f32.mrb[0].mxu0
        %v1773 = vadd.f32 %v1704, %v1772
        %v1774 = vpop.f32.mrb[0].mxu0
        %1775 = vmatprep.mubr.f32.mxu0 %v1021
        %1776 = vmatmul.mubr.f32.gmra.mrb[0].mxu0 %v1020
        %v1777 = vpop.f32.mrb[0].mxu0
        %v1778 = vadd.f32 %v1704, %v1777
        %v1779 = vpop.f32.mrb[0].mxu0
        %1780 = vdwg.mxu0
        %1781 = vmatprep.subr.mxu0 0.0
        %1782 = vmatpush1.msra.mxu0 %v1475
        %1783 = vmatprep.subr.mxu0 0.0
        %1784 = vmatpush1.msra.mxu0 %v1476
        %1785 = vmatprep.subr.mxu0 0.0
        %1786 = vmatpush1.msra.mxu0 %v1477
        %1787 = vmatprep.subr.mxu0 0.0
        %1788 = vmatpush1.msra.mxu0 %v1478
        %1789 = vmatprep.subr.mxu0 0.0
        %1790 = vmatpush1.msra.mxu0 %v1479
        %1791 = vmatprep.subr.mxu0 0.0
        %1792 = vmatpush1.msra.mxu0 %v1480
        %1793 = vmatprep.subr.mxu0 0.0
        %1794 = vmatpush1.msra.mxu0 %v1481
        %1795 = vmatprep.subr.mxu0 0.0
        %1796 = vmatpush1.msra.mxu0 %v1482
        %1797 = vmatprep.subr.mxu0 0.0
        %1798 = vmatpush1.msra.mxu0 %v1483
        %1799 = vmatprep.subr.mxu0 0.0
        %1800 = vmatpush1.msra.mxu0 %v1484
        %1801 = vmatprep.subr.mxu0 0.0
        %1802 = vmatpush1.msra.mxu0 %v1485
        %1803 = vmatprep.subr.mxu0 0.0
        %1804 = vmatpush1.msra.mxu0 %v1486
        %1805 = vmatprep.subr.mxu0 0.0
        %1806 = vmatpush1.msra.mxu0 %v1487
        %1807 = vmatprep.subr.mxu0 0.0
        %1808 = vmatpush1.msra.mxu0 %v1488
        %1809 = vmatprep.subr.mxu0 0.0
        %1810 = vmatpush1.msra.mxu0 %v1489
        %1811 = vmatprep.subr.mxu0 0.0
        %1812 = vmatpush1.msra.mxu0 %v1490
        %1813 = vmatprep.subr.mxu0 0.0
        %1814 = vmatpush1.msra.mxu0 %v1491
        %1815 = vmatprep.subr.mxu0 0.0
        %1816 = vmatpush1.msra.mxu0 %v1492
        %1817 = vmatprep.subr.mxu0 0.0
        %1818 = vmatpush1.msra.mxu0 %v1493
        %1819 = vmatprep.subr.mxu0 0.0
        %1820 = vmatpush1.msra.mxu0 %v1494
        %1821 = vmatprep.subr.mxu0 0.0
        %1822 = vmatpush1.msra.mxu0 %v1495
        %1823 = vmatprep.subr.mxu0 0.0
        %1824 = vmatpush1.msra.mxu0 %v1496
        %1825 = vmatprep.subr.mxu0 0.0
        %1826 = vmatpush1.msra.mxu0 %v1497
        %1827 = vmatprep.subr.mxu0 0.0
        %1828 = vmatpush1.msra.mxu0 %v1498
        %1829 = vmatprep.subr.mxu0 0.0
        %1830 = vmatpush1.msra.mxu0 %v1499
        %1831 = vmatprep.subr.mxu0 0.0
        %1832 = vmatpush1.msra.mxu0 %v1500
        %1833 = vmatprep.subr.mxu0 0.0
        %1834 = vmatpush1.msra.mxu0 %v1501
        %1835 = vmatprep.subr.mxu0 0.0
        %1836 = vmatpush1.msra.mxu0 %v1502
        %1837 = vmatprep.subr.mxu0 0.0
        %1838 = vmatpush1.msra.mxu0 %v1503
        %1839 = vmatprep.subr.mxu0 0.0
        %1840 = vmatpush1.msra.mxu0 %v1504
        %1841 = vmatprep.subr.mxu0 0.0
        %1842 = vmatpush1.msra.mxu0 %v1505
        %1843 = vmatprep.subr.mxu0 0.0
        %1844 = vmatpush1.msra.mxu0 %v1506
        %1845 = vmatprep.mubr.f32.mxu0 %v1430
        %1846 = vmatmul.mubr.f32.gmra.mrb[0].mxu0 %v1429
        %v1847 = vpop.f32.mrb[0].mxu0
        %v1848 = vadd.f32 %v1773, %v1847
        %v1849 = vpop.f32.mrb[0].mxu0
        %1850 = vmatprep.mubr.f32.mxu0 %v1025
        %1851 = vmatmul.mubr.f32.gmra.mrb[0].mxu0 %v1024
        %v1852 = vpop.f32.mrb[0].mxu0
        %v1853 = vadd.f32 %v1778, %v1852
        %v1854 = vpop.f32.mrb[0].mxu0
        %1855 = vdwg.mxu0
        %1856 = vmatprep.subr.mxu0 0.0
        %1857 = vmatpush1.msra.mxu0 %v1507
        %1858 = vmatprep.subr.mxu0 0.0
        %1859 = vmatpush1.msra.mxu0 %v1508
        %1860 = vmatprep.subr.mxu0 0.0
        %1861 = vmatpush1.msra.mxu0 %v1509
        %1862 = vmatprep.subr.mxu0 0.0
        %1863 = vmatpush1.msra.mxu0 %v1510
        %1864 = vmatprep.subr.mxu0 0.0
        %1865 = vmatpush1.msra.mxu0 %v1511
        %1866 = vmatprep.subr.mxu0 0.0
        %1867 = vmatpush1.msra.mxu0 %v1512
        %1868 = vmatprep.subr.mxu0 0.0
        %1869 = vmatpush1.msra.mxu0 %v1513
        %1870 = vmatprep.subr.mxu0 0.0
        %1871 = vmatpush1.msra.mxu0 %v1514
        %1872 = vmatprep.subr.mxu0 0.0
        %1873 = vmatpush1.msra.mxu0 %v1515
        %1874 = vmatprep.subr.mxu0 0.0
        %1875 = vmatpush1.msra.mxu0 %v1516
        %1876 = vmatprep.subr.mxu0 0.0
        %1877 = vmatpush1.msra.mxu0 %v1517
        %1878 = vmatprep.subr.mxu0 0.0
        %1879 = vmatpush1.msra.mxu0 %v1518
        %1880 = vmatprep.subr.mxu0 0.0
        %1881 = vmatpush1.msra.mxu0 %v1519
        %1882 = vmatprep.subr.mxu0 0.0
        %1883 = vmatpush1.msra.mxu0 %v1520
        %1884 = vmatprep.subr.mxu0 0.0
        %1885 = vmatpush1.msra.mxu0 %v1521
        %1886 = vmatprep.subr.mxu0 0.0
        %1887 = vmatpush1.msra.mxu0 %v1522
        %1888 = vmatprep.subr.mxu0 0.0
        %1889 = vmatpush1.msra.mxu0 %v1523
        %1890 = vmatprep.subr.mxu0 0.0
        %1891 = vmatpush1.msra.mxu0 %v1524
        %1892 = vmatprep.subr.mxu0 0.0
        %1893 = vmatpush1.msra.mxu0 %v1525
        %1894 = vmatprep.subr.mxu0 0.0
        %1895 = vmatpush1.msra.mxu0 %v1526
        %1896 = vmatprep.subr.mxu0 0.0
        %1897 = vmatpush1.msra.mxu0 %v1527
        %1898 = vmatprep.subr.mxu0 0.0
        %1899 = vmatpush1.msra.mxu0 %v1528
        %1900 = vmatprep.subr.mxu0 0.0
        %1901 = vmatpush1.msra.mxu0 %v1529
        %1902 = vmatprep.subr.mxu0 0.0
        %1903 = vmatpush1.msra.mxu0 %v1530
        %1904 = vmatprep.subr.mxu0 0.0
        %1905 = vmatpush1.msra.mxu0 %v1531
        %1906 = vmatprep.subr.mxu0 0.0
        %1907 = vmatpush1.msra.mxu0 %v1532
        %1908 = vmatprep.subr.mxu0 0.0
        %1909 = vmatpush1.msra.mxu0 %v1533
        %1910 = vmatprep.subr.mxu0 0.0
        %1911 = vmatpush1.msra.mxu0 %v1534
        %1912 = vmatprep.subr.mxu0 0.0
        %1913 = vmatpush1.msra.mxu0 %v1535
        %1914 = vmatprep.subr.mxu0 0.0
        %1915 = vmatpush1.msra.mxu0 %v1536
        %1916 = vmatprep.subr.mxu0 0.0
        %1917 = vmatpush1.msra.mxu0 %v1537
        %1918 = vmatprep.subr.mxu0 0.0
        %1919 = vmatpush1.msra.mxu0 %v1538
        %1920 = vmatprep.mubr.f32.mxu0 %v1432
        %1921 = vmatmul.mubr.f32.gmra.mrb[0].mxu0 %v1431
        %v1922 = vpop.f32.mrb[0].mxu0
        %v1923 = vadd.f32 %v1848, %v1922
        %v1924 = vpop.f32.mrb[0].mxu0
        %1925 = vmatprep.mubr.f32.mxu0 %v1023
        %1926 = vmatmul.mubr.f32.gmra.mrb[0].mxu0 %v1022
        %v1927 = vpop.f32.mrb[0].mxu0
        %v1928 = vadd.f32 %v1853, %v1927
        %v1929 = vpop.f32.mrb[0].mxu0
        %1930 = vdwg.mxu0
        %1931 = vmatprep.subr.mxu0 0.0
        %1932 = vmatpush1.msra.mxu0 %v1539
        %1933 = vmatprep.subr.mxu0 0.0
        %1934 = vmatpush1.msra.mxu0 %v1540
        %1935 = vmatprep.subr.mxu0 0.0
        %1936 = vmatpush1.msra.mxu0 %v1541
        %1937 = vmatprep.subr.mxu0 0.0
        %1938 = vmatpush1.msra.mxu0 %v1542
        %1939 = vmatprep.subr.mxu0 0.0
        %1940 = vmatpush1.msra.mxu0 %v1543
        %1941 = vmatprep.subr.mxu0 0.0
        %1942 = vmatpush1.msra.mxu0 %v1544
        %1943 = vmatprep.subr.mxu0 0.0
        %1944 = vmatpush1.msra.mxu0 %v1545
        %1945 = vmatprep.subr.mxu0 0.0
        %1946 = vmatpush1.msra.mxu0 %v1546
        %1947 = vmatprep.subr.mxu0 0.0
        %1948 = vmatpush1.msra.mxu0 %v1547
        %1949 = vmatprep.subr.mxu0 0.0
        %1950 = vmatpush1.msra.mxu0 %v1548
        %1951 = vmatprep.subr.mxu0 0.0
        %1952 = vmatpush1.msra.mxu0 %v1549
        %1953 = vmatprep.subr.mxu0 0.0
        %1954 = vmatpush1.msra.mxu0 %v1550
        %1955 = vmatprep.subr.mxu0 0.0
        %1956 = vmatpush1.msra.mxu0 %v1551
        %1957 = vmatprep.subr.mxu0 0.0
        %1958 = vmatpush1.msra.mxu0 %v1552
        %1959 = vmatprep.subr.mxu0 0.0
        %1960 = vmatpush1.msra.mxu0 %v1553
        %1961 = vmatprep.subr.mxu0 0.0
        %1962 = vmatpush1.msra.mxu0 %v1554
        %1963 = vmatprep.subr.mxu0 0.0
        %1964 = vmatpush1.msra.mxu0 %v1555
        %1965 = vmatprep.subr.mxu0 0.0
        %1966 = vmatpush1.msra.mxu0 %v1556
        %1967 = vmatprep.subr.mxu0 0.0
        %1968 = vmatpush1.msra.mxu0 %v1557
        %1969 = vmatprep.subr.mxu0 0.0
        %1970 = vmatpush1.msra.mxu0 %v1558
        %1971 = vmatprep.subr.mxu0 0.0
        %1972 = vmatpush1.msra.mxu0 %v1559
        %1973 = vmatprep.subr.mxu0 0.0
        %1974 = vmatpush1.msra.mxu0 %v1560
        %1975 = vmatprep.subr.mxu0 0.0
        %1976 = vmatpush1.msra.mxu0 %v1561
        %1977 = vmatprep.subr.mxu0 0.0
        %1978 = vmatpush1.msra.mxu0 %v1562
        %1979 = vmatprep.subr.mxu0 0.0
        %1980 = vmatpush1.msra.mxu0 %v1563
        %1981 = vmatprep.subr.mxu0 0.0
        %1982 = vmatpush1.msra.mxu0 %v1564
        %1983 = vmatprep.subr.mxu0 0.0
        %1984 = vmatpush1.msra.mxu0 %v1565
        %1985 = vmatprep.subr.mxu0 0.0
        %1986 = vmatpush1.msra.mxu0 %v1566
        %1987 = vmatprep.subr.mxu0 0.0
        %1988 = vmatpush1.msra.mxu0 %v1567
        %1989 = vmatprep.subr.mxu0 0.0
        %1990 = vmatpush1.msra.mxu0 %v1568
        %1991 = vmatprep.subr.mxu0 0.0
        %1992 = vmatpush1.msra.mxu0 %v1569
        %1993 = vmatprep.subr.mxu0 0.0
        %1994 = vmatpush1.msra.mxu0 %v1570
        %1995 = vmatprep.mubr.f32.mxu0 %v1434
        %1996 = vmatmul.mubr.f32.gmra.mrb[0].mxu0 %v1433
        %v1997 = vpop.f32.mrb[0].mxu0
        %v1998 = vadd.f32 %v1923, %v1997
        %v1999 = vpop.f32.mrb[0].mxu0
        %2000 = vmatprep.mubr.f32.mxu0 %v1027
        %2001 = vmatmul.mubr.f32.gmra.mrb[0].mxu0 %v1026
        %v2002 = vpop.f32.mrb[0].mxu0
        %v2003 = vadd.f32 %v1928, %v2002
        %v2004 = vpop.f32.mrb[0].mxu0
        %2005 = vdwg.mxu0
        %2006 = vmatprep.subr.mxu0 0.0
        %2007 = vmatpush1.msra.mxu0 %v1571
        %2008 = vmatprep.subr.mxu0 0.0
        %2009 = vmatpush1.msra.mxu0 %v1572
        %2010 = vmatprep.subr.mxu0 0.0
        %2011 = vmatpush1.msra.mxu0 %v1573
        %2012 = vmatprep.subr.mxu0 0.0
        %2013 = vmatpush1.msra.mxu0 %v1574
        %2014 = vmatprep.subr.mxu0 0.0
        %2015 = vmatpush1.msra.mxu0 %v1575
        %2016 = vmatprep.subr.mxu0 0.0
        %2017 = vmatpush1.msra.mxu0 %v1576
        %2018 = vmatprep.subr.mxu0 0.0
        %2019 = vmatpush1.msra.mxu0 %v1577
        %2020 = vmatprep.subr.mxu0 0.0
        %2021 = vmatpush1.msra.mxu0 %v1578
        %2022 = vmatprep.subr.mxu0 0.0
        %2023 = vmatpush1.msra.mxu0 %v1579
        %2024 = vmatprep.subr.mxu0 0.0
        %2025 = vmatpush1.msra.mxu0 %v1580
        %2026 = vmatprep.subr.mxu0 0.0
        %2027 = vmatpush1.msra.mxu0 %v1581
        %2028 = vmatprep.subr.mxu0 0.0
        %2029 = vmatpush1.msra.mxu0 %v1582
        %2030 = vmatprep.subr.mxu0 0.0
        %2031 = vmatpush1.msra.mxu0 %v1583
        %2032 = vmatprep.subr.mxu0 0.0
        %2033 = vmatpush1.msra.mxu0 %v1584
        %2034 = vmatprep.subr.mxu0 0.0
        %2035 = vmatpush1.msra.mxu0 %v1585
        %2036 = vmatprep.subr.mxu0 0.0
        %2037 = vmatpush1.msra.mxu0 %v1586
        %2038 = vmatprep.subr.mxu0 0.0
        %2039 = vmatpush1.msra.mxu0 %v1587
        %2040 = vmatprep.subr.mxu0 0.0
        %2041 = vmatpush1.msra.mxu0 %v1588
        %2042 = vmatprep.subr.mxu0 0.0
        %2043 = vmatpush1.msra.mxu0 %v1589
        %2044 = vmatprep.subr.mxu0 0.0
        %2045 = vmatpush1.msra.mxu0 %v1590
        %2046 = vmatprep.subr.mxu0 0.0
        %2047 = vmatpush1.msra.mxu0 %v1591
        %2048 = vmatprep.subr.mxu0 0.0
        %2049 = vmatpush1.msra.mxu0 %v1592
        %2050 = vmatprep.subr.mxu0 0.0
        %2051 = vmatpush1.msra.mxu0 %v1593
        %2052 = vmatprep.subr.mxu0 0.0
        %2053 = vmatpush1.msra.mxu0 %v1594
        %2054 = vmatprep.subr.mxu0 0.0
        %2055 = vmatpush1.msra.mxu0 %v1595
        %2056 = vmatprep.subr.mxu0 0.0
        %2057 = vmatpush1.msra.mxu0 %v1596
        %2058 = vmatprep.subr.mxu0 0.0
        %2059 = vmatpush1.msra.mxu0 %v1597
        %2060 = vmatprep.subr.mxu0 0.0
        %2061 = vmatpush1.msra.mxu0 %v1598
        %2062 = vmatprep.subr.mxu0 0.0
        %2063 = vmatpush1.msra.mxu0 %v1599
        %2064 = vmatprep.subr.mxu0 0.0
        %2065 = vmatpush1.msra.mxu0 %v1600
        %2066 = vmatprep.subr.mxu0 0.0
        %2067 = vmatpush1.msra.mxu0 %v1601
        %2068 = vmatprep.subr.mxu0 0.0
        %2069 = vmatpush1.msra.mxu0 %v1602
        %2070 = vmatprep.mubr.f32.mxu0 %v1436
        %2071 = vmatmul.mubr.f32.gmra.mrb[0].mxu0 %v1435
        %v2072 = vpop.f32.mrb[0].mxu0
        %v2073 = vadd.f32 %v1998, %v2072
        %v2074 = vpop.f32.mrb[0].mxu0
        %2075 = vmatprep.mubr.f32.mxu0 %v1037
        %2076 = vmatmul.mubr.f32.gmra.mrb[0].mxu0 %v1036
        %v2077 = vpop.f32.mrb[0].mxu0
        %v2078 = vadd.f32 %v2003, %v2077
        %v2079 = vpop.f32.mrb[0].mxu0
        %2080 = vdwg.mxu0
        %2081 = vmatprep.subr.mxu0 0.0
        %2082 = vmatpush1.msra.mxu0 %v1603
        %2083 = vmatprep.subr.mxu0 0.0
        %2084 = vmatpush1.msra.mxu0 %v1604
        %2085 = vmatprep.subr.mxu0 0.0
        %2086 = vmatpush1.msra.mxu0 %v1605
        %2087 = vmatprep.subr.mxu0 0.0
        %2088 = vmatpush1.msra.mxu0 %v1606
        %2089 = vmatprep.subr.mxu0 0.0
        %2090 = vmatpush1.msra.mxu0 %v1607
        %2091 = vmatprep.subr.mxu0 0.0
        %2092 = vmatpush1.msra.mxu0 %v1608
        %2093 = vmatprep.subr.mxu0 0.0
        %2094 = vmatpush1.msra.mxu0 %v1609
        %2095 = vmatprep.subr.mxu0 0.0
        %2096 = vmatpush1.msra.mxu0 %v1610
        %2097 = vmatprep.subr.mxu0 0.0
        %2098 = vmatpush1.msra.mxu0 %v1611
        %2099 = vmatprep.subr.mxu0 0.0
        %2100 = vmatpush1.msra.mxu0 %v1612
        %2101 = vmatprep.subr.mxu0 0.0
        %2102 = vmatpush1.msra.mxu0 %v1613
        %2103 = vmatprep.subr.mxu0 0.0
        %2104 = vmatpush1.msra.mxu0 %v1614
        %2105 = vmatprep.subr.mxu0 0.0
        %2106 = vmatpush1.msra.mxu0 %v1615
        %2107 = vmatprep.subr.mxu0 0.0
        %2108 = vmatpush1.msra.mxu0 %v1616
        %2109 = vmatprep.subr.mxu0 0.0
        %2110 = vmatpush1.msra.mxu0 %v1617
        %2111 = vmatprep.subr.mxu0 0.0
        %2112 = vmatpush1.msra.mxu0 %v1618
        %2113 = vmatprep.subr.mxu0 0.0
        %2114 = vmatpush1.msra.mxu0 %v1619
        %2115 = vmatprep.subr.mxu0 0.0
        %2116 = vmatpush1.msra.mxu0 %v1620
        %2117 = vmatprep.subr.mxu0 0.0
        %2118 = vmatpush1.msra.mxu0 %v1621
        %2119 = vmatprep.subr.mxu0 0.0
        %2120 = vmatpush1.msra.mxu0 %v1622
        %2121 = vmatprep.subr.mxu0 0.0
        %2122 = vmatpush1.msra.mxu0 %v1623
        %2123 = vmatprep.subr.mxu0 0.0
        %2124 = vmatpush1.msra.mxu0 %v1624
        %2125 = vmatprep.subr.mxu0 0.0
        %2126 = vmatpush1.msra.mxu0 %v1625
        %2127 = vmatprep.subr.mxu0 0.0
        %2128 = vmatpush1.msra.mxu0 %v1626
        %2129 = vmatprep.subr.mxu0 0.0
        %2130 = vmatpush1.msra.mxu0 %v1627
        %2131 = vmatprep.subr.mxu0 0.0
        %2132 = vmatpush1.msra.mxu0 %v1628
        %2133 = vmatprep.subr.mxu0 0.0
        %2134 = vmatpush1.msra.mxu0 %v1629
        %2135 = vmatprep.subr.mxu0 0.0
        %2136 = vmatpush1.msra.mxu0 %v1630
        %2137 = vmatprep.subr.mxu0 0.0
        %2138 = vmatpush1.msra.mxu0 %v1631
        %2139 = vmatprep.subr.mxu0 0.0
        %2140 = vmatpush1.msra.mxu0 %v1632
        %2141 = vmatprep.subr.mxu0 0.0
        %2142 = vmatpush1.msra.mxu0 %v1633
        %2143 = vmatprep.subr.mxu0 0.0
        %2144 = vmatpush1.msra.mxu0 %v1634
        %2145 = vmatprep.mubr.f32.mxu0 %v1438
        %2146 = vmatmul.mubr.f32.gmra.mrb[0].mxu0 %v1437
        %v2147 = vpop.f32.mrb[0].mxu0
        %v2148 = vadd.f32 %v2073, %v2147
        %v2149 = vpop.f32.mrb[0].mxu0
        %2150 = vmatprep.mubr.f32.mxu0 %v1041
        %2151 = vmatmul.mubr.f32.gmra.mrb[0].mxu0 %v1040
        %v2152 = vpop.f32.mrb[0].mxu0
        %v2153 = vadd.f32 %v2078, %v2152
        %v2154 = vpop.f32.mrb[0].mxu0
        %2155 = vdwg.mxu0
        %2156 = vmatprep.subr.mxu0 0.0
        %2157 = vmatpush1.msra.mxu0 %v1635
        %2158 = vmatprep.subr.mxu0 0.0
        %2159 = vmatpush1.msra.mxu0 %v1636
        %2160 = vmatprep.subr.mxu0 0.0
        %2161 = vmatpush1.msra.mxu0 %v1637
        %2162 = vmatprep.subr.mxu0 0.0
        %2163 = vmatpush1.msra.mxu0 %v1638
        %2164 = vmatprep.subr.mxu0 0.0
        %2165 = vmatpush1.msra.mxu0 %v1639
        %2166 = vmatprep.subr.mxu0 0.0
        %2167 = vmatpush1.msra.mxu0 %v1640
        %2168 = vmatprep.subr.mxu0 0.0
        %2169 = vmatpush1.msra.mxu0 %v1641
        %2170 = vmatprep.subr.mxu0 0.0
        %2171 = vmatpush1.msra.mxu0 %v1642
        %2172 = vmatprep.subr.mxu0 0.0
        %2173 = vmatpush1.msra.mxu0 %v1643
        %2174 = vmatprep.subr.mxu0 0.0
        %2175 = vmatpush1.msra.mxu0 %v1644
        %2176 = vmatprep.subr.mxu0 0.0
        %2177 = vmatpush1.msra.mxu0 %v1645
        %2178 = vmatprep.subr.mxu0 0.0
        %2179 = vmatpush1.msra.mxu0 %v1646
        %2180 = vmatprep.subr.mxu0 0.0
        %2181 = vmatpush1.msra.mxu0 %v1647
        %2182 = vmatprep.subr.mxu0 0.0
        %2183 = vmatpush1.msra.mxu0 %v1648
        %2184 = vmatprep.subr.mxu0 0.0
        %2185 = vmatpush1.msra.mxu0 %v1649
        %2186 = vmatprep.subr.mxu0 0.0
        %2187 = vmatpush1.msra.mxu0 %v1650
        %2188 = vmatprep.subr.mxu0 0.0
        %2189 = vmatpush1.msra.mxu0 %v1651
        %2190 = vmatprep.subr.mxu0 0.0
        %2191 = vmatpush1.msra.mxu0 %v1652
        %2192 = vmatprep.subr.mxu0 0.0
        %2193 = vmatpush1.msra.mxu0 %v1653
        %2194 = vmatprep.subr.mxu0 0.0
        %2195 = vmatpush1.msra.mxu0 %v1654
        %2196 = vmatprep.subr.mxu0 0.0
        %2197 = vmatpush1.msra.mxu0 %v1655
        %2198 = vmatprep.subr.mxu0 0.0
        %2199 = vmatpush1.msra.mxu0 %v1656
        %2200 = vmatprep.subr.mxu0 0.0
        %2201 = vmatpush1.msra.mxu0 %v1657
        %2202 = vmatprep.subr.mxu0 0.0
        %2203 = vmatpush1.msra.mxu0 %v1658
        %2204 = vmatprep.subr.mxu0 0.0
        %2205 = vmatpush1.msra.mxu0 %v1659
        %2206 = vmatprep.subr.mxu0 0.0
        %2207 = vmatpush1.msra.mxu0 %v1660
        %2208 = vmatprep.subr.mxu0 0.0
        %2209 = vmatpush1.msra.mxu0 %v1661
        %2210 = vmatprep.subr.mxu0 0.0
        %2211 = vmatpush1.msra.mxu0 %v1662
        %2212 = vmatprep.subr.mxu0 0.0
        %2213 = vmatpush1.msra.mxu0 %v1663
        %2214 = vmatprep.subr.mxu0 0.0
        %2215 = vmatpush1.msra.mxu0 %v1664
        %2216 = vmatprep.subr.mxu0 0.0
        %2217 = vmatpush1.msra.mxu0 %v1665
        %2218 = vmatprep.subr.mxu0 0.0
        %2219 = vmatpush1.msra.mxu0 %v1666
        %2220 = vmatprep.mubr.f32.mxu0 %v1440
        %2221 = vmatmul.mubr.f32.gmra.mrb[0].mxu0 %v1439
        %v2222 = vpop.f32.mrb[0].mxu0
        %v2223 = vadd.f32 %v2148, %v2222
        %v2224 = vpop.f32.mrb[0].mxu0
        %2225 = vmatprep.mubr.f32.mxu0 %v1039
        %2226 = vmatmul.mubr.f32.gmra.mrb[0].mxu0 %v1038
        %v2227 = vpop.f32.mrb[0].mxu0
        %v2228 = vadd.f32 %v2153, %v2227
        %v2229 = vpop.f32.mrb[0].mxu0
        %2230 = vdwg.mxu0
        %2231 = vmatprep.subr.mxu0 0.0
        %2232 = vmatpush1.msra.mxu0 %v1667
        %2233 = vmatprep.subr.mxu0 0.0
        %2234 = vmatpush1.msra.mxu0 %v1668
        %2235 = vmatprep.subr.mxu0 0.0
        %2236 = vmatpush1.msra.mxu0 %v1669
        %2237 = vmatprep.subr.mxu0 0.0
        %2238 = vmatpush1.msra.mxu0 %v1670
        %2239 = vmatprep.subr.mxu0 0.0
        %2240 = vmatpush1.msra.mxu0 %v1671
        %2241 = vmatprep.subr.mxu0 0.0
        %2242 = vmatpush1.msra.mxu0 %v1672
        %2243 = vmatprep.subr.mxu0 0.0
        %2244 = vmatpush1.msra.mxu0 %v1673
        %2245 = vmatprep.subr.mxu0 0.0
        %2246 = vmatpush1.msra.mxu0 %v1674
        %2247 = vmatprep.subr.mxu0 0.0
        %2248 = vmatpush1.msra.mxu0 %v1675
        %2249 = vmatprep.subr.mxu0 0.0
        %2250 = vmatpush1.msra.mxu0 %v1676
        %2251 = vmatprep.subr.mxu0 0.0
        %2252 = vmatpush1.msra.mxu0 %v1677
        %2253 = vmatprep.subr.mxu0 0.0
        %2254 = vmatpush1.msra.mxu0 %v1678
        %2255 = vmatprep.subr.mxu0 0.0
        %2256 = vmatpush1.msra.mxu0 %v1679
        %2257 = vmatprep.subr.mxu0 0.0
        %2258 = vmatpush1.msra.mxu0 %v1680
        %2259 = vmatprep.subr.mxu0 0.0
        %2260 = vmatpush1.msra.mxu0 %v1681
        %2261 = vmatprep.subr.mxu0 0.0
        %2262 = vmatpush1.msra.mxu0 %v1682
        %2263 = vmatprep.subr.mxu0 0.0
        %2264 = vmatpush1.msra.mxu0 %v1683
        %2265 = vmatprep.subr.mxu0 0.0
        %2266 = vmatpush1.msra.mxu0 %v1684
        %2267 = vmatprep.subr.mxu0 0.0
        %2268 = vmatpush1.msra.mxu0 %v1685
        %2269 = vmatprep.subr.mxu0 0.0
        %2270 = vmatpush1.msra.mxu0 %v1686
        %2271 = vmatprep.subr.mxu0 0.0
        %2272 = vmatpush1.msra.mxu0 %v1687
        %2273 = vmatprep.subr.mxu0 0.0
        %2274 = vmatpush1.msra.mxu0 %v1688
        %2275 = vmatprep.subr.mxu0 0.0
        %2276 = vmatpush1.msra.mxu0 %v1689
        %2277 = vmatprep.subr.mxu0 0.0
        %2278 = vmatpush1.msra.mxu0 %v1690
        %2279 = vmatprep.subr.mxu0 0.0
        %2280 = vmatpush1.msra.mxu0 %v1691
        %2281 = vmatprep.subr.mxu0 0.0
        %2282 = vmatpush1.msra.mxu0 %v1692
        %2283 = vmatprep.subr.mxu0 0.0
        %2284 = vmatpush1.msra.mxu0 %v1693
        %2285 = vmatprep.subr.mxu0 0.0
        %2286 = vmatpush1.msra.mxu0 %v1694
        %2287 = vmatprep.subr.mxu0 0.0
        %2288 = vmatpush1.msra.mxu0 %v1695
        %2289 = vmatprep.subr.mxu0 0.0
        %2290 = vmatpush1.msra.mxu0 %v1696
        %2291 = vmatprep.subr.mxu0 0.0
        %2292 = vmatpush1.msra.mxu0 %v1697
        %2293 = vmatprep.subr.mxu0 0.0
        %2294 = vmatpush1.msra.mxu0 %v1698
        %2295 = vmatprep.mubr.f32.mxu0 %v1442
        %2296 = vmatmul.mubr.f32.gmra.mrb[0].mxu0 %v1441
        %v2297 = vpop.f32.mrb[0].mxu0
        %v2298 = vadd.f32 %v2223, %v2297
        %v2299 = vpop.f32.mrb[0].mxu0
        %2300 = vmatprep.mubr.f32.mxu0 %v1043
        %2301 = vmatmul.mubr.f32.gmra.mrb[0].mxu0 %v1042
        %v2302 = vpop.f32.mrb[0].mxu0
        %v2303 = vadd.f32 %v2228, %v2302
        %v2304 = vpop.f32.mrb[0].mxu0
        %2305 = vdwg.mxu0
        %v2306 = vmax.f32 %v2298, 0.0
        %v2307 = vmax.f32 %v2303, 0.0
        %2308 = vst [vmem:[#allocation3] sm:$0xff] %v2306
        %2309 = vst [vmem:[#allocation3 + $0x8] sm:$0x1] %v2307
        %v2310 = vld [vmem:[#allocation3] sm:$0x1]
        %v2311 = vld [vmem:[#allocation3 + $0x1] sm:$0x1]
        %v2312 = vld [vmem:[#allocation3 + $0x2] sm:$0x1]
        %v2313 = vld [vmem:[#allocation3 + $0x3] sm:$0x1]
        %v2314 = vld [vmem:[#allocation3 + $0x4] sm:$0x1]
        %v2315 = vld [vmem:[#allocation3 + $0x5] sm:$0x1]
        %v2316 = vld [vmem:[#allocation3 + $0x6] sm:$0x1]
        %v2317 = vld [vmem:[#allocation3 + $0x7] sm:$0x1]
        %v2318 = vld [vmem:[#allocation3 + $0x8] sm:$0x1]
        %v2319 = vld [vmem:[%s5] sm:$0xff]
        %v2320 = vld [vmem:[%s5 + $0x8] sm:$0xff]
        %v2321 = vld [vmem:[%s5 + $0x10] sm:$0xff]
        %v2322 = vld [vmem:[%s5 + $0x18] sm:$0xff]
        %v2323 = vld [vmem:[%s5 + $0x20] sm:$0xff]
        %v2324 = vld [vmem:[%s5 + $0x28] sm:$0xff]
        %v2325 = vld [vmem:[%s5 + $0x30] sm:$0xff]
        %v2326 = vld [vmem:[%s5 + $0x38] sm:$0xff]
        %v2327 = vld [vmem:[%s5 + $0x40] sm:$0xff]
        %v2328 = vld [vmem:[%s5 + $0x48] sm:$0xff]
        %v2329 = vld [vmem:[%s5 + $0x50] sm:$0xff]
        %v2330 = vld [vmem:[%s5 + $0x58] sm:$0xff]
        %v2331 = vld [vmem:[%s5 + $0x60] sm:$0xff]
        %v2332 = vld [vmem:[%s5 + $0x68] sm:$0xff]
        %v2333 = vld [vmem:[%s5 + $0x70] sm:$0xff]
        %v2334 = vld [vmem:[%s5 + $0x78] sm:$0xff]
        %v2335 = vld [vmem:[%s5 + $0x80] sm:$0xff]
        %v2336 = vld [vmem:[%s5 + $0x88] sm:$0xff]
        %v2337 = vld [vmem:[%s5 + $0x90] sm:$0xff]
        %v2338 = vld [vmem:[%s5 + $0x98] sm:$0xff]
        %v2339 = vld [vmem:[%s5 + $0xa0] sm:$0xff]
        %v2340 = vld [vmem:[%s5 + $0xa8] sm:$0xff]
        %v2341 = vld [vmem:[%s5 + $0xb0] sm:$0xff]
        %v2342 = vld [vmem:[%s5 + $0xb8] sm:$0xff]
        %v2343 = vld [vmem:[%s5 + $0xc0] sm:$0xff]
        %v2344 = vld [vmem:[%s5 + $0xc8] sm:$0xff]
        %v2345 = vld [vmem:[%s5 + $0xd0] sm:$0xff]
        %v2346 = vld [vmem:[%s5 + $0xd8] sm:$0xff]
        %v2347 = vld [vmem:[%s5 + $0xe0] sm:$0xff]
        %v2348 = vld [vmem:[%s5 + $0xe8] sm:$0xff]
        %v2349 = vld [vmem:[%s5 + $0xf0] sm:$0xff]
        %v2350 = vld [vmem:[%s5 + $0xf8] sm:$0xff]
        %v2351 = vld [vmem:[%s5 + $0x100] sm:$0xff]
        %v2352 = vld [vmem:[%s5 + $0x108] sm:$0xff]
        %v2353 = vld [vmem:[%s5 + $0x110] sm:$0xff]
        %v2354 = vld [vmem:[%s5 + $0x118] sm:$0xff]
        %v2355 = vld [vmem:[%s5 + $0x120] sm:$0xff]
        %v2356 = vld [vmem:[%s5 + $0x128] sm:$0xff]
        %v2357 = vld [vmem:[%s5 + $0x130] sm:$0xff]
        %v2358 = vld [vmem:[%s5 + $0x138] sm:$0xff]
        %v2359 = vld [vmem:[%s5 + $0x140] sm:$0xff]
        %v2360 = vld [vmem:[%s5 + $0x148] sm:$0xff]
        %v2361 = vld [vmem:[%s5 + $0x150] sm:$0xff]
        %v2362 = vld [vmem:[%s5 + $0x158] sm:$0xff]
        %v2363 = vld [vmem:[%s5 + $0x160] sm:$0xff]
        %v2364 = vld [vmem:[%s5 + $0x168] sm:$0xff]
        %v2365 = vld [vmem:[%s5 + $0x170] sm:$0xff]
        %v2366 = vld [vmem:[%s5 + $0x178] sm:$0xff]
        %v2367 = vld [vmem:[%s5 + $0x180] sm:$0xff]
        %v2368 = vld [vmem:[%s5 + $0x188] sm:$0xff]
        %v2369 = vld [vmem:[%s5 + $0x190] sm:$0xff]
        %v2370 = vld [vmem:[%s5 + $0x198] sm:$0xff]
        %v2371 = vld [vmem:[%s5 + $0x1a0] sm:$0xff]
        %v2372 = vld [vmem:[%s5 + $0x1a8] sm:$0xff]
        %v2373 = vld [vmem:[%s5 + $0x1b0] sm:$0xff]
        %v2374 = vld [vmem:[%s5 + $0x1b8] sm:$0xff]
        %v2375 = vld [vmem:[%s5 + $0x1c0] sm:$0xff]
        %v2376 = vld [vmem:[%s5 + $0x1c8] sm:$0xff]
        %v2377 = vld [vmem:[%s5 + $0x1d0] sm:$0xff]
        %v2378 = vld [vmem:[%s5 + $0x1d8] sm:$0xff]
        %v2379 = vld [vmem:[%s5 + $0x1e0] sm:$0xff]
        %v2380 = vld [vmem:[%s5 + $0x1e8] sm:$0xff]
        %v2381 = vld [vmem:[%s5 + $0x1f0] sm:$0xff]
        %v2382 = vld [vmem:[%s5 + $0x1f8] sm:$0xff]
        %v2383 = vld [vmem:[%s5 + $0x200] sm:$0xff]
        %v2384 = vld [vmem:[%s5 + $0x208] sm:$0xff]
        %v2385 = vld [vmem:[%s5 + $0x210] sm:$0xff]
        %v2386 = vld [vmem:[%s5 + $0x218] sm:$0xff]
        %v2387 = vld [vmem:[%s5 + $0x220] sm:$0xff]
        %v2388 = vld [vmem:[%s5 + $0x228] sm:$0xff]
        %v2389 = vld [vmem:[%s5 + $0x230] sm:$0xff]
        %v2390 = vld [vmem:[%s5 + $0x238] sm:$0xff]
        %v2391 = vld [vmem:[%s5 + $0x240] sm:$0xff]
        %v2392 = vld [vmem:[%s5 + $0x248] sm:$0xff]
        %v2393 = vld [vmem:[%s5 + $0x250] sm:$0xff]
        %v2394 = vld [vmem:[%s5 + $0x258] sm:$0xff]
        %v2395 = vld [vmem:[%s5 + $0x260] sm:$0xff]
        %v2396 = vld [vmem:[%s5 + $0x268] sm:$0xff]
        %v2397 = vld [vmem:[%s5 + $0x270] sm:$0xff]
        %v2398 = vld [vmem:[%s5 + $0x278] sm:$0xff]
        %v2399 = vld [vmem:[%s5 + $0x280] sm:$0xff]
        %v2400 = vld [vmem:[%s5 + $0x288] sm:$0xff]
        %v2401 = vld [vmem:[%s5 + $0x290] sm:$0xff]
        %v2402 = vld [vmem:[%s5 + $0x298] sm:$0xff]
        %v2403 = vld [vmem:[%s5 + $0x2a0] sm:$0xff]
        %v2404 = vld [vmem:[%s5 + $0x2a8] sm:$0xff]
        %v2405 = vld [vmem:[%s5 + $0x2b0] sm:$0xff]
        %v2406 = vld [vmem:[%s5 + $0x2b8] sm:$0xff]
        %v2407 = vld [vmem:[%s5 + $0x2c0] sm:$0xff]
        %v2408 = vld [vmem:[%s5 + $0x2c8] sm:$0xff]
        %v2409 = vld [vmem:[%s5 + $0x2d0] sm:$0xff]
        %v2410 = vld [vmem:[%s5 + $0x2d8] sm:$0xff]
        %v2411 = vld [vmem:[%s5 + $0x2e0] sm:$0xff]
        %v2412 = vld [vmem:[%s5 + $0x2e8] sm:$0xff]
        %v2413 = vld [vmem:[%s5 + $0x2f0] sm:$0xff]
        %v2414 = vld [vmem:[%s5 + $0x2f8] sm:$0xff]
        %v2415 = vld [vmem:[%s5 + $0x300] sm:$0xff]
        %v2416 = vld [vmem:[%s5 + $0x308] sm:$0xff]
        %v2417 = vld [vmem:[%s5 + $0x310] sm:$0xff]
        %v2418 = vld [vmem:[%s5 + $0x318] sm:$0xff]
        %v2419 = vld [vmem:[%s5 + $0x320] sm:$0xff]
        %v2420 = vld [vmem:[%s5 + $0x328] sm:$0xff]
        %v2421 = vld [vmem:[%s5 + $0x330] sm:$0xff]
        %v2422 = vld [vmem:[%s5 + $0x338] sm:$0xff]
        %v2423 = vld [vmem:[%s5 + $0x340] sm:$0xff]
        %v2424 = vld [vmem:[%s5 + $0x348] sm:$0xff]
        %v2425 = vld [vmem:[%s5 + $0x350] sm:$0xff]
        %v2426 = vld [vmem:[%s5 + $0x358] sm:$0xff]
        %v2427 = vld [vmem:[%s5 + $0x360] sm:$0xff]
        %v2428 = vld [vmem:[%s5 + $0x368] sm:$0xff]
        %v2429 = vld [vmem:[%s5 + $0x370] sm:$0xff]
        %v2430 = vld [vmem:[%s5 + $0x378] sm:$0xff]
        %v2431 = vld [vmem:[%s5 + $0x380] sm:$0xff]
        %v2432 = vld [vmem:[%s5 + $0x388] sm:$0xff]
        %v2433 = vld [vmem:[%s5 + $0x390] sm:$0xff]
        %v2434 = vld [vmem:[%s5 + $0x398] sm:$0xff]
        %v2435 = vld [vmem:[%s5 + $0x3a0] sm:$0xff]
        %v2436 = vld [vmem:[%s5 + $0x3a8] sm:$0xff]
        %v2437 = vld [vmem:[%s5 + $0x3b0] sm:$0xff]
        %v2438 = vld [vmem:[%s5 + $0x3b8] sm:$0xff]
        %v2439 = vld [vmem:[%s5 + $0x3c0] sm:$0xff]
        %v2440 = vld [vmem:[%s5 + $0x3c8] sm:$0xff]
        %v2441 = vld [vmem:[%s5 + $0x3d0] sm:$0xff]
        %v2442 = vld [vmem:[%s5 + $0x3d8] sm:$0xff]
        %v2443 = vld [vmem:[%s5 + $0x3e0] sm:$0xff]
        %v2444 = vld [vmem:[%s5 + $0x3e8] sm:$0xff]
        %v2445 = vld [vmem:[%s5 + $0x3f0] sm:$0xff]
        %v2446 = vld [vmem:[%s5 + $0x3f8] sm:$0xff]
        %v2447 = vld [vmem:[%s5 + $0x400] sm:$0xff]
        %v2448 = vld [vmem:[%s5 + $0x408] sm:$0xff]
        %v2449 = vld [vmem:[%s5 + $0x410] sm:$0xff]
        %v2450 = vld [vmem:[%s5 + $0x418] sm:$0xff]
        %v2451 = vld [vmem:[%s5 + $0x420] sm:$0xff]
        %v2452 = vld [vmem:[%s5 + $0x428] sm:$0xff]
        %v2453 = vld [vmem:[%s5 + $0x430] sm:$0xff]
        %v2454 = vld [vmem:[%s5 + $0x438] sm:$0xff]
        %v2455 = vld [vmem:[%s5 + $0x440] sm:$0xff]
        %v2456 = vld [vmem:[%s5 + $0x448] sm:$0xff]
        %v2457 = vld [vmem:[%s5 + $0x450] sm:$0xff]
        %v2458 = vld [vmem:[%s5 + $0x458] sm:$0xff]
        %v2459 = vld [vmem:[%s5 + $0x460] sm:$0xff]
        %v2460 = vld [vmem:[%s5 + $0x468] sm:$0xff]
        %v2461 = vld [vmem:[%s5 + $0x470] sm:$0xff]
        %v2462 = vld [vmem:[%s5 + $0x478] sm:$0xff]
        %v2463 = vld [vmem:[%s6] sm:$0x1]
        %2464 = vmatprep.subr.mxu0 0.0
        %2465 = vmatpush1.msra.mxu0 %v2319
        %2466 = vmatprep.subr.mxu0 0.0
        %2467 = vmatpush1.msra.mxu0 %v2320
        %2468 = vmatprep.subr.mxu0 0.0
        %2469 = vmatpush1.msra.mxu0 %v2321
        %2470 = vmatprep.subr.mxu0 0.0
        %2471 = vmatpush1.msra.mxu0 %v2322
        %2472 = vmatprep.subr.mxu0 0.0
        %2473 = vmatpush1.msra.mxu0 %v2323
        %2474 = vmatprep.subr.mxu0 0.0
        %2475 = vmatpush1.msra.mxu0 %v2324
        %2476 = vmatprep.subr.mxu0 0.0
        %2477 = vmatpush1.msra.mxu0 %v2325
        %2478 = vmatprep.subr.mxu0 0.0
        %2479 = vmatpush1.msra.mxu0 %v2326
        %2480 = vmatprep.subr.mxu0 0.0
        %2481 = vmatpush1.msra.mxu0 %v2327
        %2482 = vmatprep.subr.mxu0 0.0
        %2483 = vmatpush1.msra.mxu0 %v2328
        %2484 = vmatprep.subr.mxu0 0.0
        %2485 = vmatpush1.msra.mxu0 %v2329
        %2486 = vmatprep.subr.mxu0 0.0
        %2487 = vmatpush1.msra.mxu0 %v2330
        %2488 = vmatprep.subr.mxu0 0.0
        %2489 = vmatpush1.msra.mxu0 %v2331
        %2490 = vmatprep.subr.mxu0 0.0
        %2491 = vmatpush1.msra.mxu0 %v2332
        %2492 = vmatprep.subr.mxu0 0.0
        %2493 = vmatpush1.msra.mxu0 %v2333
        %2494 = vmatprep.subr.mxu0 0.0
        %2495 = vmatpush1.msra.mxu0 %v2334
        %2496 = vmatprep.subr.mxu0 0.0
        %2497 = vmatpush1.msra.mxu0 %v2335
        %2498 = vmatprep.subr.mxu0 0.0
        %2499 = vmatpush1.msra.mxu0 %v2336
        %2500 = vmatprep.subr.mxu0 0.0
        %2501 = vmatpush1.msra.mxu0 %v2337
        %2502 = vmatprep.subr.mxu0 0.0
        %2503 = vmatpush1.msra.mxu0 %v2338
        %2504 = vmatprep.subr.mxu0 0.0
        %2505 = vmatpush1.msra.mxu0 %v2339
        %2506 = vmatprep.subr.mxu0 0.0
        %2507 = vmatpush1.msra.mxu0 %v2340
        %2508 = vmatprep.subr.mxu0 0.0
        %2509 = vmatpush1.msra.mxu0 %v2341
        %2510 = vmatprep.subr.mxu0 0.0
        %2511 = vmatpush1.msra.mxu0 %v2342
        %2512 = vmatprep.subr.mxu0 0.0
        %2513 = vmatpush1.msra.mxu0 %v2343
        %2514 = vmatprep.subr.mxu0 0.0
        %2515 = vmatpush1.msra.mxu0 %v2344
        %2516 = vmatprep.subr.mxu0 0.0
        %2517 = vmatpush1.msra.mxu0 %v2345
        %2518 = vmatprep.subr.mxu0 0.0
        %2519 = vmatpush1.msra.mxu0 %v2346
        %2520 = vmatprep.subr.mxu0 0.0
        %2521 = vmatpush1.msra.mxu0 %v2347
        %2522 = vmatprep.subr.mxu0 0.0
        %2523 = vmatpush1.msra.mxu0 %v2348
        %2524 = vmatprep.subr.mxu0 0.0
        %2525 = vmatpush1.msra.mxu0 %v2349
        %2526 = vmatprep.subr.mxu0 0.0
        %2527 = vmatpush1.msra.mxu0 %v2350
        %2528 = vmatprep.mubr.f32.mxu0 %v2311
        %2529 = vmatmul.mubr.f32.gmra.mrb[0].mxu0 %v2310
        %v2530 = vpop.f32.mrb[0].mxu0
        %v2531 = vadd.f32 %v2463, %v2530
        %v2532 = vpop.f32.mrb[0].mxu0
        %2533 = vdwg.mxu0
        %2534 = vmatprep.subr.mxu0 0.0
        %2535 = vmatpush1.msra.mxu0 %v2351
        %2536 = vmatprep.subr.mxu0 0.0
        %2537 = vmatpush1.msra.mxu0 %v2352
        %2538 = vmatprep.subr.mxu0 0.0
        %2539 = vmatpush1.msra.mxu0 %v2353
        %2540 = vmatprep.subr.mxu0 0.0
        %2541 = vmatpush1.msra.mxu0 %v2354
        %2542 = vmatprep.subr.mxu0 0.0
        %2543 = vmatpush1.msra.mxu0 %v2355
        %2544 = vmatprep.subr.mxu0 0.0
        %2545 = vmatpush1.msra.mxu0 %v2356
        %2546 = vmatprep.subr.mxu0 0.0
        %2547 = vmatpush1.msra.mxu0 %v2357
        %2548 = vmatprep.subr.mxu0 0.0
        %2549 = vmatpush1.msra.mxu0 %v2358
        %2550 = vmatprep.subr.mxu0 0.0
        %2551 = vmatpush1.msra.mxu0 %v2359
        %2552 = vmatprep.subr.mxu0 0.0
        %2553 = vmatpush1.msra.mxu0 %v2360
        %2554 = vmatprep.subr.mxu0 0.0
        %2555 = vmatpush1.msra.mxu0 %v2361
        %2556 = vmatprep.subr.mxu0 0.0
        %2557 = vmatpush1.msra.mxu0 %v2362
        %2558 = vmatprep.subr.mxu0 0.0
        %2559 = vmatpush1.msra.mxu0 %v2363
        %2560 = vmatprep.subr.mxu0 0.0
        %2561 = vmatpush1.msra.mxu0 %v2364
        %2562 = vmatprep.subr.mxu0 0.0
        %2563 = vmatpush1.msra.mxu0 %v2365
        %2564 = vmatprep.subr.mxu0 0.0
        %2565 = vmatpush1.msra.mxu0 %v2366
        %2566 = vmatprep.subr.mxu0 0.0
        %2567 = vmatpush1.msra.mxu0 %v2367
        %2568 = vmatprep.subr.mxu0 0.0
        %2569 = vmatpush1.msra.mxu0 %v2368
        %2570 = vmatprep.subr.mxu0 0.0
        %2571 = vmatpush1.msra.mxu0 %v2369
        %2572 = vmatprep.subr.mxu0 0.0
        %2573 = vmatpush1.msra.mxu0 %v2370
        %2574 = vmatprep.subr.mxu0 0.0
        %2575 = vmatpush1.msra.mxu0 %v2371
        %2576 = vmatprep.subr.mxu0 0.0
        %2577 = vmatpush1.msra.mxu0 %v2372
        %2578 = vmatprep.subr.mxu0 0.0
        %2579 = vmatpush1.msra.mxu0 %v2373
        %2580 = vmatprep.subr.mxu0 0.0
        %2581 = vmatpush1.msra.mxu0 %v2374
        %2582 = vmatprep.subr.mxu0 0.0
        %2583 = vmatpush1.msra.mxu0 %v2375
        %2584 = vmatprep.subr.mxu0 0.0
        %2585 = vmatpush1.msra.mxu0 %v2376
        %2586 = vmatprep.subr.mxu0 0.0
        %2587 = vmatpush1.msra.mxu0 %v2377
        %2588 = vmatprep.subr.mxu0 0.0
        %2589 = vmatpush1.msra.mxu0 %v2378
        %2590 = vmatprep.subr.mxu0 0.0
        %2591 = vmatpush1.msra.mxu0 %v2379
        %2592 = vmatprep.subr.mxu0 0.0
        %2593 = vmatpush1.msra.mxu0 %v2380
        %2594 = vmatprep.subr.mxu0 0.0
        %2595 = vmatpush1.msra.mxu0 %v2381
        %2596 = vmatprep.subr.mxu0 0.0
        %2597 = vmatpush1.msra.mxu0 %v2382
        %2598 = vmatprep.mubr.f32.mxu0 %v2313
        %2599 = vmatmul.mubr.f32.gmra.mrb[0].mxu0 %v2312
        %v2600 = vpop.f32.mrb[0].mxu0
        %v2601 = vadd.f32 %v2531, %v2600
        %v2602 = vpop.f32.mrb[0].mxu0
        %2603 = vdwg.mxu0
        %2604 = vmatprep.subr.mxu0 0.0
        %2605 = vmatpush1.msra.mxu0 %v2383
        %2606 = vmatprep.subr.mxu0 0.0
        %2607 = vmatpush1.msra.mxu0 %v2384
        %2608 = vmatprep.subr.mxu0 0.0
        %2609 = vmatpush1.msra.mxu0 %v2385
        %2610 = vmatprep.subr.mxu0 0.0
        %2611 = vmatpush1.msra.mxu0 %v2386
        %2612 = vmatprep.subr.mxu0 0.0
        %2613 = vmatpush1.msra.mxu0 %v2387
        %2614 = vmatprep.subr.mxu0 0.0
        %2615 = vmatpush1.msra.mxu0 %v2388
        %2616 = vmatprep.subr.mxu0 0.0
        %2617 = vmatpush1.msra.mxu0 %v2389
        %2618 = vmatprep.subr.mxu0 0.0
        %2619 = vmatpush1.msra.mxu0 %v2390
        %2620 = vmatprep.subr.mxu0 0.0
        %2621 = vmatpush1.msra.mxu0 %v2391
        %2622 = vmatprep.subr.mxu0 0.0
        %2623 = vmatpush1.msra.mxu0 %v2392
        %2624 = vmatprep.subr.mxu0 0.0
        %2625 = vmatpush1.msra.mxu0 %v2393
        %2626 = vmatprep.subr.mxu0 0.0
        %2627 = vmatpush1.msra.mxu0 %v2394
        %2628 = vmatprep.subr.mxu0 0.0
        %2629 = vmatpush1.msra.mxu0 %v2395
        %2630 = vmatprep.subr.mxu0 0.0
        %2631 = vmatpush1.msra.mxu0 %v2396
        %2632 = vmatprep.subr.mxu0 0.0
        %2633 = vmatpush1.msra.mxu0 %v2397
        %2634 = vmatprep.subr.mxu0 0.0
        %2635 = vmatpush1.msra.mxu0 %v2398
        %2636 = vmatprep.subr.mxu0 0.0
        %2637 = vmatpush1.msra.mxu0 %v2399
        %2638 = vmatprep.subr.mxu0 0.0
        %2639 = vmatpush1.msra.mxu0 %v2400
        %2640 = vmatprep.subr.mxu0 0.0
        %2641 = vmatpush1.msra.mxu0 %v2401
        %2642 = vmatprep.subr.mxu0 0.0
        %2643 = vmatpush1.msra.mxu0 %v2402
        %2644 = vmatprep.subr.mxu0 0.0
        %2645 = vmatpush1.msra.mxu0 %v2403
        %2646 = vmatprep.subr.mxu0 0.0
        %2647 = vmatpush1.msra.mxu0 %v2404
        %2648 = vmatprep.subr.mxu0 0.0
        %2649 = vmatpush1.msra.mxu0 %v2405
        %2650 = vmatprep.subr.mxu0 0.0
        %2651 = vmatpush1.msra.mxu0 %v2406
        %2652 = vmatprep.subr.mxu0 0.0
        %2653 = vmatpush1.msra.mxu0 %v2407
        %2654 = vmatprep.subr.mxu0 0.0
        %2655 = vmatpush1.msra.mxu0 %v2408
        %2656 = vmatprep.subr.mxu0 0.0
        %2657 = vmatpush1.msra.mxu0 %v2409
        %2658 = vmatprep.subr.mxu0 0.0
        %2659 = vmatpush1.msra.mxu0 %v2410
        %2660 = vmatprep.subr.mxu0 0.0
        %2661 = vmatpush1.msra.mxu0 %v2411
        %2662 = vmatprep.subr.mxu0 0.0
        %2663 = vmatpush1.msra.mxu0 %v2412
        %2664 = vmatprep.subr.mxu0 0.0
        %2665 = vmatpush1.msra.mxu0 %v2413
        %2666 = vmatprep.subr.mxu0 0.0
        %2667 = vmatpush1.msra.mxu0 %v2414
        %2668 = vmatprep.mubr.f32.mxu0 %v2315
        %2669 = vmatmul.mubr.f32.gmra.mrb[0].mxu0 %v2314
        %v2670 = vpop.f32.mrb[0].mxu0
        %v2671 = vadd.f32 %v2601, %v2670
        %v2672 = vpop.f32.mrb[0].mxu0
        %2673 = vdwg.mxu0
        %2674 = vmatprep.subr.mxu0 0.0
        %2675 = vmatpush1.msra.mxu0 %v2415
        %2676 = vmatprep.subr.mxu0 0.0
        %2677 = vmatpush1.msra.mxu0 %v2416
        %2678 = vmatprep.subr.mxu0 0.0
        %2679 = vmatpush1.msra.mxu0 %v2417
        %2680 = vmatprep.subr.mxu0 0.0
        %2681 = vmatpush1.msra.mxu0 %v2418
        %2682 = vmatprep.subr.mxu0 0.0
        %2683 = vmatpush1.msra.mxu0 %v2419
        %2684 = vmatprep.subr.mxu0 0.0
        %2685 = vmatpush1.msra.mxu0 %v2420
        %2686 = vmatprep.subr.mxu0 0.0
        %2687 = vmatpush1.msra.mxu0 %v2421
        %2688 = vmatprep.subr.mxu0 0.0
        %2689 = vmatpush1.msra.mxu0 %v2422
        %2690 = vmatprep.subr.mxu0 0.0
        %2691 = vmatpush1.msra.mxu0 %v2423
        %2692 = vmatprep.subr.mxu0 0.0
        %2693 = vmatpush1.msra.mxu0 %v2424
        %2694 = vmatprep.subr.mxu0 0.0
        %2695 = vmatpush1.msra.mxu0 %v2425
        %2696 = vmatprep.subr.mxu0 0.0
        %2697 = vmatpush1.msra.mxu0 %v2426
        %2698 = vmatprep.subr.mxu0 0.0
        %2699 = vmatpush1.msra.mxu0 %v2427
        %2700 = vmatprep.subr.mxu0 0.0
        %2701 = vmatpush1.msra.mxu0 %v2428
        %2702 = vmatprep.subr.mxu0 0.0
        %2703 = vmatpush1.msra.mxu0 %v2429
        %2704 = vmatprep.subr.mxu0 0.0
        %2705 = vmatpush1.msra.mxu0 %v2430
        %2706 = vmatprep.subr.mxu0 0.0
        %2707 = vmatpush1.msra.mxu0 %v2431
        %2708 = vmatprep.subr.mxu0 0.0
        %2709 = vmatpush1.msra.mxu0 %v2432
        %2710 = vmatprep.subr.mxu0 0.0
        %2711 = vmatpush1.msra.mxu0 %v2433
        %2712 = vmatprep.subr.mxu0 0.0
        %2713 = vmatpush1.msra.mxu0 %v2434
        %2714 = vmatprep.subr.mxu0 0.0
        %2715 = vmatpush1.msra.mxu0 %v2435
        %2716 = vmatprep.subr.mxu0 0.0
        %2717 = vmatpush1.msra.mxu0 %v2436
        %2718 = vmatprep.subr.mxu0 0.0
        %2719 = vmatpush1.msra.mxu0 %v2437
        %2720 = vmatprep.subr.mxu0 0.0
        %2721 = vmatpush1.msra.mxu0 %v2438
        %2722 = vmatprep.subr.mxu0 0.0
        %2723 = vmatpush1.msra.mxu0 %v2439
        %2724 = vmatprep.subr.mxu0 0.0
        %2725 = vmatpush1.msra.mxu0 %v2440
        %2726 = vmatprep.subr.mxu0 0.0
        %2727 = vmatpush1.msra.mxu0 %v2441
        %2728 = vmatprep.subr.mxu0 0.0
        %2729 = vmatpush1.msra.mxu0 %v2442
        %2730 = vmatprep.subr.mxu0 0.0
        %2731 = vmatpush1.msra.mxu0 %v2443
        %2732 = vmatprep.subr.mxu0 0.0
        %2733 = vmatpush1.msra.mxu0 %v2444
        %2734 = vmatprep.subr.mxu0 0.0
        %2735 = vmatpush1.msra.mxu0 %v2445
        %2736 = vmatprep.subr.mxu0 0.0
        %2737 = vmatpush1.msra.mxu0 %v2446
        %2738 = vmatprep.mubr.f32.mxu0 %v2317
        %2739 = vmatmul.mubr.f32.gmra.mrb[0].mxu0 %v2316
        %v2740 = vpop.f32.mrb[0].mxu0
        %v2741 = vadd.f32 %v2671, %v2740
        %v2742 = vpop.f32.mrb[0].mxu0
        %2743 = vdwg.mxu0
        %2744 = vmatprep.subr.mxu0 0.0
        %2745 = vmatpush1.msra.mxu0 %v2447
        %2746 = vmatprep.subr.mxu0 0.0
        %2747 = vmatpush1.msra.mxu0 %v2448
        %2748 = vmatprep.subr.mxu0 0.0
        %2749 = vmatpush1.msra.mxu0 %v2449
        %2750 = vmatprep.subr.mxu0 0.0
        %2751 = vmatpush1.msra.mxu0 %v2450
        %2752 = vmatprep.subr.mxu0 0.0
        %2753 = vmatpush1.msra.mxu0 %v2451
        %2754 = vmatprep.subr.mxu0 0.0
        %2755 = vmatpush1.msra.mxu0 %v2452
        %2756 = vmatprep.subr.mxu0 0.0
        %2757 = vmatpush1.msra.mxu0 %v2453
        %2758 = vmatprep.subr.mxu0 0.0
        %2759 = vmatpush1.msra.mxu0 %v2454
        %2760 = vmatprep.subr.mxu0 0.0
        %2761 = vmatpush1.msra.mxu0 %v2455
        %2762 = vmatprep.subr.mxu0 0.0
        %2763 = vmatpush1.msra.mxu0 %v2456
        %2764 = vmatprep.subr.mxu0 0.0
        %2765 = vmatpush1.msra.mxu0 %v2457
        %2766 = vmatprep.subr.mxu0 0.0
        %2767 = vmatpush1.msra.mxu0 %v2458
        %2768 = vmatprep.subr.mxu0 0.0
        %2769 = vmatpush1.msra.mxu0 %v2459
        %2770 = vmatprep.subr.mxu0 0.0
        %2771 = vmatpush1.msra.mxu0 %v2460
        %2772 = vmatprep.subr.mxu0 0.0
        %2773 = vmatpush1.msra.mxu0 %v2461
        %2774 = vmatprep.subr.mxu0 0.0
        %2775 = vmatpush1.msra.mxu0 %v2462
        %2776 = vmatprep.subr.mxu0 0.0
        %2777 = vmatpush1.msra.mxu0 0.0
        %2778 = vmatprep.subr.mxu0 0.0
        %2779 = vmatpush1.msra.mxu0 0.0
        %2780 = vmatprep.subr.mxu0 0.0
        %2781 = vmatpush1.msra.mxu0 0.0
        %2782 = vmatprep.subr.mxu0 0.0
        %2783 = vmatpush1.msra.mxu0 0.0
        %2784 = vmatprep.subr.mxu0 0.0
        %2785 = vmatpush1.msra.mxu0 0.0
        %2786 = vmatprep.subr.mxu0 0.0
        %2787 = vmatpush1.msra.mxu0 0.0
        %2788 = vmatprep.subr.mxu0 0.0
        %2789 = vmatpush1.msra.mxu0 0.0
        %2790 = vmatprep.subr.mxu0 0.0
        %2791 = vmatpush1.msra.mxu0 0.0
        %2792 = vmatprep.subr.mxu0 0.0
        %2793 = vmatpush1.msra.mxu0 0.0
        %2794 = vmatprep.subr.mxu0 0.0
        %2795 = vmatpush1.msra.mxu0 0.0
        %2796 = vmatprep.subr.mxu0 0.0
        %2797 = vmatpush1.msra.mxu0 0.0
        %2798 = vmatprep.subr.mxu0 0.0
        %2799 = vmatpush1.msra.mxu0 0.0
        %2800 = vmatprep.subr.mxu0 0.0
        %2801 = vmatpush1.msra.mxu0 0.0
        %2802 = vmatprep.subr.mxu0 0.0
        %2803 = vmatpush1.msra.mxu0 0.0
        %2804 = vmatprep.subr.mxu0 0.0
        %2805 = vmatpush1.msra.mxu0 0.0
        %2806 = vmatprep.subr.mxu0 0.0
        %2807 = vmatpush1.msra.mxu0 0.0
        %2808 = vmatprep.mubr.f32.mxu0 0.0
        %2809 = vmatmul.mubr.f32.gmra.mrb[0].mxu0 %v2318
        %v2810 = vpop.f32.mrb[0].mxu0
        %v2811 = vadd.f32 %v2741, %v2810
        %v2812 = vpop.f32.mrb[0].mxu0
        %2813 = vdwg.mxu0
        %v2814 = vmax.f32 %v2811, 0.0
        %2815 = vst [vmem:[%s270] sm:$0x1] %v2814
        %s2816 = sand.u32 %s181, 1
        %s2817 = scalar_lea.sflag [#allocation5], %s2816
        %s2818 = sand.u32 %s181, 1
        %s2819 = scalar_lea.vmem [#allocation4], %s2818
        // Predicated region
        $region49: #{convnet_forward.1} parent=47 // pred_check
          %p2820 = pneg %p191
        $region50: #{convnet_forward.1} parent=47 // pred_check_branch
          %2822 = sbr.rel (%p2820) target = $region52
        $region51: #{convnet_forward.1} parent=47 // pred_region
          %s2824 = ssub.s32 16, 16
          %2825 = vsyncadd %s2817, %s2824
          %s2826 = smul.addr %s21, 16
          %s2827 = scalar_lea.hbm %s7, %s2826
          %s2829 = sshll.u32 %s2819, 4
          %s2830 = int_to_ptr.vmem [resolvable:$true] %s2829
          %2832 = dma.vmem_to_hbm [thread:$0]  %s2830, 16, %s2827, %s2817
        $region52: #{convnet_forward.1} parent=47 // pred_fallthru
          _
      $region48: #{convnet_forward.1} parent=5 // pred_fallthru
        _
      %p2833 = scmp.le.s32.totalorder 2, %s16
      // Predicated region
      $region53: #{convnet_forward.1} parent=5 // pred_check
        %p2834 = pneg %p2833
      $region54: #{convnet_forward.1} parent=5 // pred_check_branch
        %2836 = sbr.rel (%p2834) target = $region56
      $region55: #{convnet_forward.1} parent=5 // pred_region
        %s2837 = ssub.s32 %s16, 2
        // Predicated region
        $region57: #{convnet_forward.1} parent=55 // pred_check
          %p2838 = pneg %p197
        $region58: #{convnet_forward.1} parent=55 // pred_check_branch
          %2840 = sbr.rel (%p2838) target = $region60
        $region59: #{convnet_forward.1} parent=55 // pred_region
          %s2841 = sand.u32 %s182, 1
          %s2842 = scalar_lea.sflag [#allocation5], %s2841
          %s2843 = sand.u32 %s182, 1
          %s2844 = scalar_lea.vmem [#allocation4], %s2843
          %2845 = dma.done %s2842, 16
        $region60: #{convnet_forward.1} parent=55 // pred_fallthru
          _
      $region56: #{convnet_forward.1} parent=5 // pred_fallthru
        _
    $region6: #{convnet_forward.1} parent=1 // loop_footer
      %s20 = sadd.s32 1, %s16
    $region7: #{convnet_forward.1} parent=1 // loop_footer_branch
      %15 = sbr.rel target = $region3
    $region8: #{convnet_forward.1} parent=1 // loop_exit
      _
    %2846 = vsyncpa [#allocation5], 1
    %s2847 = scalar_lea.sflag [#allocation5], 1
    %2848 = vsyncpa %s2847, 1

</llo_original>
